<compile_context>
chip_gen: v7x
topology: tpu7x:2x2x1
jax: 0.10.0
libtpu: 0.0.40
codegen_flags: <defaults>
</compile_context>

<pallas_src>
import jax
import jax.numpy as jnp
from jax.experimental import pallas as pl
from jax.experimental.pallas import tpu as pltpu


# ----------------------------- Pallas kernel ---------------------------------
def _speaker_encoder_kernel(
    act_ref,    # (T*B, A)       action embeddings, time-major rows (row = t*B + b)
    ws_ref,     # (T, B, Vn, Vd) world-state embeddings, time-major
    watt_ref,   # (H, Vd)        fused attention weight  w_h @ w_v.T
    vatt_ref,   # (1, Vd)        fused attention bias    b_h @ w_v.T
    wia_ref,    # (A, 4H)        action  -> gates weight (torch gate order i,f,g,o)
    wif_ref,    # (Vd, 4H)       feature -> gates weight
    whh_ref,    # (H, 4H)        hidden  -> gates weight
    bg_ref,     # (1, 4H)        fused gate bias (b_ih + b_hh)
    we_ref,     # (H, H)         encoder2decoder weight
    be_ref,     # (1, H)         encoder2decoder bias
    ctx_ref,    # out (B, T, H)  per-step hidden states, already in final layout
    dec_ref,    # out (B, H)     decoder init = tanh(h_T @ We + be)
    cout_ref,   # out (B, H)     final cell state
):
    T, B, Vn, Vd = ws_ref.shape
    H = we_ref.shape[0]

    # Off the serial critical path: action->gate pre-activations for ALL
    # timesteps in one (T*B, A) @ (A, 4H) matmul, gate bias folded in once.
    actg = (jnp.dot(act_ref[...], wia_ref[...],
                    preferred_element_type=jnp.float32)
            + bg_ref[...])                                        # (T*B, 4H) f32

    # Hoist weight loads / broadcasts once (JAX does not CSE broadcast_in_dim;
    # per-step it would be re-materialized every unrolled iteration).
    # NOTE: at H>=128 or long T keep these as per-step ref loads + bounded
    # unroll (or a T-tiled grid) to avoid pinning vreg live ranges.
    watt = watt_ref[...]
    vatt = jnp.broadcast_to(vatt_ref[...], (B, Vd))
    wif = wif_ref[...]
    whh = whh_ref[...]
    wdt = whh.dtype

    h = jnp.zeros((B, H), jnp.float32)
    c = jnp.zeros((B, H), jnp.float32)

    # Fully unrolled recurrence with static indices (T is small/static here).
    for t in range(T):
        ws = ws_ref[t]                                  # (B, Vn, Vd)
        gate_a = actg[t * B:(t + 1) * B, :]             # (B, 4H), bias included

        # ---- VisualSoftDotAttention (algebraically fused; exact under softmax:
        # the b_v-dependent logit term is constant over n and cancels).
        m = (jnp.dot(h.astype(watt.dtype), watt,
                     preferred_element_type=jnp.float32) + vatt)     # (B, Vd)
        # Tiny contractions: broadcast-mul + reduce on VPU/XLU slots so the
        # MXU slot stays free for the gate matmuls below.
        logits = jnp.sum(ws * m[:, None, :], axis=2)                 # (B, Vn)
        e = jnp.exp(logits - jnp.max(logits, axis=1, keepdims=True))
        attn = e / jnp.sum(e, axis=1, keepdims=True)                 # exact softmax
        feature = jnp.sum(attn[:, :, None] * ws, axis=1)             # (B, Vd) f32

        # ---- LSTMCell (PyTorch gate order i,f,g,o): one fused pair of
        # (B, 4H=128)-lane MXU matmuls on the critical path; gates peeled with
        # static lane slices.  (Eval-mode dropout on the LSTM input = identity.)
        gates = (gate_a
                 + jnp.dot(feature.astype(wdt), wif,
                           preferred_element_type=jnp.float32)
                 + jnp.dot(h.astype(wdt), whh,
                           preferred_element_type=jnp.float32))       # (B, 4H)
        i_g = jax.nn.sigmoid(gates[:, 0 * H:1 * H])
        f_g = jax.nn.sigmoid(gates[:, 1 * H:2 * H])
        g_g = jnp.tanh(gates[:, 2 * H:3 * H])
        o_g = jax.nn.sigmoid(gates[:, 3 * H:4 * H])
        c = f_g * c + i_g * g_g
        h = o_g * jnp.tanh(c)

        # ctx written directly in final (B, T, H) layout -> no wrapper
        # transpose / no second HBM pass over ctx.
        ctx_ref[:, t, :] = h.astype(ctx_ref.dtype)

    # Final projection + last-state writes: once, after the recurrence.
    cout_ref[...] = c.astype(cout_ref.dtype)
    dec = jnp.tanh(jnp.dot(h, we_ref[...], preferred_element_type=jnp.float32)
                   + be_ref[...])
    dec_ref[...] = dec.astype(dec_ref.dtype)


# ----------------------------- wrapper ---------------------------------------
def speaker_encoder_forward(action_embs, world_embs, params,
                            matmul_dtype=jnp.float32):
    """action_embs: (T, B, A) f32; world_embs: (T, B, Vn, Vd) f32.

    Returns (ctx (B,T,H), decoder_init (B,H), c_T (B,H)) — eval-mode forward of
    SpeakerEncoderLSTM.  Set matmul_dtype=jnp.bfloat16 on v6e/v7x at production
    shapes (state, softmax and gate nonlinearities stay f32 in-kernel)."""
    T, B, A = action_embs.shape
    _, _, Vn, Vd = world_embs.shape
    H = params["w_hh"].shape[0]
    assert params["w_ih"].shape == (A + Vd, 4 * H)

    hi = jax.lax.Precision.HIGHEST
    # Fused attention: logits[b,n] = ws[b,n,:] . (h_b @ (w_h w_v^T) + b_h w_v^T).
    # The b_v-dependent term is constant over n and drops out of the softmax.
    watt = jnp.dot(params["w_h"], params["w_v"].T, precision=hi)            # (H, Vd)
    vatt = jnp.dot(params["b_h"], params["w_v"].T, precision=hi)[None, :]   # (1, Vd)

    # LSTM weights stay FUSED across gates (4H lanes); only split by input source.
    w_ia = params["w_ih"][:A]                                   # (A, 4H)
    w_if = params["w_ih"][A:]                                   # (Vd, 4H)
    w_hh = params["w_hh"]                                       # (H, 4H)
    b_g = (params["b_ih"] + params["b_hh"]).reshape(1, 4 * H)   # (1, 4H)
    w_e = params["w_e2d"]                                       # (H, H)
    b_e = params["b_e2d"].reshape(1, H)                         # (1, H)

    # Time-major-flattened action rows: row index = t*B + b.
    act2d = action_embs.reshape(T * B, A)

    cast = lambda x: x.astype(matmul_dtype)
    vmem = pl.BlockSpec(memory_space=pltpu.MemorySpace.VMEM)

    ctx, dec_init, c_last = pl.pallas_call(
        _speaker_encoder_kernel,
        out_shape=(
            jax.ShapeDtypeStruct((B, T, H), jnp.float32),
            jax.ShapeDtypeStruct((B, H), jnp.float32),
            jax.ShapeDtypeStruct((B, H), jnp.float32),
        ),
        in_specs=[vmem] * 10,
        out_specs=(vmem, vmem, vmem),
        # Resident footprint here is well under 1 MiB; 32 MiB is within the
        # scoped-VMEM budget on v5e/v6e/v7x and leaves headroom for larger T/B.
        compiler_params=pltpu.CompilerParams(vmem_limit_bytes=32 * 1024 * 1024),
    )(cast(act2d), cast(world_embs), cast(watt), vatt,
      cast(w_ia), cast(w_if), cast(w_hh), b_g, w_e, b_e)

    # Dropout on ctx is identity in eval mode.
    return ctx, dec_init, c_last


# ----------------------------- pure-JAX reference -----------------------------
def _reference(action_embs, world_embs, params):
    """Faithful (unfused) re-implementation of the PyTorch module forward."""
    T, B, _ = action_embs.shape
    H = params["w_hh"].shape[0]
    h = jnp.zeros((B, H), jnp.float32)
    c = jnp.zeros((B, H), jnp.float32)
    hs = []
    for t in range(T):
        ws = world_embs[t]
        target = h @ params["w_h"] + params["b_h"]
        context = jnp.einsum("bnd,de->bne", ws, params["w_v"]) + params["b_v"]
        attn = jax.nn.softmax(jnp.einsum("bne,be->bn", context, target), axis=1)
        feature = jnp.einsum("bn,bnd->bd", attn, ws)
        x = jnp.concatenate([action_embs[t], feature], axis=1)
        gates = x @ params["w_ih"] + params["b_ih"] + h @ params["w_hh"] + params["b_hh"]
        i_g = jax.nn.sigmoid(gates[:, 0 * H:1 * H])
        f_g = jax.nn.sigmoid(gates[:, 1 * H:2 * H])
        g_g = jnp.tanh(gates[:, 2 * H:3 * H])
        o_g = jax.nn.sigmoid(gates[:, 3 * H:4 * H])
        c = f_g * c + i_g * g_g
        h = o_g * jnp.tanh(c)
        hs.append(h)
    dec = jnp.tanh(h @ params["w_e2d"] + params["b_e2d"])
    ctx = jnp.stack(hs, axis=1)
    return ctx, dec, c


# ----------------------------- main -------------------------------------------
if __name__ == "__main__":
    # Small shapes consistent with the module's forward.
    T, B = 8, 2
    A = 16          # action_embedding_size
    Vd = 32         # world_embedding_size (v_dim)
    Vn = 4          # number of visual context vectors
    H = 32          # hidden_size (4H = 128 = one full lane width)
    DOT = 256       # VisualSoftDotAttention dot_dim

    key = jax.random.PRNGKey(0)
    ks = jax.random.split(key, 16)
    scale = 0.1

    params = {
        # VisualSoftDotAttention (weights stored as (in, out))
        "w_h": scale * jax.random.normal(ks[0], (H, DOT), jnp.float32),
        "b_h": scale * jax.random.normal(ks[1], (DOT,), jnp.float32),
        "w_v": scale * jax.random.normal(ks[2], (Vd, DOT), jnp.float32),
        "b_v": scale * jax.random.normal(ks[3], (DOT,), jnp.float32),
        # LSTMCell (gate order i,f,g,o), stored transposed: (in, 4H) / (H, 4H)
        "w_ih": scale * jax.random.normal(ks[4], (A + Vd, 4 * H), jnp.float32),
        "b_ih": scale * jax.random.normal(ks[5], (4 * H,), jnp.float32),
        "w_hh": scale * jax.random.normal(ks[6], (H, 4 * H), jnp.float32),
        "b_hh": scale * jax.random.normal(ks[7], (4 * H,), jnp.float32),
        # encoder2decoder
        "w_e2d": scale * jax.random.normal(ks[8], (H, H), jnp.float32),
        "b_e2d": scale * jax.random.normal(ks[9], (H,), jnp.float32),
    }

    action_embs = jax.random.normal(ks[10], (T, B, A), jnp.float32)
    world_embs = jax.random.normal(ks[11], (T, B, Vn, Vd), jnp.float32)

    ctx, dec_init, c_last = speaker_encoder_forward(action_embs, world_embs, params)
    jax.block_until_ready((ctx, dec_init, c_last))

    ctx_r, dec_r, c_r = _reference(action_embs, world_embs, params)
    assert ctx.shape == (B, T, H) and dec_init.shape == (B, H) and c_last.shape == (B, H)
    # 1e-4 tolerance: the attention fusion is exact mathematically but reassociates
    # fp32 sums relative to the unfused reference.
    assert jnp.allclose(ctx, ctx_r, atol=1e-4, rtol=1e-4)
    assert jnp.allclose(dec_init, dec_r, atol=1e-4, rtol=1e-4)
    assert jnp.allclose(c_last, c_r, atol=1e-4, rtol=1e-4)

    print("KERNEL_OK")
</pallas_src>

<mosaic_0001>
module attributes {stable_mosaic.version = 11 : i64} {
  func.func @_speaker_encoder_kernel(%arg0: memref<16x16xf32, #tpu.memory_space<vmem>>, %arg1: memref<8x2x4x32xf32, #tpu.memory_space<vmem>>, %arg2: memref<32x32xf32, #tpu.memory_space<vmem>>, %arg3: memref<1x32xf32, #tpu.memory_space<vmem>>, %arg4: memref<16x128xf32, #tpu.memory_space<vmem>>, %arg5: memref<32x128xf32, #tpu.memory_space<vmem>>, %arg6: memref<32x128xf32, #tpu.memory_space<vmem>>, %arg7: memref<1x128xf32, #tpu.memory_space<vmem>>, %arg8: memref<32x32xf32, #tpu.memory_space<vmem>>, %arg9: memref<1x32xf32, #tpu.memory_space<vmem>>, %arg10: memref<2x8x32xf32, #tpu.memory_space<vmem>>, %arg11: memref<2x32xf32, #tpu.memory_space<vmem>>, %arg12: memref<2x32xf32, #tpu.memory_space<vmem>>) attributes {dimension_semantics = [], scalar_prefetch = 0 : i64, scratch_operands = 0 : i64, tpu.core_type = #tpu.core_type<tc>} {
    %c0 = arith.constant 0 : index
    %c0_0 = arith.constant 0 : index
    %0 = vector.load %arg0[%c0, %c0_0] : memref<16x16xf32, #tpu.memory_space<vmem>>, vector<16x16xf32>
    %c0_1 = arith.constant 0 : index
    %c0_2 = arith.constant 0 : index
    %1 = vector.load %arg4[%c0_1, %c0_2] : memref<16x128xf32, #tpu.memory_space<vmem>>, vector<16x128xf32>
    %cst = arith.constant dense<0.000000e+00> : vector<16x128xf32>
    %2 = tpu.matmul %0, %1, %cst {dimension_numbers = #tpu.dot_dimension_numbers<[1], [0], [0], [1], [0, 0, 1, 1], [], []>} : vector<16x16xf32>, vector<16x128xf32>, vector<16x128xf32> -> vector<16x128xf32>
    %c0_3 = arith.constant 0 : index
    %c0_4 = arith.constant 0 : index
    %3 = vector.load %arg7[%c0_3, %c0_4] : memref<1x128xf32, #tpu.memory_space<vmem>>, vector<1x128xf32>
    %4 = vector.broadcast %3 : vector<1x128xf32> to vector<16x128xf32>
    %5 = arith.addf %2, %4 : vector<16x128xf32>
    %c0_5 = arith.constant 0 : index
    %c0_6 = arith.constant 0 : index
    %6 = vector.load %arg2[%c0_5, %c0_6] : memref<32x32xf32, #tpu.memory_space<vmem>>, vector<32x32xf32>
    %c0_7 = arith.constant 0 : index
    %c0_8 = arith.constant 0 : index
    %7 = vector.load %arg3[%c0_7, %c0_8] : memref<1x32xf32, #tpu.memory_space<vmem>>, vector<1x32xf32>
    %8 = vector.shape_cast %7 : vector<1x32xf32> to vector<1x32xf32>
    %9 = vector.broadcast %8 : vector<1x32xf32> to vector<2x32xf32>
    %c0_9 = arith.constant 0 : index
    %c0_10 = arith.constant 0 : index
    %10 = vector.load %arg5[%c0_9, %c0_10] : memref<32x128xf32, #tpu.memory_space<vmem>>, vector<32x128xf32>
    %c0_11 = arith.constant 0 : index
    %c0_12 = arith.constant 0 : index
    %11 = vector.load %arg6[%c0_11, %c0_12] : memref<32x128xf32, #tpu.memory_space<vmem>>, vector<32x128xf32>
    %cst_13 = arith.constant 0.000000e+00 : f32
    %12 = vector.broadcast %cst_13 : f32 to vector<2x32xf32>
    %cst_14 = arith.constant 0.000000e+00 : f32
    %13 = vector.broadcast %cst_14 : f32 to vector<2x32xf32>
    %c0_15 = arith.constant 0 : index
    %c0_16 = arith.constant 0 : index
    %c0_17 = arith.constant 0 : index
    %c0_18 = arith.constant 0 : index
    %14 = vector.load %arg1[%c0_15, %c0_16, %c0_17, %c0_18] : memref<8x2x4x32xf32, #tpu.memory_space<vmem>>, vector<1x2x4x32xf32>
    %15 = vector.shape_cast %14 : vector<1x2x4x32xf32> to vector<2x4x32xf32>
    %16 = vector.extract_strided_slice %5 {offsets = [0, 0], sizes = [2, 128], strides = [1, 1]} : vector<16x128xf32> to vector<2x128xf32>
    %cst_19 = arith.constant dense<0.000000e+00> : vector<2x32xf32>
    %17 = tpu.matmul %12, %6, %cst_19 {dimension_numbers = #tpu.dot_dimension_numbers<[1], [0], [0], [1], [0, 0, 1, 1], [], []>} : vector<2x32xf32>, vector<32x32xf32>, vector<2x32xf32> -> vector<2x32xf32>
    %18 = arith.addf %17, %9 : vector<2x32xf32>
    %19 = vector.shape_cast %18 : vector<2x32xf32> to vector<2x1x32xf32>
    %20 = vector.broadcast %19 : vector<2x1x32xf32> to vector<2x4x32xf32>
    %21 = arith.mulf %15, %20 : vector<2x4x32xf32>
    %cst_20 = arith.constant dense<0.000000e+00> : vector<2x4xf32>
    %22 = vector.multi_reduction <add>, %21, %cst_20 [2] : vector<2x4x32xf32> to vector<2x4xf32>
    %cst_21 = arith.constant dense<0xFF800000> : vector<2xf32>
    %23 = vector.multi_reduction <maximumf>, %22, %cst_21 [1] : vector<2x4xf32> to vector<2xf32>
    %24 = vector.shape_cast %23 : vector<2xf32> to vector<2x1xf32>
    %25 = vector.broadcast %24 : vector<2x1xf32> to vector<2x4xf32>
    %26 = arith.subf %22, %25 : vector<2x4xf32>
    %27 = math.exp %26 : vector<2x4xf32>
    %cst_22 = arith.constant dense<0.000000e+00> : vector<2xf32>
    %28 = vector.multi_reduction <add>, %27, %cst_22 [1] : vector<2x4xf32> to vector<2xf32>
    %29 = vector.shape_cast %28 : vector<2xf32> to vector<2x1xf32>
    %30 = vector.broadcast %29 : vector<2x1xf32> to vector<2x4xf32>
    %31 = arith.divf %27, %30 : vector<2x4xf32>
    %32 = vector.shape_cast %31 : vector<2x4xf32> to vector<2x4x1xf32>
    %33 = vector.broadcast %32 : vector<2x4x1xf32> to vector<2x4x32xf32>
    %34 = arith.mulf %33, %15 : vector<2x4x32xf32>
    %cst_23 = arith.constant dense<0.000000e+00> : vector<2x32xf32>
    %35 = vector.multi_reduction <add>, %34, %cst_23 [1] : vector<2x4x32xf32> to vector<2x32xf32>
    %cst_24 = arith.constant dense<0.000000e+00> : vector<2x128xf32>
    %36 = tpu.matmul %35, %10, %cst_24 {dimension_numbers = #tpu.dot_dimension_numbers<[1], [0], [0], [1], [0, 0, 1, 1], [], []>} : vector<2x32xf32>, vector<32x128xf32>, vector<2x128xf32> -> vector<2x128xf32>
    %37 = arith.addf %16, %36 : vector<2x128xf32>
    %cst_25 = arith.constant dense<0.000000e+00> : vector<2x128xf32>
    %38 = tpu.matmul %12, %11, %cst_25 {dimension_numbers = #tpu.dot_dimension_numbers<[1], [0], [0], [1], [0, 0, 1, 1], [], []>} : vector<2x32xf32>, vector<32x128xf32>, vector<2x128xf32> -> vector<2x128xf32>
    %39 = arith.addf %37, %38 : vector<2x128xf32>
    %40 = vector.extract_strided_slice %39 {offsets = [0, 0], sizes = [2, 32], strides = [1, 1]} : vector<2x128xf32> to vector<2x32xf32>
    %41 = arith.negf %40 : vector<2x32xf32>
    %42 = math.exp %41 : vector<2x32xf32>
    %cst_26 = arith.constant 1.000000e+00 : f32
    %43 = vector.broadcast %cst_26 : f32 to vector<2x32xf32>
    %44 = arith.addf %43, %42 : vector<2x32xf32>
    %45 = arith.divf %43, %44 : vector<2x32xf32>
    %46 = vector.extract_strided_slice %39 {offsets = [0, 32], sizes = [2, 32], strides = [1, 1]} : vector<2x128xf32> to vector<2x32xf32>
    %47 = arith.negf %46 : vector<2x32xf32>
    %48 = math.exp %47 : vector<2x32xf32>
    %cst_27 = arith.constant 1.000000e+00 : f32
    %49 = vector.broadcast %cst_27 : f32 to vector<2x32xf32>
    %50 = arith.addf %49, %48 : vector<2x32xf32>
    %51 = arith.divf %49, %50 : vector<2x32xf32>
    %52 = vector.extract_strided_slice %39 {offsets = [0, 64], sizes = [2, 32], strides = [1, 1]} : vector<2x128xf32> to vector<2x32xf32>
    %53 = math.tanh %52 : vector<2x32xf32>
    %54 = vector.extract_strided_slice %39 {offsets = [0, 96], sizes = [2, 32], strides = [1, 1]} : vector<2x128xf32> to vector<2x32xf32>
    %55 = arith.negf %54 : vector<2x32xf32>
    %56 = math.exp %55 : vector<2x32xf32>
    %cst_28 = arith.constant 1.000000e+00 : f32
    %57 = vector.broadcast %cst_28 : f32 to vector<2x32xf32>
    %58 = arith.addf %57, %56 : vector<2x32xf32>
    %59 = arith.divf %57, %58 : vector<2x32xf32>
    %60 = arith.mulf %51, %13 : vector<2x32xf32>
    %61 = arith.mulf %45, %53 : vector<2x32xf32>
    %62 = arith.addf %60, %61 : vector<2x32xf32>
    %63 = math.tanh %62 : vector<2x32xf32>
    %64 = arith.mulf %59, %63 : vector<2x32xf32>
    %c0_29 = arith.constant 0 : index
    %c0_30 = arith.constant 0 : index
    %c0_31 = arith.constant 0 : index
    %65 = vector.load %arg10[%c0_29, %c0_30, %c0_31] : memref<2x8x32xf32, #tpu.memory_space<vmem>>, vector<2x1x32xf32>
    %66 = vector.shape_cast %65 : vector<2x1x32xf32> to vector<2x32xf32>
    %67 = vector.shape_cast %64 : vector<2x32xf32> to vector<2x1x32xf32>
    tpu.vector_store %arg10[%c0_29, %c0_30, %c0_31], %67 {strides = array<i32>} : memref<2x8x32xf32, #tpu.memory_space<vmem>>, vector<2x1x32xf32>,
    %c1 = arith.constant 1 : index
    %c0_32 = arith.constant 0 : index
    %c0_33 = arith.constant 0 : index
    %c0_34 = arith.constant 0 : index
    %68 = vector.load %arg1[%c1, %c0_32, %c0_33, %c0_34] : memref<8x2x4x32xf32, #tpu.memory_space<vmem>>, vector<1x2x4x32xf32>
    %69 = vector.shape_cast %68 : vector<1x2x4x32xf32> to vector<2x4x32xf32>
    %70 = vector.extract_strided_slice %5 {offsets = [2, 0], sizes = [2, 128], strides = [1, 1]} : vector<16x128xf32> to vector<2x128xf32>
    %cst_35 = arith.constant dense<0.000000e+00> : vector<2x32xf32>
    %71 = tpu.matmul %64, %6, %cst_35 {dimension_numbers = #tpu.dot_dimension_numbers<[1], [0], [0], [1], [0, 0, 1, 1], [], []>} : vector<2x32xf32>, vector<32x32xf32>, vector<2x32xf32> -> vector<2x32xf32>
    %72 = arith.addf %71, %9 : vector<2x32xf32>
    %73 = vector.shape_cast %72 : vector<2x32xf32> to vector<2x1x32xf32>
    %74 = vector.broadcast %73 : vector<2x1x32xf32> to vector<2x4x32xf32>
    %75 = arith.mulf %69, %74 : vector<2x4x32xf32>
    %cst_36 = arith.constant dense<0.000000e+00> : vector<2x4xf32>
    %76 = vector.multi_reduction <add>, %75, %cst_36 [2] : vector<2x4x32xf32> to vector<2x4xf32>
    %cst_37 = arith.constant dense<0xFF800000> : vector<2xf32>
    %77 = vector.multi_reduction <maximumf>, %76, %cst_37 [1] : vector<2x4xf32> to vector<2xf32>
    %78 = vector.shape_cast %77 : vector<2xf32> to vector<2x1xf32>
    %79 = vector.broadcast %78 : vector<2x1xf32> to vector<2x4xf32>
    %80 = arith.subf %76, %79 : vector<2x4xf32>
    %81 = math.exp %80 : vector<2x4xf32>
    %cst_38 = arith.constant dense<0.000000e+00> : vector<2xf32>
    %82 = vector.multi_reduction <add>, %81, %cst_38 [1] : vector<2x4xf32> to vector<2xf32>
    %83 = vector.shape_cast %82 : vector<2xf32> to vector<2x1xf32>
    %84 = vector.broadcast %83 : vector<2x1xf32> to vector<2x4xf32>
    %85 = arith.divf %81, %84 : vector<2x4xf32>
    %86 = vector.shape_cast %85 : vector<2x4xf32> to vector<2x4x1xf32>
    %87 = vector.broadcast %86 : vector<2x4x1xf32> to vector<2x4x32xf32>
    %88 = arith.mulf %87, %69 : vector<2x4x32xf32>
    %cst_39 = arith.constant dense<0.000000e+00> : vector<2x32xf32>
    %89 = vector.multi_reduction <add>, %88, %cst_39 [1] : vector<2x4x32xf32> to vector<2x32xf32>
    %cst_40 = arith.constant dense<0.000000e+00> : vector<2x128xf32>
    %90 = tpu.matmul %89, %10, %cst_40 {dimension_numbers = #tpu.dot_dimension_numbers<[1], [0], [0], [1], [0, 0, 1, 1], [], []>} : vector<2x32xf32>, vector<32x128xf32>, vector<2x128xf32> -> vector<2x128xf32>
    %91 = arith.addf %70, %90 : vector<2x128xf32>
    %cst_41 = arith.constant dense<0.000000e+00> : vector<2x128xf32>
    %92 = tpu.matmul %64, %11, %cst_41 {dimension_numbers = #tpu.dot_dimension_numbers<[1], [0], [0], [1], [0, 0, 1, 1], [], []>} : vector<2x32xf32>, vector<32x128xf32>, vector<2x128xf32> -> vector<2x128xf32>
    %93 = arith.addf %91, %92 : vector<2x128xf32>
    %94 = vector.extract_strided_slice %93 {offsets = [0, 0], sizes = [2, 32], strides = [1, 1]} : vector<2x128xf32> to vector<2x32xf32>
    %95 = arith.negf %94 : vector<2x32xf32>
    %96 = math.exp %95 : vector<2x32xf32>
    %cst_42 = arith.constant 1.000000e+00 : f32
    %97 = vector.broadcast %cst_42 : f32 to vector<2x32xf32>
    %98 = arith.addf %97, %96 : vector<2x32xf32>
    %99 = arith.divf %97, %98 : vector<2x32xf32>
    %100 = vector.extract_strided_slice %93 {offsets = [0, 32], sizes = [2, 32], strides = [1, 1]} : vector<2x128xf32> to vector<2x32xf32>
    %101 = arith.negf %100 : vector<2x32xf32>
    %102 = math.exp %101 : vector<2x32xf32>
    %cst_43 = arith.constant 1.000000e+00 : f32
    %103 = vector.broadcast %cst_43 : f32 to vector<2x32xf32>
    %104 = arith.addf %103, %102 : vector<2x32xf32>
    %105 = arith.divf %103, %104 : vector<2x32xf32>
    %106 = vector.extract_strided_slice %93 {offsets = [0, 64], sizes = [2, 32], strides = [1, 1]} : vector<2x128xf32> to vector<2x32xf32>
    %107 = math.tanh %106 : vector<2x32xf32>
    %108 = vector.extract_strided_slice %93 {offsets = [0, 96], sizes = [2, 32], strides = [1, 1]} : vector<2x128xf32> to vector<2x32xf32>
    %109 = arith.negf %108 : vector<2x32xf32>
    %110 = math.exp %109 : vector<2x32xf32>
    %cst_44 = arith.constant 1.000000e+00 : f32
    %111 = vector.broadcast %cst_44 : f32 to vector<2x32xf32>
    %112 = arith.addf %111, %110 : vector<2x32xf32>
    %113 = arith.divf %111, %112 : vector<2x32xf32>
    %114 = arith.mulf %105, %62 : vector<2x32xf32>
    %115 = arith.mulf %99, %107 : vector<2x32xf32>
    %116 = arith.addf %114, %115 : vector<2x32xf32>
    %117 = math.tanh %116 : vector<2x32xf32>
    %118 = arith.mulf %113, %117 : vector<2x32xf32>
    %c0_45 = arith.constant 0 : index
    %c1_46 = arith.constant 1 : index
    %c0_47 = arith.constant 0 : index
    %119 = vector.load %arg10[%c0_45, %c1_46, %c0_47] : memref<2x8x32xf32, #tpu.memory_space<vmem>>, vector<2x1x32xf32>
    %120 = vector.shape_cast %119 : vector<2x1x32xf32> to vector<2x32xf32>
    %121 = vector.shape_cast %118 : vector<2x32xf32> to vector<2x1x32xf32>
    tpu.vector_store %arg10[%c0_45, %c1_46, %c0_47], %121 {strides = array<i32>} : memref<2x8x32xf32, #tpu.memory_space<vmem>>, vector<2x1x32xf32>,
    %c2 = arith.constant 2 : index
    %c0_48 = arith.constant 0 : index
    %c0_49 = arith.constant 0 : index
    %c0_50 = arith.constant 0 : index
    %122 = vector.load %arg1[%c2, %c0_48, %c0_49, %c0_50] : memref<8x2x4x32xf32, #tpu.memory_space<vmem>>, vector<1x2x4x32xf32>
    %123 = vector.shape_cast %122 : vector<1x2x4x32xf32> to vector<2x4x32xf32>
    %124 = vector.extract_strided_slice %5 {offsets = [4, 0], sizes = [2, 128], strides = [1, 1]} : vector<16x128xf32> to vector<2x128xf32>
    %cst_51 = arith.constant dense<0.000000e+00> : vector<2x32xf32>
    %125 = tpu.matmul %118, %6, %cst_51 {dimension_numbers = #tpu.dot_dimension_numbers<[1], [0], [0], [1], [0, 0, 1, 1], [], []>} : vector<2x32xf32>, vector<32x32xf32>, vector<2x32xf32> -> vector<2x32xf32>
    %126 = arith.addf %125, %9 : vector<2x32xf32>
    %127 = vector.shape_cast %126 : vector<2x32xf32> to vector<2x1x32xf32>
    %128 = vector.broadcast %127 : vector<2x1x32xf32> to vector<2x4x32xf32>
    %129 = arith.mulf %123, %128 : vector<2x4x32xf32>
    %cst_52 = arith.constant dense<0.000000e+00> : vector<2x4xf32>
    %130 = vector.multi_reduction <add>, %129, %cst_52 [2] : vector<2x4x32xf32> to vector<2x4xf32>
    %cst_53 = arith.constant dense<0xFF800000> : vector<2xf32>
    %131 = vector.multi_reduction <maximumf>, %130, %cst_53 [1] : vector<2x4xf32> to vector<2xf32>
    %132 = vector.shape_cast %131 : vector<2xf32> to vector<2x1xf32>
    %133 = vector.broadcast %132 : vector<2x1xf32> to vector<2x4xf32>
    %134 = arith.subf %130, %133 : vector<2x4xf32>
    %135 = math.exp %134 : vector<2x4xf32>
    %cst_54 = arith.constant dense<0.000000e+00> : vector<2xf32>
    %136 = vector.multi_reduction <add>, %135, %cst_54 [1] : vector<2x4xf32> to vector<2xf32>
    %137 = vector.shape_cast %136 : vector<2xf32> to vector<2x1xf32>
    %138 = vector.broadcast %137 : vector<2x1xf32> to vector<2x4xf32>
    %139 = arith.divf %135, %138 : vector<2x4xf32>
    %140 = vector.shape_cast %139 : vector<2x4xf32> to vector<2x4x1xf32>
    %141 = vector.broadcast %140 : vector<2x4x1xf32> to vector<2x4x32xf32>
    %142 = arith.mulf %141, %123 : vector<2x4x32xf32>
    %cst_55 = arith.constant dense<0.000000e+00> : vector<2x32xf32>
    %143 = vector.multi_reduction <add>, %142, %cst_55 [1] : vector<2x4x32xf32> to vector<2x32xf32>
    %cst_56 = arith.constant dense<0.000000e+00> : vector<2x128xf32>
    %144 = tpu.matmul %143, %10, %cst_56 {dimension_numbers = #tpu.dot_dimension_numbers<[1], [0], [0], [1], [0, 0, 1, 1], [], []>} : vector<2x32xf32>, vector<32x128xf32>, vector<2x128xf32> -> vector<2x128xf32>
    %145 = arith.addf %124, %144 : vector<2x128xf32>
    %cst_57 = arith.constant dense<0.000000e+00> : vector<2x128xf32>
    %146 = tpu.matmul %118, %11, %cst_57 {dimension_numbers = #tpu.dot_dimension_numbers<[1], [0], [0], [1], [0, 0, 1, 1], [], []>} : vector<2x32xf32>, vector<32x128xf32>, vector<2x128xf32> -> vector<2x128xf32>
    %147 = arith.addf %145, %146 : vector<2x128xf32>
    %148 = vector.extract_strided_slice %147 {offsets = [0, 0], sizes = [2, 32], strides = [1, 1]} : vector<2x128xf32> to vector<2x32xf32>
    %149 = arith.negf %148 : vector<2x32xf32>
    %150 = math.exp %149 : vector<2x32xf32>
    %cst_58 = arith.constant 1.000000e+00 : f32
    %151 = vector.broadcast %cst_58 : f32 to vector<2x32xf32>
    %152 = arith.addf %151, %150 : vector<2x32xf32>
    %153 = arith.divf %151, %152 : vector<2x32xf32>
    %154 = vector.extract_strided_slice %147 {offsets = [0, 32], sizes = [2, 32], strides = [1, 1]} : vector<2x128xf32> to vector<2x32xf32>
    %155 = arith.negf %154 : vector<2x32xf32>
    %156 = math.exp %155 : vector<2x32xf32>
    %cst_59 = arith.constant 1.000000e+00 : f32
    %157 = vector.broadcast %cst_59 : f32 to vector<2x32xf32>
    %158 = arith.addf %157, %156 : vector<2x32xf32>
    %159 = arith.divf %157, %158 : vector<2x32xf32>
    %160 = vector.extract_strided_slice %147 {offsets = [0, 64], sizes = [2, 32], strides = [1, 1]} : vector<2x128xf32> to vector<2x32xf32>
    %161 = math.tanh %160 : vector<2x32xf32>
    %162 = vector.extract_strided_slice %147 {offsets = [0, 96], sizes = [2, 32], strides = [1, 1]} : vector<2x128xf32> to vector<2x32xf32>
    %163 = arith.negf %162 : vector<2x32xf32>
    %164 = math.exp %163 : vector<2x32xf32>
    %cst_60 = arith.constant 1.000000e+00 : f32
    %165 = vector.broadcast %cst_60 : f32 to vector<2x32xf32>
    %166 = arith.addf %165, %164 : vector<2x32xf32>
    %167 = arith.divf %165, %166 : vector<2x32xf32>
    %168 = arith.mulf %159, %116 : vector<2x32xf32>
    %169 = arith.mulf %153, %161 : vector<2x32xf32>
    %170 = arith.addf %168, %169 : vector<2x32xf32>
    %171 = math.tanh %170 : vector<2x32xf32>
    %172 = arith.mulf %167, %171 : vector<2x32xf32>
    %c0_61 = arith.constant 0 : index
    %c2_62 = arith.constant 2 : index
    %c0_63 = arith.constant 0 : index
    %173 = vector.load %arg10[%c0_61, %c2_62, %c0_63] : memref<2x8x32xf32, #tpu.memory_space<vmem>>, vector<2x1x32xf32>
    %174 = vector.shape_cast %173 : vector<2x1x32xf32> to vector<2x32xf32>
    %175 = vector.shape_cast %172 : vector<2x32xf32> to vector<2x1x32xf32>
    tpu.vector_store %arg10[%c0_61, %c2_62, %c0_63], %175 {strides = array<i32>} : memref<2x8x32xf32, #tpu.memory_space<vmem>>, vector<2x1x32xf32>,
    %c3 = arith.constant 3 : index
    %c0_64 = arith.constant 0 : index
    %c0_65 = arith.constant 0 : index
    %c0_66 = arith.constant 0 : index
    %176 = vector.load %arg1[%c3, %c0_64, %c0_65, %c0_66] : memref<8x2x4x32xf32, #tpu.memory_space<vmem>>, vector<1x2x4x32xf32>
    %177 = vector.shape_cast %176 : vector<1x2x4x32xf32> to vector<2x4x32xf32>
    %178 = vector.extract_strided_slice %5 {offsets = [6, 0], sizes = [2, 128], strides = [1, 1]} : vector<16x128xf32> to vector<2x128xf32>
    %cst_67 = arith.constant dense<0.000000e+00> : vector<2x32xf32>
    %179 = tpu.matmul %172, %6, %cst_67 {dimension_numbers = #tpu.dot_dimension_numbers<[1], [0], [0], [1], [0, 0, 1, 1], [], []>} : vector<2x32xf32>, vector<32x32xf32>, vector<2x32xf32> -> vector<2x32xf32>
    %180 = arith.addf %179, %9 : vector<2x32xf32>
    %181 = vector.shape_cast %180 : vector<2x32xf32> to vector<2x1x32xf32>
    %182 = vector.broadcast %181 : vector<2x1x32xf32> to vector<2x4x32xf32>
    %183 = arith.mulf %177, %182 : vector<2x4x32xf32>
    %cst_68 = arith.constant dense<0.000000e+00> : vector<2x4xf32>
    %184 = vector.multi_reduction <add>, %183, %cst_68 [2] : vector<2x4x32xf32> to vector<2x4xf32>
    %cst_69 = arith.constant dense<0xFF800000> : vector<2xf32>
    %185 = vector.multi_reduction <maximumf>, %184, %cst_69 [1] : vector<2x4xf32> to vector<2xf32>
    %186 = vector.shape_cast %185 : vector<2xf32> to vector<2x1xf32>
    %187 = vector.broadcast %186 : vector<2x1xf32> to vector<2x4xf32>
    %188 = arith.subf %184, %187 : vector<2x4xf32>
    %189 = math.exp %188 : vector<2x4xf32>
    %cst_70 = arith.constant dense<0.000000e+00> : vector<2xf32>
    %190 = vector.multi_reduction <add>, %189, %cst_70 [1] : vector<2x4xf32> to vector<2xf32>
    %191 = vector.shape_cast %190 : vector<2xf32> to vector<2x1xf32>
    %192 = vector.broadcast %191 : vector<2x1xf32> to vector<2x4xf32>
    %193 = arith.divf %189, %192 : vector<2x4xf32>
    %194 = vector.shape_cast %193 : vector<2x4xf32> to vector<2x4x1xf32>
    %195 = vector.broadcast %194 : vector<2x4x1xf32> to vector<2x4x32xf32>
    %196 = arith.mulf %195, %177 : vector<2x4x32xf32>
    %cst_71 = arith.constant dense<0.000000e+00> : vector<2x32xf32>
    %197 = vector.multi_reduction <add>, %196, %cst_71 [1] : vector<2x4x32xf32> to vector<2x32xf32>
    %cst_72 = arith.constant dense<0.000000e+00> : vector<2x128xf32>
    %198 = tpu.matmul %197, %10, %cst_72 {dimension_numbers = #tpu.dot_dimension_numbers<[1], [0], [0], [1], [0, 0, 1, 1], [], []>} : vector<2x32xf32>, vector<32x128xf32>, vector<2x128xf32> -> vector<2x128xf32>
    %199 = arith.addf %178, %198 : vector<2x128xf32>
    %cst_73 = arith.constant dense<0.000000e+00> : vector<2x128xf32>
    %200 = tpu.matmul %172, %11, %cst_73 {dimension_numbers = #tpu.dot_dimension_numbers<[1], [0], [0], [1], [0, 0, 1, 1], [], []>} : vector<2x32xf32>, vector<32x128xf32>, vector<2x128xf32> -> vector<2x128xf32>
    %201 = arith.addf %199, %200 : vector<2x128xf32>
    %202 = vector.extract_strided_slice %201 {offsets = [0, 0], sizes = [2, 32], strides = [1, 1]} : vector<2x128xf32> to vector<2x32xf32>
    %203 = arith.negf %202 : vector<2x32xf32>
    %204 = math.exp %203 : vector<2x32xf32>
    %cst_74 = arith.constant 1.000000e+00 : f32
    %205 = vector.broadcast %cst_74 : f32 to vector<2x32xf32>
    %206 = arith.addf %205, %204 : vector<2x32xf32>
    %207 = arith.divf %205, %206 : vector<2x32xf32>
    %208 = vector.extract_strided_slice %201 {offsets = [0, 32], sizes = [2, 32], strides = [1, 1]} : vector<2x128xf32> to vector<2x32xf32>
    %209 = arith.negf %208 : vector<2x32xf32>
    %210 = math.exp %209 : vector<2x32xf32>
    %cst_75 = arith.constant 1.000000e+00 : f32
    %211 = vector.broadcast %cst_75 : f32 to vector<2x32xf32>
    %212 = arith.addf %211, %210 : vector<2x32xf32>
    %213 = arith.divf %211, %212 : vector<2x32xf32>
    %214 = vector.extract_strided_slice %201 {offsets = [0, 64], sizes = [2, 32], strides = [1, 1]} : vector<2x128xf32> to vector<2x32xf32>
    %215 = math.tanh %214 : vector<2x32xf32>
    %216 = vector.extract_strided_slice %201 {offsets = [0, 96], sizes = [2, 32], strides = [1, 1]} : vector<2x128xf32> to vector<2x32xf32>
    %217 = arith.negf %216 : vector<2x32xf32>
    %218 = math.exp %217 : vector<2x32xf32>
    %cst_76 = arith.constant 1.000000e+00 : f32
    %219 = vector.broadcast %cst_76 : f32 to vector<2x32xf32>
    %220 = arith.addf %219, %218 : vector<2x32xf32>
    %221 = arith.divf %219, %220 : vector<2x32xf32>
    %222 = arith.mulf %213, %170 : vector<2x32xf32>
    %223 = arith.mulf %207, %215 : vector<2x32xf32>
    %224 = arith.addf %222, %223 : vector<2x32xf32>
    %225 = math.tanh %224 : vector<2x32xf32>
    %226 = arith.mulf %221, %225 : vector<2x32xf32>
    %c0_77 = arith.constant 0 : index
    %c3_78 = arith.constant 3 : index
    %c0_79 = arith.constant 0 : index
    %227 = vector.load %arg10[%c0_77, %c3_78, %c0_79] : memref<2x8x32xf32, #tpu.memory_space<vmem>>, vector<2x1x32xf32>
    %228 = vector.shape_cast %227 : vector<2x1x32xf32> to vector<2x32xf32>
    %229 = vector.shape_cast %226 : vector<2x32xf32> to vector<2x1x32xf32>
    tpu.vector_store %arg10[%c0_77, %c3_78, %c0_79], %229 {strides = array<i32>} : memref<2x8x32xf32, #tpu.memory_space<vmem>>, vector<2x1x32xf32>,
    %c4 = arith.constant 4 : index
    %c0_80 = arith.constant 0 : index
    %c0_81 = arith.constant 0 : index
    %c0_82 = arith.constant 0 : index
    %230 = vector.load %arg1[%c4, %c0_80, %c0_81, %c0_82] : memref<8x2x4x32xf32, #tpu.memory_space<vmem>>, vector<1x2x4x32xf32>
    %231 = vector.shape_cast %230 : vector<1x2x4x32xf32> to vector<2x4x32xf32>
    %232 = vector.extract_strided_slice %5 {offsets = [8, 0], sizes = [2, 128], strides = [1, 1]} : vector<16x128xf32> to vector<2x128xf32>
    %cst_83 = arith.constant dense<0.000000e+00> : vector<2x32xf32>
    %233 = tpu.matmul %226, %6, %cst_83 {dimension_numbers = #tpu.dot_dimension_numbers<[1], [0], [0], [1], [0, 0, 1, 1], [], []>} : vector<2x32xf32>, vector<32x32xf32>, vector<2x32xf32> -> vector<2x32xf32>
    %234 = arith.addf %233, %9 : vector<2x32xf32>
    %235 = vector.shape_cast %234 : vector<2x32xf32> to vector<2x1x32xf32>
    %236 = vector.broadcast %235 : vector<2x1x32xf32> to vector<2x4x32xf32>
    %237 = arith.mulf %231, %236 : vector<2x4x32xf32>
    %cst_84 = arith.constant dense<0.000000e+00> : vector<2x4xf32>
    %238 = vector.multi_reduction <add>, %237, %cst_84 [2] : vector<2x4x32xf32> to vector<2x4xf32>
    %cst_85 = arith.constant dense<0xFF800000> : vector<2xf32>
    %239 = vector.multi_reduction <maximumf>, %238, %cst_85 [1] : vector<2x4xf32> to vector<2xf32>
    %240 = vector.shape_cast %239 : vector<2xf32> to vector<2x1xf32>
    %241 = vector.broadcast %240 : vector<2x1xf32> to vector<2x4xf32>
    %242 = arith.subf %238, %241 : vector<2x4xf32>
    %243 = math.exp %242 : vector<2x4xf32>
    %cst_86 = arith.constant dense<0.000000e+00> : vector<2xf32>
    %244 = vector.multi_reduction <add>, %243, %cst_86 [1] : vector<2x4xf32> to vector<2xf32>
    %245 = vector.shape_cast %244 : vector<2xf32> to vector<2x1xf32>
    %246 = vector.broadcast %245 : vector<2x1xf32> to vector<2x4xf32>
    %247 = arith.divf %243, %246 : vector<2x4xf32>
    %248 = vector.shape_cast %247 : vector<2x4xf32> to vector<2x4x1xf32>
    %249 = vector.broadcast %248 : vector<2x4x1xf32> to vector<2x4x32xf32>
    %250 = arith.mulf %249, %231 : vector<2x4x32xf32>
    %cst_87 = arith.constant dense<0.000000e+00> : vector<2x32xf32>
    %251 = vector.multi_reduction <add>, %250, %cst_87 [1] : vector<2x4x32xf32> to vector<2x32xf32>
    %cst_88 = arith.constant dense<0.000000e+00> : vector<2x128xf32>
    %252 = tpu.matmul %251, %10, %cst_88 {dimension_numbers = #tpu.dot_dimension_numbers<[1], [0], [0], [1], [0, 0, 1, 1], [], []>} : vector<2x32xf32>, vector<32x128xf32>, vector<2x128xf32> -> vector<2x128xf32>
    %253 = arith.addf %232, %252 : vector<2x128xf32>
    %cst_89 = arith.constant dense<0.000000e+00> : vector<2x128xf32>
    %254 = tpu.matmul %226, %11, %cst_89 {dimension_numbers = #tpu.dot_dimension_numbers<[1], [0], [0], [1], [0, 0, 1, 1], [], []>} : vector<2x32xf32>, vector<32x128xf32>, vector<2x128xf32> -> vector<2x128xf32>
    %255 = arith.addf %253, %254 : vector<2x128xf32>
    %256 = vector.extract_strided_slice %255 {offsets = [0, 0], sizes = [2, 32], strides = [1, 1]} : vector<2x128xf32> to vector<2x32xf32>
    %257 = arith.negf %256 : vector<2x32xf32>
    %258 = math.exp %257 : vector<2x32xf32>
    %cst_90 = arith.constant 1.000000e+00 : f32
    %259 = vector.broadcast %cst_90 : f32 to vector<2x32xf32>
    %260 = arith.addf %259, %258 : vector<2x32xf32>
    %261 = arith.divf %259, %260 : vector<2x32xf32>
    %262 = vector.extract_strided_slice %255 {offsets = [0, 32], sizes = [2, 32], strides = [1, 1]} : vector<2x128xf32> to vector<2x32xf32>
    %263 = arith.negf %262 : vector<2x32xf32>
    %264 = math.exp %263 : vector<2x32xf32>
    %cst_91 = arith.constant 1.000000e+00 : f32
    %265 = vector.broadcast %cst_91 : f32 to vector<2x32xf32>
    %266 = arith.addf %265, %264 : vector<2x32xf32>
    %267 = arith.divf %265, %266 : vector<2x32xf32>
    %268 = vector.extract_strided_slice %255 {offsets = [0, 64], sizes = [2, 32], strides = [1, 1]} : vector<2x128xf32> to vector<2x32xf32>
    %269 = math.tanh %268 : vector<2x32xf32>
    %270 = vector.extract_strided_slice %255 {offsets = [0, 96], sizes = [2, 32], strides = [1, 1]} : vector<2x128xf32> to vector<2x32xf32>
    %271 = arith.negf %270 : vector<2x32xf32>
    %272 = math.exp %271 : vector<2x32xf32>
    %cst_92 = arith.constant 1.000000e+00 : f32
    %273 = vector.broadcast %cst_92 : f32 to vector<2x32xf32>
    %274 = arith.addf %273, %272 : vector<2x32xf32>
    %275 = arith.divf %273, %274 : vector<2x32xf32>
    %276 = arith.mulf %267, %224 : vector<2x32xf32>
    %277 = arith.mulf %261, %269 : vector<2x32xf32>
    %278 = arith.addf %276, %277 : vector<2x32xf32>
    %279 = math.tanh %278 : vector<2x32xf32>
    %280 = arith.mulf %275, %279 : vector<2x32xf32>
    %c0_93 = arith.constant 0 : index
    %c4_94 = arith.constant 4 : index
    %c0_95 = arith.constant 0 : index
    %281 = vector.load %arg10[%c0_93, %c4_94, %c0_95] : memref<2x8x32xf32, #tpu.memory_space<vmem>>, vector<2x1x32xf32>
    %282 = vector.shape_cast %281 : vector<2x1x32xf32> to vector<2x32xf32>
    %283 = vector.shape_cast %280 : vector<2x32xf32> to vector<2x1x32xf32>
    tpu.vector_store %arg10[%c0_93, %c4_94, %c0_95], %283 {strides = array<i32>} : memref<2x8x32xf32, #tpu.memory_space<vmem>>, vector<2x1x32xf32>,
    %c5 = arith.constant 5 : index
    %c0_96 = arith.constant 0 : index
    %c0_97 = arith.constant 0 : index
    %c0_98 = arith.constant 0 : index
    %284 = vector.load %arg1[%c5, %c0_96, %c0_97, %c0_98] : memref<8x2x4x32xf32, #tpu.memory_space<vmem>>, vector<1x2x4x32xf32>
    %285 = vector.shape_cast %284 : vector<1x2x4x32xf32> to vector<2x4x32xf32>
    %286 = vector.extract_strided_slice %5 {offsets = [10, 0], sizes = [2, 128], strides = [1, 1]} : vector<16x128xf32> to vector<2x128xf32>
    %cst_99 = arith.constant dense<0.000000e+00> : vector<2x32xf32>
    %287 = tpu.matmul %280, %6, %cst_99 {dimension_numbers = #tpu.dot_dimension_numbers<[1], [0], [0], [1], [0, 0, 1, 1], [], []>} : vector<2x32xf32>, vector<32x32xf32>, vector<2x32xf32> -> vector<2x32xf32>
    %288 = arith.addf %287, %9 : vector<2x32xf32>
    %289 = vector.shape_cast %288 : vector<2x32xf32> to vector<2x1x32xf32>
    %290 = vector.broadcast %289 : vector<2x1x32xf32> to vector<2x4x32xf32>
    %291 = arith.mulf %285, %290 : vector<2x4x32xf32>
    %cst_100 = arith.constant dense<0.000000e+00> : vector<2x4xf32>
    %292 = vector.multi_reduction <add>, %291, %cst_100 [2] : vector<2x4x32xf32> to vector<2x4xf32>
    %cst_101 = arith.constant dense<0xFF800000> : vector<2xf32>
    %293 = vector.multi_reduction <maximumf>, %292, %cst_101 [1] : vector<2x4xf32> to vector<2xf32>
    %294 = vector.shape_cast %293 : vector<2xf32> to vector<2x1xf32>
    %295 = vector.broadcast %294 : vector<2x1xf32> to vector<2x4xf32>
    %296 = arith.subf %292, %295 : vector<2x4xf32>
    %297 = math.exp %296 : vector<2x4xf32>
    %cst_102 = arith.constant dense<0.000000e+00> : vector<2xf32>
    %298 = vector.multi_reduction <add>, %297, %cst_102 [1] : vector<2x4xf32> to vector<2xf32>
    %299 = vector.shape_cast %298 : vector<2xf32> to vector<2x1xf32>
    %300 = vector.broadcast %299 : vector<2x1xf32> to vector<2x4xf32>
    %301 = arith.divf %297, %300 : vector<2x4xf32>
    %302 = vector.shape_cast %301 : vector<2x4xf32> to vector<2x4x1xf32>
    %303 = vector.broadcast %302 : vector<2x4x1xf32> to vector<2x4x32xf32>
    %304 = arith.mulf %303, %285 : vector<2x4x32xf32>
    %cst_103 = arith.constant dense<0.000000e+00> : vector<2x32xf32>
    %305 = vector.multi_reduction <add>, %304, %cst_103 [1] : vector<2x4x32xf32> to vector<2x32xf32>
    %cst_104 = arith.constant dense<0.000000e+00> : vector<2x128xf32>
    %306 = tpu.matmul %305, %10, %cst_104 {dimension_numbers = #tpu.dot_dimension_numbers<[1], [0], [0], [1], [0, 0, 1, 1], [], []>} : vector<2x32xf32>, vector<32x128xf32>, vector<2x128xf32> -> vector<2x128xf32>
    %307 = arith.addf %286, %306 : vector<2x128xf32>
    %cst_105 = arith.constant dense<0.000000e+00> : vector<2x128xf32>
    %308 = tpu.matmul %280, %11, %cst_105 {dimension_numbers = #tpu.dot_dimension_numbers<[1], [0], [0], [1], [0, 0, 1, 1], [], []>} : vector<2x32xf32>, vector<32x128xf32>, vector<2x128xf32> -> vector<2x128xf32>
    %309 = arith.addf %307, %308 : vector<2x128xf32>
    %310 = vector.extract_strided_slice %309 {offsets = [0, 0], sizes = [2, 32], strides = [1, 1]} : vector<2x128xf32> to vector<2x32xf32>
    %311 = arith.negf %310 : vector<2x32xf32>
    %312 = math.exp %311 : vector<2x32xf32>
    %cst_106 = arith.constant 1.000000e+00 : f32
    %313 = vector.broadcast %cst_106 : f32 to vector<2x32xf32>
    %314 = arith.addf %313, %312 : vector<2x32xf32>
    %315 = arith.divf %313, %314 : vector<2x32xf32>
    %316 = vector.extract_strided_slice %309 {offsets = [0, 32], sizes = [2, 32], strides = [1, 1]} : vector<2x128xf32> to vector<2x32xf32>
    %317 = arith.negf %316 : vector<2x32xf32>
    %318 = math.exp %317 : vector<2x32xf32>
    %cst_107 = arith.constant 1.000000e+00 : f32
    %319 = vector.broadcast %cst_107 : f32 to vector<2x32xf32>
    %320 = arith.addf %319, %318 : vector<2x32xf32>
    %321 = arith.divf %319, %320 : vector<2x32xf32>
    %322 = vector.extract_strided_slice %309 {offsets = [0, 64], sizes = [2, 32], strides = [1, 1]} : vector<2x128xf32> to vector<2x32xf32>
    %323 = math.tanh %322 : vector<2x32xf32>
    %324 = vector.extract_strided_slice %309 {offsets = [0, 96], sizes = [2, 32], strides = [1, 1]} : vector<2x128xf32> to vector<2x32xf32>
    %325 = arith.negf %324 : vector<2x32xf32>
    %326 = math.exp %325 : vector<2x32xf32>
    %cst_108 = arith.constant 1.000000e+00 : f32
    %327 = vector.broadcast %cst_108 : f32 to vector<2x32xf32>
    %328 = arith.addf %327, %326 : vector<2x32xf32>
    %329 = arith.divf %327, %328 : vector<2x32xf32>
    %330 = arith.mulf %321, %278 : vector<2x32xf32>
    %331 = arith.mulf %315, %323 : vector<2x32xf32>
    %332 = arith.addf %330, %331 : vector<2x32xf32>
    %333 = math.tanh %332 : vector<2x32xf32>
    %334 = arith.mulf %329, %333 : vector<2x32xf32>
    %c0_109 = arith.constant 0 : index
    %c5_110 = arith.constant 5 : index
    %c0_111 = arith.constant 0 : index
    %335 = vector.load %arg10[%c0_109, %c5_110, %c0_111] : memref<2x8x32xf32, #tpu.memory_space<vmem>>, vector<2x1x32xf32>
    %336 = vector.shape_cast %335 : vector<2x1x32xf32> to vector<2x32xf32>
    %337 = vector.shape_cast %334 : vector<2x32xf32> to vector<2x1x32xf32>
    tpu.vector_store %arg10[%c0_109, %c5_110, %c0_111], %337 {strides = array<i32>} : memref<2x8x32xf32, #tpu.memory_space<vmem>>, vector<2x1x32xf32>,
    %c6 = arith.constant 6 : index
    %c0_112 = arith.constant 0 : index
    %c0_113 = arith.constant 0 : index
    %c0_114 = arith.constant 0 : index
    %338 = vector.load %arg1[%c6, %c0_112, %c0_113, %c0_114] : memref<8x2x4x32xf32, #tpu.memory_space<vmem>>, vector<1x2x4x32xf32>
    %339 = vector.shape_cast %338 : vector<1x2x4x32xf32> to vector<2x4x32xf32>
    %340 = vector.extract_strided_slice %5 {offsets = [12, 0], sizes = [2, 128], strides = [1, 1]} : vector<16x128xf32> to vector<2x128xf32>
    %cst_115 = arith.constant dense<0.000000e+00> : vector<2x32xf32>
    %341 = tpu.matmul %334, %6, %cst_115 {dimension_numbers = #tpu.dot_dimension_numbers<[1], [0], [0], [1], [0, 0, 1, 1], [], []>} : vector<2x32xf32>, vector<32x32xf32>, vector<2x32xf32> -> vector<2x32xf32>
    %342 = arith.addf %341, %9 : vector<2x32xf32>
    %343 = vector.shape_cast %342 : vector<2x32xf32> to vector<2x1x32xf32>
    %344 = vector.broadcast %343 : vector<2x1x32xf32> to vector<2x4x32xf32>
    %345 = arith.mulf %339, %344 : vector<2x4x32xf32>
    %cst_116 = arith.constant dense<0.000000e+00> : vector<2x4xf32>
    %346 = vector.multi_reduction <add>, %345, %cst_116 [2] : vector<2x4x32xf32> to vector<2x4xf32>
    %cst_117 = arith.constant dense<0xFF800000> : vector<2xf32>
    %347 = vector.multi_reduction <maximumf>, %346, %cst_117 [1] : vector<2x4xf32> to vector<2xf32>
    %348 = vector.shape_cast %347 : vector<2xf32> to vector<2x1xf32>
    %349 = vector.broadcast %348 : vector<2x1xf32> to vector<2x4xf32>
    %350 = arith.subf %346, %349 : vector<2x4xf32>
    %351 = math.exp %350 : vector<2x4xf32>
    %cst_118 = arith.constant dense<0.000000e+00> : vector<2xf32>
    %352 = vector.multi_reduction <add>, %351, %cst_118 [1] : vector<2x4xf32> to vector<2xf32>
    %353 = vector.shape_cast %352 : vector<2xf32> to vector<2x1xf32>
    %354 = vector.broadcast %353 : vector<2x1xf32> to vector<2x4xf32>
    %355 = arith.divf %351, %354 : vector<2x4xf32>
    %356 = vector.shape_cast %355 : vector<2x4xf32> to vector<2x4x1xf32>
    %357 = vector.broadcast %356 : vector<2x4x1xf32> to vector<2x4x32xf32>
    %358 = arith.mulf %357, %339 : vector<2x4x32xf32>
    %cst_119 = arith.constant dense<0.000000e+00> : vector<2x32xf32>
    %359 = vector.multi_reduction <add>, %358, %cst_119 [1] : vector<2x4x32xf32> to vector<2x32xf32>
    %cst_120 = arith.constant dense<0.000000e+00> : vector<2x128xf32>
    %360 = tpu.matmul %359, %10, %cst_120 {dimension_numbers = #tpu.dot_dimension_numbers<[1], [0], [0], [1], [0, 0, 1, 1], [], []>} : vector<2x32xf32>, vector<32x128xf32>, vector<2x128xf32> -> vector<2x128xf32>
    %361 = arith.addf %340, %360 : vector<2x128xf32>
    %cst_121 = arith.constant dense<0.000000e+00> : vector<2x128xf32>
    %362 = tpu.matmul %334, %11, %cst_121 {dimension_numbers = #tpu.dot_dimension_numbers<[1], [0], [0], [1], [0, 0, 1, 1], [], []>} : vector<2x32xf32>, vector<32x128xf32>, vector<2x128xf32> -> vector<2x128xf32>
    %363 = arith.addf %361, %362 : vector<2x128xf32>
    %364 = vector.extract_strided_slice %363 {offsets = [0, 0], sizes = [2, 32], strides = [1, 1]} : vector<2x128xf32> to vector<2x32xf32>
    %365 = arith.negf %364 : vector<2x32xf32>
    %366 = math.exp %365 : vector<2x32xf32>
    %cst_122 = arith.constant 1.000000e+00 : f32
    %367 = vector.broadcast %cst_122 : f32 to vector<2x32xf32>
    %368 = arith.addf %367, %366 : vector<2x32xf32>
    %369 = arith.divf %367, %368 : vector<2x32xf32>
    %370 = vector.extract_strided_slice %363 {offsets = [0, 32], sizes = [2, 32], strides = [1, 1]} : vector<2x128xf32> to vector<2x32xf32>
    %371 = arith.negf %370 : vector<2x32xf32>
    %372 = math.exp %371 : vector<2x32xf32>
    %cst_123 = arith.constant 1.000000e+00 : f32
    %373 = vector.broadcast %cst_123 : f32 to vector<2x32xf32>
    %374 = arith.addf %373, %372 : vector<2x32xf32>
    %375 = arith.divf %373, %374 : vector<2x32xf32>
    %376 = vector.extract_strided_slice %363 {offsets = [0, 64], sizes = [2, 32], strides = [1, 1]} : vector<2x128xf32> to vector<2x32xf32>
    %377 = math.tanh %376 : vector<2x32xf32>
    %378 = vector.extract_strided_slice %363 {offsets = [0, 96], sizes = [2, 32], strides = [1, 1]} : vector<2x128xf32> to vector<2x32xf32>
    %379 = arith.negf %378 : vector<2x32xf32>
    %380 = math.exp %379 : vector<2x32xf32>
    %cst_124 = arith.constant 1.000000e+00 : f32
    %381 = vector.broadcast %cst_124 : f32 to vector<2x32xf32>
    %382 = arith.addf %381, %380 : vector<2x32xf32>
    %383 = arith.divf %381, %382 : vector<2x32xf32>
    %384 = arith.mulf %375, %332 : vector<2x32xf32>
    %385 = arith.mulf %369, %377 : vector<2x32xf32>
    %386 = arith.addf %384, %385 : vector<2x32xf32>
    %387 = math.tanh %386 : vector<2x32xf32>
    %388 = arith.mulf %383, %387 : vector<2x32xf32>
    %c0_125 = arith.constant 0 : index
    %c6_126 = arith.constant 6 : index
    %c0_127 = arith.constant 0 : index
    %389 = vector.load %arg10[%c0_125, %c6_126, %c0_127] : memref<2x8x32xf32, #tpu.memory_space<vmem>>, vector<2x1x32xf32>
    %390 = vector.shape_cast %389 : vector<2x1x32xf32> to vector<2x32xf32>
    %391 = vector.shape_cast %388 : vector<2x32xf32> to vector<2x1x32xf32>
    tpu.vector_store %arg10[%c0_125, %c6_126, %c0_127], %391 {strides = array<i32>} : memref<2x8x32xf32, #tpu.memory_space<vmem>>, vector<2x1x32xf32>,
    %c7 = arith.constant 7 : index
    %c0_128 = arith.constant 0 : index
    %c0_129 = arith.constant 0 : index
    %c0_130 = arith.constant 0 : index
    %392 = vector.load %arg1[%c7, %c0_128, %c0_129, %c0_130] : memref<8x2x4x32xf32, #tpu.memory_space<vmem>>, vector<1x2x4x32xf32>
    %393 = vector.shape_cast %392 : vector<1x2x4x32xf32> to vector<2x4x32xf32>
    %394 = vector.extract_strided_slice %5 {offsets = [14, 0], sizes = [2, 128], strides = [1, 1]} : vector<16x128xf32> to vector<2x128xf32>
    %cst_131 = arith.constant dense<0.000000e+00> : vector<2x32xf32>
    %395 = tpu.matmul %388, %6, %cst_131 {dimension_numbers = #tpu.dot_dimension_numbers<[1], [0], [0], [1], [0, 0, 1, 1], [], []>} : vector<2x32xf32>, vector<32x32xf32>, vector<2x32xf32> -> vector<2x32xf32>
    %396 = arith.addf %395, %9 : vector<2x32xf32>
    %397 = vector.shape_cast %396 : vector<2x32xf32> to vector<2x1x32xf32>
    %398 = vector.broadcast %397 : vector<2x1x32xf32> to vector<2x4x32xf32>
    %399 = arith.mulf %393, %398 : vector<2x4x32xf32>
    %cst_132 = arith.constant dense<0.000000e+00> : vector<2x4xf32>
    %400 = vector.multi_reduction <add>, %399, %cst_132 [2] : vector<2x4x32xf32> to vector<2x4xf32>
    %cst_133 = arith.constant dense<0xFF800000> : vector<2xf32>
    %401 = vector.multi_reduction <maximumf>, %400, %cst_133 [1] : vector<2x4xf32> to vector<2xf32>
    %402 = vector.shape_cast %401 : vector<2xf32> to vector<2x1xf32>
    %403 = vector.broadcast %402 : vector<2x1xf32> to vector<2x4xf32>
    %404 = arith.subf %400, %403 : vector<2x4xf32>
    %405 = math.exp %404 : vector<2x4xf32>
    %cst_134 = arith.constant dense<0.000000e+00> : vector<2xf32>
    %406 = vector.multi_reduction <add>, %405, %cst_134 [1] : vector<2x4xf32> to vector<2xf32>
    %407 = vector.shape_cast %406 : vector<2xf32> to vector<2x1xf32>
    %408 = vector.broadcast %407 : vector<2x1xf32> to vector<2x4xf32>
    %409 = arith.divf %405, %408 : vector<2x4xf32>
    %410 = vector.shape_cast %409 : vector<2x4xf32> to vector<2x4x1xf32>
    %411 = vector.broadcast %410 : vector<2x4x1xf32> to vector<2x4x32xf32>
    %412 = arith.mulf %411, %393 : vector<2x4x32xf32>
    %cst_135 = arith.constant dense<0.000000e+00> : vector<2x32xf32>
    %413 = vector.multi_reduction <add>, %412, %cst_135 [1] : vector<2x4x32xf32> to vector<2x32xf32>
    %cst_136 = arith.constant dense<0.000000e+00> : vector<2x128xf32>
    %414 = tpu.matmul %413, %10, %cst_136 {dimension_numbers = #tpu.dot_dimension_numbers<[1], [0], [0], [1], [0, 0, 1, 1], [], []>} : vector<2x32xf32>, vector<32x128xf32>, vector<2x128xf32> -> vector<2x128xf32>
    %415 = arith.addf %394, %414 : vector<2x128xf32>
    %cst_137 = arith.constant dense<0.000000e+00> : vector<2x128xf32>
    %416 = tpu.matmul %388, %11, %cst_137 {dimension_numbers = #tpu.dot_dimension_numbers<[1], [0], [0], [1], [0, 0, 1, 1], [], []>} : vector<2x32xf32>, vector<32x128xf32>, vector<2x128xf32> -> vector<2x128xf32>
    %417 = arith.addf %415, %416 : vector<2x128xf32>
    %418 = vector.extract_strided_slice %417 {offsets = [0, 0], sizes = [2, 32], strides = [1, 1]} : vector<2x128xf32> to vector<2x32xf32>
    %419 = arith.negf %418 : vector<2x32xf32>
    %420 = math.exp %419 : vector<2x32xf32>
    %cst_138 = arith.constant 1.000000e+00 : f32
    %421 = vector.broadcast %cst_138 : f32 to vector<2x32xf32>
    %422 = arith.addf %421, %420 : vector<2x32xf32>
    %423 = arith.divf %421, %422 : vector<2x32xf32>
    %424 = vector.extract_strided_slice %417 {offsets = [0, 32], sizes = [2, 32], strides = [1, 1]} : vector<2x128xf32> to vector<2x32xf32>
    %425 = arith.negf %424 : vector<2x32xf32>
    %426 = math.exp %425 : vector<2x32xf32>
    %cst_139 = arith.constant 1.000000e+00 : f32
    %427 = vector.broadcast %cst_139 : f32 to vector<2x32xf32>
    %428 = arith.addf %427, %426 : vector<2x32xf32>
    %429 = arith.divf %427, %428 : vector<2x32xf32>
    %430 = vector.extract_strided_slice %417 {offsets = [0, 64], sizes = [2, 32], strides = [1, 1]} : vector<2x128xf32> to vector<2x32xf32>
    %431 = math.tanh %430 : vector<2x32xf32>
    %432 = vector.extract_strided_slice %417 {offsets = [0, 96], sizes = [2, 32], strides = [1, 1]} : vector<2x128xf32> to vector<2x32xf32>
    %433 = arith.negf %432 : vector<2x32xf32>
    %434 = math.exp %433 : vector<2x32xf32>
    %cst_140 = arith.constant 1.000000e+00 : f32
    %435 = vector.broadcast %cst_140 : f32 to vector<2x32xf32>
    %436 = arith.addf %435, %434 : vector<2x32xf32>
    %437 = arith.divf %435, %436 : vector<2x32xf32>
    %438 = arith.mulf %429, %386 : vector<2x32xf32>
    %439 = arith.mulf %423, %431 : vector<2x32xf32>
    %440 = arith.addf %438, %439 : vector<2x32xf32>
    %441 = math.tanh %440 : vector<2x32xf32>
    %442 = arith.mulf %437, %441 : vector<2x32xf32>
    %c0_141 = arith.constant 0 : index
    %c7_142 = arith.constant 7 : index
    %c0_143 = arith.constant 0 : index
    %443 = vector.load %arg10[%c0_141, %c7_142, %c0_143] : memref<2x8x32xf32, #tpu.memory_space<vmem>>, vector<2x1x32xf32>
    %444 = vector.shape_cast %443 : vector<2x1x32xf32> to vector<2x32xf32>
    %445 = vector.shape_cast %442 : vector<2x32xf32> to vector<2x1x32xf32>
    tpu.vector_store %arg10[%c0_141, %c7_142, %c0_143], %445 {strides = array<i32>} : memref<2x8x32xf32, #tpu.memory_space<vmem>>, vector<2x1x32xf32>,
    %c0_144 = arith.constant 0 : index
    %c0_145 = arith.constant 0 : index
    %446 = vector.load %arg12[%c0_144, %c0_145] : memref<2x32xf32, #tpu.memory_space<vmem>>, vector<2x32xf32>
    tpu.vector_store %arg12[%c0_144, %c0_145], %440 {strides = array<i32>} : memref<2x32xf32, #tpu.memory_space<vmem>>, vector<2x32xf32>,
    %c0_146 = arith.constant 0 : index
    %c0_147 = arith.constant 0 : index
    %447 = vector.load %arg8[%c0_146, %c0_147] : memref<32x32xf32, #tpu.memory_space<vmem>>, vector<32x32xf32>
    %cst_148 = arith.constant dense<0.000000e+00> : vector<2x32xf32>
    %448 = tpu.matmul %442, %447, %cst_148 {dimension_numbers = #tpu.dot_dimension_numbers<[1], [0], [0], [1], [0, 0, 1, 1], [], []>} : vector<2x32xf32>, vector<32x32xf32>, vector<2x32xf32> -> vector<2x32xf32>
    %c0_149 = arith.constant 0 : index
    %c0_150 = arith.constant 0 : index
    %449 = vector.load %arg9[%c0_149, %c0_150] : memref<1x32xf32, #tpu.memory_space<vmem>>, vector<1x32xf32>
    %450 = vector.broadcast %449 : vector<1x32xf32> to vector<2x32xf32>
    %451 = arith.addf %448, %450 : vector<2x32xf32>
    %452 = math.tanh %451 : vector<2x32xf32>
    %c0_151 = arith.constant 0 : index
    %c0_152 = arith.constant 0 : index
    %453 = vector.load %arg11[%c0_151, %c0_152] : memref<2x32xf32, #tpu.memory_space<vmem>>, vector<2x32xf32>
    tpu.vector_store %arg11[%c0_151, %c0_152], %452 {strides = array<i32>} : memref<2x32xf32, #tpu.memory_space<vmem>>, vector<2x32xf32>,
    return
  }
}

</mosaic_0001>

<llo_original>
// kernel: tpu_custom_call.1
$region0: #{tpu_custom_call.1}
  #allocation0 [shape = 'u32[]', space=smem, size = 0x4, offset = 0x4, fixed_abs, tag = 'smem constant byte address 0x4 - core index']
  #allocation1 [shape = 'u32[144,128]{1,0:T(1,128)}', space=vmem, size = 0x12000, scoped, tag = 'internal scratch']
  %s0 = inlined_call_operand.hbm [shape: f32[16,16], index: 0, kind: input, shape index: {}]
  %s1 = inlined_call_operand.hbm [shape: f32[8,2,4,32], index: 1, kind: input, shape index: {}]
  %s2 = inlined_call_operand.hbm [shape: f32[32,32], index: 2, kind: input, shape index: {}]
  %s3 = inlined_call_operand.vmem [shape: f32[1,32], index: 3, kind: input, shape index: {}]
  %s4 = inlined_call_operand.hbm [shape: f32[16,128], index: 4, kind: input, shape index: {}]
  %s5 = inlined_call_operand.hbm [shape: f32[32,128], index: 5, kind: input, shape index: {}]
  %s6 = inlined_call_operand.hbm [shape: f32[32,128], index: 6, kind: input, shape index: {}]
  %s7 = inlined_call_operand.vmem [shape: f32[1,128], index: 7, kind: input, shape index: {}]
  %s8 = inlined_call_operand.hbm [shape: f32[32,32], index: 8, kind: input, shape index: {}]
  %s9 = inlined_call_operand.vmem [shape: f32[1,32], index: 9, kind: input, shape index: {}]
  %s10 = inlined_call_operand.hbm [shape: f32[2,8,32], index: 10, kind: output, shape index: {0}]
  %s11 = inlined_call_operand.hbm [shape: f32[2,32], index: 11, kind: output, shape index: {1}]
  %s12 = inlined_call_operand.hbm [shape: f32[2,32], index: 12, kind: output, shape index: {2}]
  %13 = xla_tuple %s10, %s11, %s12
  %s14 = sld [smem:[#allocation0]]
  $region94: #{tpu_custom_call.1} parent=0
    _
  %s16 = ssub.s32 1, %s14
  %s17 = scalar_select 0, %s16, %s14
  $region1: #{tpu_custom_call.1} parent=0
    #allocation2 [shape = 'u8[8192]{0}', space=vmem, size = 0x2000, scoped, tag = 'input window, operand 0, single buffered']
    #allocation3 [shape = 's32[1]{0}', space=sflag, size = 0x4, scoped, tag = 'scoped memory for tpu_custom_call.1']
    #allocation4 [shape = 's32[1]{0}', space=sflag, size = 0x4, scoped, tag = 'scoped memory for tpu_custom_call.1']
    #allocation5 [shape = 'u8[32768]{0}', space=vmem, size = 0x8000, scoped, tag = 'input window, operand 1, single buffered']
    #allocation6 [shape = 's32[1]{0}', space=sflag, size = 0x4, scoped, tag = 'scoped memory for tpu_custom_call.1']
    #allocation7 [shape = 'u8[16384]{0}', space=vmem, size = 0x4000, scoped, tag = 'input window, operand 2, single buffered']
    #allocation8 [shape = 'u8[8192]{0}', space=vmem, size = 0x2000, scoped, tag = 'input window, operand 4, single buffered']
    #allocation9 [shape = 's32[1]{0}', space=sflag, size = 0x4, scoped, tag = 'scoped memory for tpu_custom_call.1']
    #allocation10 [shape = 'u8[16384]{0}', space=vmem, size = 0x4000, scoped, tag = 'input window, operand 5, single buffered']
    #allocation11 [shape = 'u8[16384]{0}', space=vmem, size = 0x4000, scoped, tag = 'input window, operand 6, single buffered']
    #allocation12 [shape = 's32[1]{0}', space=sflag, size = 0x4, scoped, tag = 'scoped memory for tpu_custom_call.1']
    #allocation13 [shape = 'u8[16384]{0}', space=vmem, size = 0x4000, scoped, tag = 'input window, operand 8, single buffered']
    #allocation14 [shape = 'u8[8192]{0}', space=vmem, size = 0x2000, scoped, tag = 'output window, operand 0, single buffered']
    #allocation15 [shape = 'u8[1024]{0}', space=vmem, size = 0x400, scoped, tag = 'output window, operand 1, single buffered']
    #allocation16 [shape = 's32[1]{0}', space=sflag, size = 0x4, scoped, tag = 'scoped memory for tpu_custom_call.1']
    #allocation17 [shape = 'u8[1024]{0}', space=vmem, size = 0x400, scoped, tag = 'output window, operand 2, single buffered']
    %18 = vsyncpa [#allocation3], 0
    %19 = vsyncpa [#allocation6], 0
    %20 = vsyncpa [#allocation9], 0
    %21 = vsyncpa [#allocation12], 0
    %22 = vsyncpa [#allocation4], 0
    %23 = vsyncpa [#allocation16], 0
    // Predicated region
    $region2: #{tpu_custom_call.1} parent=1 // pred_check
      _
    $region3: #{tpu_custom_call.1} parent=1 // pred_check_branch
      %25 = sbr.rel (0) target = $region5
    $region4: #{tpu_custom_call.1} parent=1 // pred_region
      %s27 = ssub.s32 256, 256
      %28 = vsyncadd [#allocation3], %s27
      %s29 = sshll.u32 [#allocation2], 4
      %s30 = int_to_ptr.vmem [resolvable:$true] %s29
      %35 = dma.hbm_to_vmem [thread:$0]  %s0, 256, %s30, [#allocation3], 128, 128, 8
    $region5: #{tpu_custom_call.1} parent=1 // pred_fallthru
      _
    // Predicated region
    $region6: #{tpu_custom_call.1} parent=1 // pred_check
      _
    $region7: #{tpu_custom_call.1} parent=1 // pred_check_branch
      %37 = sbr.rel (0) target = $region9
    $region8: #{tpu_custom_call.1} parent=1 // pred_region
      %s39 = ssub.s32 1024, 1024
      %40 = vsyncadd [#allocation6], %s39
      %s41 = sshll.u32 [#allocation5], 4
      %s42 = int_to_ptr.vmem [resolvable:$true] %s41
      %47 = dma.hbm_to_vmem [thread:$0]  %s1, 1024, %s42, [#allocation6], 64, 64, 4
    $region9: #{tpu_custom_call.1} parent=1 // pred_fallthru
      _
    // Predicated region
    $region10: #{tpu_custom_call.1} parent=1 // pred_check
      _
    $region11: #{tpu_custom_call.1} parent=1 // pred_check_branch
      %49 = sbr.rel (0) target = $region13
    $region12: #{tpu_custom_call.1} parent=1 // pred_region
      %s51 = ssub.s32 512, 512
      %52 = vsyncadd [#allocation6], %s51
      %s53 = sshll.u32 [#allocation7], 4
      %s54 = int_to_ptr.vmem [resolvable:$true] %s53
      %59 = dma.hbm_to_vmem [thread:$0]  %s2, 512, %s54, [#allocation6], 128, 128, 8
    $region13: #{tpu_custom_call.1} parent=1 // pred_fallthru
      _
    // Predicated region
    $region14: #{tpu_custom_call.1} parent=1 // pred_check
      _
    $region15: #{tpu_custom_call.1} parent=1 // pred_check_branch
      %61 = sbr.rel (0) target = $region17
    $region16: #{tpu_custom_call.1} parent=1 // pred_region
      _
    $region17: #{tpu_custom_call.1} parent=1 // pred_fallthru
      _
    // Predicated region
    $region18: #{tpu_custom_call.1} parent=1 // pred_check
      _
    $region19: #{tpu_custom_call.1} parent=1 // pred_check_branch
      %63 = sbr.rel (0) target = $region21
    $region20: #{tpu_custom_call.1} parent=1 // pred_region
      %s65 = ssub.s32 256, 256
      %66 = vsyncadd [#allocation9], %s65
      %s67 = sshll.u32 [#allocation8], 4
      %s68 = int_to_ptr.vmem [resolvable:$true] %s67
      %73 = dma.hbm_to_vmem [thread:$0]  %s4, 256, %s68, [#allocation9], 128, 128, 8
    $region21: #{tpu_custom_call.1} parent=1 // pred_fallthru
      _
    // Predicated region
    $region22: #{tpu_custom_call.1} parent=1 // pred_check
      _
    $region23: #{tpu_custom_call.1} parent=1 // pred_check_branch
      %75 = sbr.rel (0) target = $region25
    $region24: #{tpu_custom_call.1} parent=1 // pred_region
      %s77 = ssub.s32 512, 512
      %78 = vsyncadd [#allocation9], %s77
      %s79 = sshll.u32 [#allocation10], 4
      %s80 = int_to_ptr.vmem [resolvable:$true] %s79
      %85 = dma.hbm_to_vmem [thread:$0]  %s5, 512, %s80, [#allocation9], 128, 128, 8
    $region25: #{tpu_custom_call.1} parent=1 // pred_fallthru
      _
    // Predicated region
    $region26: #{tpu_custom_call.1} parent=1 // pred_check
      _
    $region27: #{tpu_custom_call.1} parent=1 // pred_check_branch
      %87 = sbr.rel (0) target = $region29
    $region28: #{tpu_custom_call.1} parent=1 // pred_region
      %s89 = ssub.s32 512, 512
      %90 = vsyncadd [#allocation12], %s89
      %s91 = sshll.u32 [#allocation11], 4
      %s92 = int_to_ptr.vmem [resolvable:$true] %s91
      %97 = dma.hbm_to_vmem [thread:$0]  %s6, 512, %s92, [#allocation12], 128, 128, 8
    $region29: #{tpu_custom_call.1} parent=1 // pred_fallthru
      _
    // Predicated region
    $region30: #{tpu_custom_call.1} parent=1 // pred_check
      _
    $region31: #{tpu_custom_call.1} parent=1 // pred_check_branch
      %99 = sbr.rel (0) target = $region33
    $region32: #{tpu_custom_call.1} parent=1 // pred_region
      _
    $region33: #{tpu_custom_call.1} parent=1 // pred_fallthru
      _
    // Predicated region
    $region34: #{tpu_custom_call.1} parent=1 // pred_check
      _
    $region35: #{tpu_custom_call.1} parent=1 // pred_check_branch
      %101 = sbr.rel (0) target = $region37
    $region36: #{tpu_custom_call.1} parent=1 // pred_region
      %s103 = ssub.s32 512, 512
      %104 = vsyncadd [#allocation12], %s103
      %s105 = sshll.u32 [#allocation13], 4
      %s106 = int_to_ptr.vmem [resolvable:$true] %s105
      %111 = dma.hbm_to_vmem [thread:$0]  %s8, 512, %s106, [#allocation12], 128, 128, 8
    $region37: #{tpu_custom_call.1} parent=1 // pred_fallthru
      _
    // Predicated region
    $region38: #{tpu_custom_call.1} parent=1 // pred_check
      _
    $region39: #{tpu_custom_call.1} parent=1 // pred_check_branch
      %113 = sbr.rel (0) target = $region41
    $region40: #{tpu_custom_call.1} parent=1 // pred_region
      _
    $region41: #{tpu_custom_call.1} parent=1 // pred_fallthru
      _
    // Predicated region
    $region42: #{tpu_custom_call.1} parent=1 // pred_check
      _
    $region43: #{tpu_custom_call.1} parent=1 // pred_check_branch
      %115 = sbr.rel (0) target = $region45
    $region44: #{tpu_custom_call.1} parent=1 // pred_region
      %116 = dma.done [#allocation3], 256
    $region45: #{tpu_custom_call.1} parent=1 // pred_fallthru
      _
    // Predicated region
    $region46: #{tpu_custom_call.1} parent=1 // pred_check
      _
    $region47: #{tpu_custom_call.1} parent=1 // pred_check_branch
      %118 = sbr.rel (0) target = $region49
    $region48: #{tpu_custom_call.1} parent=1 // pred_region
      %119 = dma.done [#allocation6], 1024
    $region49: #{tpu_custom_call.1} parent=1 // pred_fallthru
      _
    // Predicated region
    $region50: #{tpu_custom_call.1} parent=1 // pred_check
      _
    $region51: #{tpu_custom_call.1} parent=1 // pred_check_branch
      %121 = sbr.rel (0) target = $region53
    $region52: #{tpu_custom_call.1} parent=1 // pred_region
      %122 = dma.done [#allocation6], 512
    $region53: #{tpu_custom_call.1} parent=1 // pred_fallthru
      _
    // Predicated region
    $region54: #{tpu_custom_call.1} parent=1 // pred_check
      _
    $region55: #{tpu_custom_call.1} parent=1 // pred_check_branch
      %124 = sbr.rel (0) target = $region57
    $region56: #{tpu_custom_call.1} parent=1 // pred_region
      %125 = dma.done [#allocation9], 256
    $region57: #{tpu_custom_call.1} parent=1 // pred_fallthru
      _
    // Predicated region
    $region58: #{tpu_custom_call.1} parent=1 // pred_check
      _
    $region59: #{tpu_custom_call.1} parent=1 // pred_check_branch
      %127 = sbr.rel (0) target = $region61
    $region60: #{tpu_custom_call.1} parent=1 // pred_region
      %128 = dma.done [#allocation9], 512
    $region61: #{tpu_custom_call.1} parent=1 // pred_fallthru
      _
    // Predicated region
    $region62: #{tpu_custom_call.1} parent=1 // pred_check
      _
    $region63: #{tpu_custom_call.1} parent=1 // pred_check_branch
      %130 = sbr.rel (0) target = $region65
    $region64: #{tpu_custom_call.1} parent=1 // pred_region
      %131 = dma.done [#allocation12], 512
    $region65: #{tpu_custom_call.1} parent=1 // pred_fallthru
      _
    // Predicated region
    $region66: #{tpu_custom_call.1} parent=1 // pred_check
      _
    $region67: #{tpu_custom_call.1} parent=1 // pred_check_branch
      %133 = sbr.rel (0) target = $region69
    $region68: #{tpu_custom_call.1} parent=1 // pred_region
      %134 = dma.done [#allocation12], 512
    $region69: #{tpu_custom_call.1} parent=1 // pred_fallthru
      _
    %v135 = vld [vmem:[#allocation2] sm:$0xff]
    %v136 = vld [vmem:[#allocation2 + $0x8] sm:$0xff]
    %v137 = vld [vmem:[#allocation8] sm:$0xff]
    %v138 = vld [vmem:[#allocation8 + $0x8] sm:$0xff]
    %v139 = vld [vmem:[%s7] sm:$0x1]
    %v141 = vlaneseq
    %v142 = vshrl.u32 %v141, 7
    %v143 = vsub.s32 0, %v142
    %v144 = vrot.slane %v139, %v143
    %vm146 = vcmask 130048
    %v148 = vsel %vm146, %v135, 0
    %v151 = vsel %vm146, %v136, 0
    %153 = vmatprep.subr.mxu0 0.0
    %154 = vmatpush1.msra.mxu0 %v137
    %155 = vmatprep.subr.mxu0 0.0
    %156 = vmatpush1.msra.mxu0 %v138
    %157 = vmatprep.subr.mxu0 0.0
    %158 = vmatpush1.msra.mxu0 0.0
    %159 = vmatprep.subr.mxu0 0.0
    %160 = vmatpush1.msra.mxu0 0.0
    %161 = vmatprep.subr.mxu0 0.0
    %162 = vmatpush1.msra.mxu0 0.0
    %163 = vmatprep.subr.mxu0 0.0
    %164 = vmatpush1.msra.mxu0 0.0
    %165 = vmatprep.subr.mxu0 0.0
    %166 = vmatpush1.msra.mxu0 0.0
    %167 = vmatprep.subr.mxu0 0.0
    %168 = vmatpush1.msra.mxu0 0.0
    %169 = vmatprep.subr.mxu0 0.0
    %170 = vmatpush1.msra.mxu0 0.0
    %171 = vmatprep.subr.mxu0 0.0
    %172 = vmatpush1.msra.mxu0 0.0
    %173 = vmatprep.subr.mxu0 0.0
    %174 = vmatpush1.msra.mxu0 0.0
    %175 = vmatprep.subr.mxu0 0.0
    %176 = vmatpush1.msra.mxu0 0.0
    %177 = vmatprep.subr.mxu0 0.0
    %178 = vmatpush1.msra.mxu0 0.0
    %179 = vmatprep.subr.mxu0 0.0
    %180 = vmatpush1.msra.mxu0 0.0
    %181 = vmatprep.subr.mxu0 0.0
    %182 = vmatpush1.msra.mxu0 0.0
    %183 = vmatprep.subr.mxu0 0.0
    %184 = vmatpush1.msra.mxu0 0.0
    %185 = vmatprep.subr.mxu0 0.0
    %186 = vmatpush1.msra.mxu0 0.0
    %187 = vmatprep.subr.mxu0 0.0
    %188 = vmatpush1.msra.mxu0 0.0
    %189 = vmatprep.subr.mxu0 0.0
    %190 = vmatpush1.msra.mxu0 0.0
    %191 = vmatprep.subr.mxu0 0.0
    %192 = vmatpush1.msra.mxu0 0.0
    %193 = vmatprep.subr.mxu0 0.0
    %194 = vmatpush1.msra.mxu0 0.0
    %195 = vmatprep.subr.mxu0 0.0
    %196 = vmatpush1.msra.mxu0 0.0
    %197 = vmatprep.subr.mxu0 0.0
    %198 = vmatpush1.msra.mxu0 0.0
    %199 = vmatprep.subr.mxu0 0.0
    %200 = vmatpush1.msra.mxu0 0.0
    %201 = vmatprep.subr.mxu0 0.0
    %202 = vmatpush1.msra.mxu0 0.0
    %203 = vmatprep.subr.mxu0 0.0
    %204 = vmatpush1.msra.mxu0 0.0
    %205 = vmatprep.subr.mxu0 0.0
    %206 = vmatpush1.msra.mxu0 0.0
    %207 = vmatprep.subr.mxu0 0.0
    %208 = vmatpush1.msra.mxu0 0.0
    %209 = vmatprep.subr.mxu0 0.0
    %210 = vmatpush1.msra.mxu0 0.0
    %211 = vmatprep.subr.mxu0 0.0
    %212 = vmatpush1.msra.mxu0 0.0
    %213 = vmatprep.subr.mxu0 0.0
    %214 = vmatpush1.msra.mxu0 0.0
    %215 = vmatprep.subr.mxu0 0.0
    %216 = vmatpush1.msra.mxu0 0.0
    %217 = vmatprep.mubr.f32.mxu0 0.0
    %218 = vmatmul.mubr.f32.gmra.mrb[0].mxu0 %v148
    %v219 = vpop.f32.mrb[0].mxu0
    %v220 = vadd.f32 %v144, %v219
    %v221 = vpop.f32.mrb[0].mxu0
    %222 = vmatprep.mubr.f32.mxu0 0.0
    %223 = vmatmul.mubr.f32.gmra.mrb[0].mxu0 %v151
    %v224 = vpop.f32.mrb[0].mxu0
    %v225 = vadd.f32 %v144, %v224
    %v226 = vpop.f32.mrb[0].mxu0
    %227 = vdwg.mxu0
    %v228 = vld [vmem:[#allocation7] sm:$0xff]
    %v229 = vld [vmem:[#allocation7 + $0x8] sm:$0xff]
    %v230 = vld [vmem:[#allocation7 + $0x10] sm:$0xff]
    %v231 = vld [vmem:[#allocation7 + $0x18] sm:$0xff]
    %v232 = vld [vmem:[%s3] sm:$0x1]
    %v234 = vlaneseq
    %v235 = vshrl.u32 %v234, 7
    %v236 = vsub.s32 0, %v235
    %v237 = vrot.slane %v232, %v236
    %v239 = vld [vmem:[#allocation10] sm:$0xff]
    %v240 = vld [vmem:[#allocation10 + $0x8] sm:$0xff]
    %v241 = vld [vmem:[#allocation10 + $0x10] sm:$0xff]
    %v242 = vld [vmem:[#allocation10 + $0x18] sm:$0xff]
    %v243 = vld [vmem:[#allocation11] sm:$0xff]
    %v244 = vld [vmem:[#allocation11 + $0x8] sm:$0xff]
    %v245 = vld [vmem:[#allocation11 + $0x10] sm:$0xff]
    %v246 = vld [vmem:[#allocation11 + $0x18] sm:$0xff]
    %v247 = vld [vmem:[#allocation5] sm:$0xf]
    %v248 = vld [vmem:[#allocation5 + $0x4] sm:$0xf]
    %vm249 = vcmask 261120
    %v251 = vsel %vm249, 0.0, 0
    %253 = vmatprep.subr.mxu0 0.0
    %254 = vmatpush1.msra.mxu0 %v228
    %255 = vmatprep.subr.mxu0 0.0
    %256 = vmatpush1.msra.mxu0 %v229
    %257 = vmatprep.subr.mxu0 0.0
    %258 = vmatpush1.msra.mxu0 %v230
    %259 = vmatprep.subr.mxu0 0.0
    %260 = vmatpush1.msra.mxu0 %v231
    %261 = vmatprep.subr.mxu0 0.0
    %262 = vmatpush1.msra.mxu0 0.0
    %263 = vmatprep.subr.mxu0 0.0
    %264 = vmatpush1.msra.mxu0 0.0
    %265 = vmatprep.subr.mxu0 0.0
    %266 = vmatpush1.msra.mxu0 0.0
    %267 = vmatprep.subr.mxu0 0.0
    %268 = vmatpush1.msra.mxu0 0.0
    %269 = vmatprep.subr.mxu0 0.0
    %270 = vmatpush1.msra.mxu0 0.0
    %271 = vmatprep.subr.mxu0 0.0
    %272 = vmatpush1.msra.mxu0 0.0
    %273 = vmatprep.subr.mxu0 0.0
    %274 = vmatpush1.msra.mxu0 0.0
    %275 = vmatprep.subr.mxu0 0.0
    %276 = vmatpush1.msra.mxu0 0.0
    %277 = vmatprep.subr.mxu0 0.0
    %278 = vmatpush1.msra.mxu0 0.0
    %279 = vmatprep.subr.mxu0 0.0
    %280 = vmatpush1.msra.mxu0 0.0
    %281 = vmatprep.subr.mxu0 0.0
    %282 = vmatpush1.msra.mxu0 0.0
    %283 = vmatprep.subr.mxu0 0.0
    %284 = vmatpush1.msra.mxu0 0.0
    %285 = vmatprep.subr.mxu0 0.0
    %286 = vmatpush1.msra.mxu0 0.0
    %287 = vmatprep.subr.mxu0 0.0
    %288 = vmatpush1.msra.mxu0 0.0
    %289 = vmatprep.subr.mxu0 0.0
    %290 = vmatpush1.msra.mxu0 0.0
    %291 = vmatprep.subr.mxu0 0.0
    %292 = vmatpush1.msra.mxu0 0.0
    %293 = vmatprep.subr.mxu0 0.0
    %294 = vmatpush1.msra.mxu0 0.0
    %295 = vmatprep.subr.mxu0 0.0
    %296 = vmatpush1.msra.mxu0 0.0
    %297 = vmatprep.subr.mxu0 0.0
    %298 = vmatpush1.msra.mxu0 0.0
    %299 = vmatprep.subr.mxu0 0.0
    %300 = vmatpush1.msra.mxu0 0.0
    %301 = vmatprep.subr.mxu0 0.0
    %302 = vmatpush1.msra.mxu0 0.0
    %303 = vmatprep.subr.mxu0 0.0
    %304 = vmatpush1.msra.mxu0 0.0
    %305 = vmatprep.subr.mxu0 0.0
    %306 = vmatpush1.msra.mxu0 0.0
    %307 = vmatprep.subr.mxu0 0.0
    %308 = vmatpush1.msra.mxu0 0.0
    %309 = vmatprep.subr.mxu0 0.0
    %310 = vmatpush1.msra.mxu0 0.0
    %311 = vmatprep.subr.mxu0 0.0
    %312 = vmatpush1.msra.mxu0 0.0
    %313 = vmatprep.subr.mxu0 0.0
    %314 = vmatpush1.msra.mxu0 0.0
    %315 = vmatprep.subr.mxu0 0.0
    %316 = vmatpush1.msra.mxu0 0.0
    %317 = vmatprep.mubr.f32.mxu0 0.0
    %318 = vmatmul.mubr.f32.gmra.mrb[0].mxu0 %v251
    %v319 = vpop.f32.mrb[0].mxu0
    %v320 = vadd.f32 %v237, %v319
    %v321 = vpop.f32.mrb[0].mxu0
    %322 = vdwg.mxu0
    %v325 = vunpack.c.l.s4 1966171168
    %v326 = vunpack.c.0.s8 %v325
    %v327 = vlaneseq
    %v328 = vshrl.u32 %v327, 7
    %v329 = vsub.s32 %v326, %v328
    %v330 = vrot.slane %v320, %v329
    %v331 = vcombine.high %v330, %v330
    %v333 = vunpack.c.l.s4 1966171168
    %v334 = vunpack.c.0.s8 %v333
    %v335 = vlaneseq
    %v336 = vshrl.u32 %v335, 7
    %v337 = vsub.s32 %v334, %v336
    %v338 = vrot.slane %v330, %v337
    %v340 = vunpack.c.l.s4 1966171168
    %v341 = vunpack.c.0.s8 %v340
    %v342 = vlaneseq
    %v343 = vshrl.u32 %v342, 7
    %v344 = vsub.s32 %v341, %v343
    %v345 = vrot.slane %v331, %v344
    %v346 = vlaneseq
    %v347 = vshrl.u32 %v346, 7
    %v348 = vsub.s32 0, %v347
    %v349 = vrot.slane %v338, %v348
    %v350 = vlaneseq
    %v351 = vshrl.u32 %v350, 7
    %v352 = vsub.s32 0, %v351
    %v353 = vrot.slane %v345, %v352
    %v356 = vmul.f32 %v247, %v349
    %v357 = vmul.f32 %v248, %v353
    %vm358 = vcmask 257024
    %v359 = vsel %vm358, %v356, 0.0
    %360 = vadd.xlane.f32.xlu0 %v359
    %v361 = vpop.xlane.xlu0 %360
    %v362 = vsel %vm358, %v357, 0.0
    %363 = vadd.xlane.f32.xlu0 %v362
    %v364 = vpop.xlane.xlu0 %363
    %v367 = vlaneseq
    %v368 = vand.u32 %v367, 127
    %v369 = vlaneseq
    %v370 = vshrl.u32 %v369, 7
    %v371 = vsub.s32 %v368, %v370
    %v372 = vrot.slane %v361, %v371
    %v373 = vlaneseq
    %v374 = vshrl.u32 %v373, 7
    %v375 = vsub.s32 %v368, %v374
    %v376 = vrot.slane %v364, %v375
    %vm377 = vcmask 1041409
    %v378 = vsel %vm377, %v376, %v372
    %vm380 = vcmask 25600
    %v381 = vsel %vm380, %v378, -inf
    %382 = vmax.xlane.f32.xlu0 %v381
    %v383 = vpop.xlane.xlu0 %382
    %v385 = vlaneseq
    %v386 = vshrl.u32 %v385, 7
    %v387 = vsub.s32 0, %v386
    %v388 = vrot.slane %v383, %v387
    %v389 = vlaneseq
    %v390 = vshrl.u32 %v389, 7
    %v391 = vsub.s32 1, %v390
    %v392 = vrot.slane %v383, %v391
    %v395 = vsub.f32 %v361, %v388
    %v396 = vsub.f32 %v364, %v392
    %v397 = vmul.f32 %v395, 1.442695
    %v398 = vpow.pop %v397
    %v399 = vmul.f32 %v396, 1.442695
    %v400 = vpow.pop %v399
    %403 = vset.pattern.permute.xlu0 0
    %404 = vperm.xlu0 %403, %v398
    %v405 = vpop.permute.xlu0 %404
    %406 = vset.pattern.permute.xlu0 0
    %407 = vperm.xlu0 %406, %v400
    %v408 = vpop.permute.xlu0 %407
    %v409 = vlaneseq
    %v410 = vshrl.u32 %v409, 7
    %v411 = vsub.s32 %v368, %v410
    %v412 = vrot.slane %v405, %v411
    %v413 = vlaneseq
    %v414 = vshrl.u32 %v413, 7
    %v415 = vsub.s32 %v368, %v414
    %v416 = vrot.slane %v408, %v415
    %v417 = vsel %vm377, %v416, %v412
    %v419 = vsel %vm380, %v417, 0.0
    %420 = vadd.xlane.f32.xlu0 %v419
    %v421 = vpop.xlane.xlu0 %420
    %v423 = vlaneseq
    %v424 = vshrl.u32 %v423, 7
    %v425 = vsub.s32 0, %v424
    %v426 = vrot.slane %v421, %v425
    %v427 = vlaneseq
    %v428 = vshrl.u32 %v427, 7
    %v429 = vsub.s32 1, %v428
    %v430 = vrot.slane %v421, %v429
    %v433 = vrcp.pop %v426
    %v434 = vmul.f32 %v398, %v433
    %v435 = vrcp.pop %v430
    %v436 = vmul.f32 %v400, %v435
    %438 = vset.pattern.permute.xlu0 0
    %439 = vperm.xlu0 %438, %v434
    %v440 = vpop.permute.xlu0 %439
    %443 = vset.pattern.permute.xlu0 0
    %444 = vperm.xlu0 %443, %v436
    %v445 = vpop.permute.xlu0 %444
    %v447 = vmul.f32 %v440, %v247
    %v448 = vmul.f32 %v445, %v248
    %v449 = vsel %vm358, %v447, 0.0
    %v450 = vrot.slane %v449, 4
    %v451 = vadd.f32 %v449, %v450
    %v452 = vrot.slane %v451, 2
    %v453 = vadd.f32 %v451, %v452
    %v454 = vrot.slane %v453, 1
    %v455 = vadd.f32 %v453, %v454
    %v456 = vsel %vm358, %v448, 0.0
    %v457 = vrot.slane %v456, 4
    %v458 = vadd.f32 %v456, %v457
    %v459 = vrot.slane %v458, 2
    %v460 = vadd.f32 %v458, %v459
    %v461 = vrot.slane %v460, 1
    %v462 = vadd.f32 %v460, %v461
    %v465 = vsel %vm377, %v462, %v455
    %v466 = vsel %vm249, %v465, 0
    %468 = vmatprep.subr.mxu0 0.0
    %469 = vmatpush1.msra.mxu0 %v239
    %470 = vmatprep.subr.mxu0 0.0
    %471 = vmatpush1.msra.mxu0 %v240
    %472 = vmatprep.subr.mxu0 0.0
    %473 = vmatpush1.msra.mxu0 %v241
    %474 = vmatprep.subr.mxu0 0.0
    %475 = vmatpush1.msra.mxu0 %v242
    %476 = vmatprep.subr.mxu0 0.0
    %477 = vmatpush1.msra.mxu0 0.0
    %478 = vmatprep.subr.mxu0 0.0
    %479 = vmatpush1.msra.mxu0 0.0
    %480 = vmatprep.subr.mxu0 0.0
    %481 = vmatpush1.msra.mxu0 0.0
    %482 = vmatprep.subr.mxu0 0.0
    %483 = vmatpush1.msra.mxu0 0.0
    %484 = vmatprep.subr.mxu0 0.0
    %485 = vmatpush1.msra.mxu0 0.0
    %486 = vmatprep.subr.mxu0 0.0
    %487 = vmatpush1.msra.mxu0 0.0
    %488 = vmatprep.subr.mxu0 0.0
    %489 = vmatpush1.msra.mxu0 0.0
    %490 = vmatprep.subr.mxu0 0.0
    %491 = vmatpush1.msra.mxu0 0.0
    %492 = vmatprep.subr.mxu0 0.0
    %493 = vmatpush1.msra.mxu0 0.0
    %494 = vmatprep.subr.mxu0 0.0
    %495 = vmatpush1.msra.mxu0 0.0
    %496 = vmatprep.subr.mxu0 0.0
    %497 = vmatpush1.msra.mxu0 0.0
    %498 = vmatprep.subr.mxu0 0.0
    %499 = vmatpush1.msra.mxu0 0.0
    %500 = vmatprep.subr.mxu0 0.0
    %501 = vmatpush1.msra.mxu0 0.0
    %502 = vmatprep.subr.mxu0 0.0
    %503 = vmatpush1.msra.mxu0 0.0
    %504 = vmatprep.subr.mxu0 0.0
    %505 = vmatpush1.msra.mxu0 0.0
    %506 = vmatprep.subr.mxu0 0.0
    %507 = vmatpush1.msra.mxu0 0.0
    %508 = vmatprep.subr.mxu0 0.0
    %509 = vmatpush1.msra.mxu0 0.0
    %510 = vmatprep.subr.mxu0 0.0
    %511 = vmatpush1.msra.mxu0 0.0
    %512 = vmatprep.subr.mxu0 0.0
    %513 = vmatpush1.msra.mxu0 0.0
    %514 = vmatprep.subr.mxu0 0.0
    %515 = vmatpush1.msra.mxu0 0.0
    %516 = vmatprep.subr.mxu0 0.0
    %517 = vmatpush1.msra.mxu0 0.0
    %518 = vmatprep.subr.mxu0 0.0
    %519 = vmatpush1.msra.mxu0 0.0
    %520 = vmatprep.subr.mxu0 0.0
    %521 = vmatpush1.msra.mxu0 0.0
    %522 = vmatprep.subr.mxu0 0.0
    %523 = vmatpush1.msra.mxu0 0.0
    %524 = vmatprep.subr.mxu0 0.0
    %525 = vmatpush1.msra.mxu0 0.0
    %526 = vmatprep.subr.mxu0 0.0
    %527 = vmatpush1.msra.mxu0 0.0
    %528 = vmatprep.subr.mxu0 0.0
    %529 = vmatpush1.msra.mxu0 0.0
    %530 = vmatprep.subr.mxu0 0.0
    %531 = vmatpush1.msra.mxu0 0.0
    %532 = vmatprep.mubr.f32.mxu0 0.0
    %533 = vmatmul.mubr.f32.gmra.mrb[0].mxu0 %v466
    %v534 = vpop.f32.mrb[0].mxu0
    %v535 = vadd.f32 0.0, %v534
    %v536 = vpop.f32.mrb[0].mxu0
    %537 = vdwg.mxu0
    %v538 = vadd.f32 %v220, %v535
    %539 = vmatprep.subr.mxu0 0.0
    %540 = vmatpush1.msra.mxu0 %v243
    %541 = vmatprep.subr.mxu0 0.0
    %542 = vmatpush1.msra.mxu0 %v244
    %543 = vmatprep.subr.mxu0 0.0
    %544 = vmatpush1.msra.mxu0 %v245
    %545 = vmatprep.subr.mxu0 0.0
    %546 = vmatpush1.msra.mxu0 %v246
    %547 = vmatprep.subr.mxu0 0.0
    %548 = vmatpush1.msra.mxu0 0.0
    %549 = vmatprep.subr.mxu0 0.0
    %550 = vmatpush1.msra.mxu0 0.0
    %551 = vmatprep.subr.mxu0 0.0
    %552 = vmatpush1.msra.mxu0 0.0
    %553 = vmatprep.subr.mxu0 0.0
    %554 = vmatpush1.msra.mxu0 0.0
    %555 = vmatprep.subr.mxu0 0.0
    %556 = vmatpush1.msra.mxu0 0.0
    %557 = vmatprep.subr.mxu0 0.0
    %558 = vmatpush1.msra.mxu0 0.0
    %559 = vmatprep.subr.mxu0 0.0
    %560 = vmatpush1.msra.mxu0 0.0
    %561 = vmatprep.subr.mxu0 0.0
    %562 = vmatpush1.msra.mxu0 0.0
    %563 = vmatprep.subr.mxu0 0.0
    %564 = vmatpush1.msra.mxu0 0.0
    %565 = vmatprep.subr.mxu0 0.0
    %566 = vmatpush1.msra.mxu0 0.0
    %567 = vmatprep.subr.mxu0 0.0
    %568 = vmatpush1.msra.mxu0 0.0
    %569 = vmatprep.subr.mxu0 0.0
    %570 = vmatpush1.msra.mxu0 0.0
    %571 = vmatprep.subr.mxu0 0.0
    %572 = vmatpush1.msra.mxu0 0.0
    %573 = vmatprep.subr.mxu0 0.0
    %574 = vmatpush1.msra.mxu0 0.0
    %575 = vmatprep.subr.mxu0 0.0
    %576 = vmatpush1.msra.mxu0 0.0
    %577 = vmatprep.subr.mxu0 0.0
    %578 = vmatpush1.msra.mxu0 0.0
    %579 = vmatprep.subr.mxu0 0.0
    %580 = vmatpush1.msra.mxu0 0.0
    %581 = vmatprep.subr.mxu0 0.0
    %582 = vmatpush1.msra.mxu0 0.0
    %583 = vmatprep.subr.mxu0 0.0
    %584 = vmatpush1.msra.mxu0 0.0
    %585 = vmatprep.subr.mxu0 0.0
    %586 = vmatpush1.msra.mxu0 0.0
    %587 = vmatprep.subr.mxu0 0.0
    %588 = vmatpush1.msra.mxu0 0.0
    %589 = vmatprep.subr.mxu0 0.0
    %590 = vmatpush1.msra.mxu0 0.0
    %591 = vmatprep.subr.mxu0 0.0
    %592 = vmatpush1.msra.mxu0 0.0
    %593 = vmatprep.subr.mxu0 0.0
    %594 = vmatpush1.msra.mxu0 0.0
    %595 = vmatprep.subr.mxu0 0.0
    %596 = vmatpush1.msra.mxu0 0.0
    %597 = vmatprep.subr.mxu0 0.0
    %598 = vmatpush1.msra.mxu0 0.0
    %599 = vmatprep.subr.mxu0 0.0
    %600 = vmatpush1.msra.mxu0 0.0
    %601 = vmatprep.subr.mxu0 0.0
    %602 = vmatpush1.msra.mxu0 0.0
    %603 = vmatprep.mubr.f32.mxu0 0.0
    %604 = vmatmul.mubr.f32.gmra.mrb[0].mxu0 %v251
    %v605 = vpop.f32.mrb[0].mxu0
    %v606 = vadd.f32 0.0, %v605
    %v607 = vpop.f32.mrb[0].mxu0
    %608 = vdwg.mxu0
    %v609 = vadd.f32 %v538, %v606
    %v610 = vxor.u32 %v609, 2147483648
    %v611 = vmul.f32 %v610, 1.442695
    %v612 = vpow.pop %v611
    %v613 = vadd.f32 %v612, 1.0
    %v614 = vrcp.pop %v613
    %v615 = vmul.f32 1.0, %v614
    %v616 = vtanh.pop %v609
    %v617 = vmul.f32 %v615, 0.0
    %619 = vrot.lane.b32.xlu0 %v616, 64
    %v620 = vpop.permute.xlu0 %619
    %v622 = vmul.f32 %v615, %v620
    %624 = vrot.lane.b32.xlu0 %v622, 32
    %v625 = vpop.permute.xlu0 %624
    %v627 = vadd.f32 %v617, %v625
    %v628 = vtanh.pop %v627
    %630 = vrot.lane.b32.xlu0 %v628, 64
    %v631 = vpop.permute.xlu0 %630
    %v633 = vmul.f32 %v615, %v631
    %v636 = vunpack.c.l.s4 1966171168
    %v637 = vunpack.c.0.s8 %v636
    %v638 = vlaneseq
    %v639 = vshrl.u32 %v638, 7
    %v640 = vsub.s32 %v637, %v639
    %v641 = vrot.slane %v633, %v640
    %v642 = vcombine.high %v641, %v641
    %v644 = vunpack.c.l.s4 1966171168
    %v645 = vunpack.c.0.s8 %v644
    %v646 = vlaneseq
    %v647 = vshrl.u32 %v646, 7
    %v648 = vsub.s32 %v645, %v647
    %v649 = vrot.slane %v641, %v648
    %v651 = vunpack.c.l.s4 1966171168
    %v652 = vunpack.c.0.s8 %v651
    %v653 = vlaneseq
    %v654 = vshrl.u32 %v653, 7
    %v655 = vsub.s32 %v652, %v654
    %v656 = vrot.slane %v642, %v655
    %v657 = vlaneseq
    %v658 = vshrl.u32 %v657, 7
    %v659 = vsub.s32 0, %v658
    %v660 = vrot.slane %v649, %v659
    %v661 = vlaneseq
    %v662 = vshrl.u32 %v661, 7
    %v663 = vsub.s32 0, %v662
    %v664 = vrot.slane %v656, %v663
    %665 = vrot.lane.b32.xlu0 %v660, 32
    %v666 = vpop.permute.xlu0 %665
    %667 = vrot.lane.b32.xlu0 %v664, 32
    %v668 = vpop.permute.xlu0 %667
    %vm671 = vcmask 253952
    %672 = vst.msk [vmem:[#allocation14] sm:$0x1] %vm671, %v666
    %673 = vst.msk [vmem:[#allocation14 + $0x8] sm:$0x1] %vm671, %v668
    %s674 = scalar_lea.vmem [#allocation5], 8
    %v675 = vld [vmem:[%s674] sm:$0xf]
    %v676 = vld [vmem:[%s674 + $0x4] sm:$0xf]
    %677 = vrot.lane.b32.xlu0 %v633, 32
    %v678 = vpop.permute.xlu0 %677
    %v679 = vsel %vm249, %v678, 0
    %681 = vmatprep.subr.mxu0 0.0
    %682 = vmatpush1.msra.mxu0 %v228
    %683 = vmatprep.subr.mxu0 0.0
    %684 = vmatpush1.msra.mxu0 %v229
    %685 = vmatprep.subr.mxu0 0.0
    %686 = vmatpush1.msra.mxu0 %v230
    %687 = vmatprep.subr.mxu0 0.0
    %688 = vmatpush1.msra.mxu0 %v231
    %689 = vmatprep.subr.mxu0 0.0
    %690 = vmatpush1.msra.mxu0 0.0
    %691 = vmatprep.subr.mxu0 0.0
    %692 = vmatpush1.msra.mxu0 0.0
    %693 = vmatprep.subr.mxu0 0.0
    %694 = vmatpush1.msra.mxu0 0.0
    %695 = vmatprep.subr.mxu0 0.0
    %696 = vmatpush1.msra.mxu0 0.0
    %697 = vmatprep.subr.mxu0 0.0
    %698 = vmatpush1.msra.mxu0 0.0
    %699 = vmatprep.subr.mxu0 0.0
    %700 = vmatpush1.msra.mxu0 0.0
    %701 = vmatprep.subr.mxu0 0.0
    %702 = vmatpush1.msra.mxu0 0.0
    %703 = vmatprep.subr.mxu0 0.0
    %704 = vmatpush1.msra.mxu0 0.0
    %705 = vmatprep.subr.mxu0 0.0
    %706 = vmatpush1.msra.mxu0 0.0
    %707 = vmatprep.subr.mxu0 0.0
    %708 = vmatpush1.msra.mxu0 0.0
    %709 = vmatprep.subr.mxu0 0.0
    %710 = vmatpush1.msra.mxu0 0.0
    %711 = vmatprep.subr.mxu0 0.0
    %712 = vmatpush1.msra.mxu0 0.0
    %713 = vmatprep.subr.mxu0 0.0
    %714 = vmatpush1.msra.mxu0 0.0
    %715 = vmatprep.subr.mxu0 0.0
    %716 = vmatpush1.msra.mxu0 0.0
    %717 = vmatprep.subr.mxu0 0.0
    %718 = vmatpush1.msra.mxu0 0.0
    %719 = vmatprep.subr.mxu0 0.0
    %720 = vmatpush1.msra.mxu0 0.0
    %721 = vmatprep.subr.mxu0 0.0
    %722 = vmatpush1.msra.mxu0 0.0
    %723 = vmatprep.subr.mxu0 0.0
    %724 = vmatpush1.msra.mxu0 0.0
    %725 = vmatprep.subr.mxu0 0.0
    %726 = vmatpush1.msra.mxu0 0.0
    %727 = vmatprep.subr.mxu0 0.0
    %728 = vmatpush1.msra.mxu0 0.0
    %729 = vmatprep.subr.mxu0 0.0
    %730 = vmatpush1.msra.mxu0 0.0
    %731 = vmatprep.subr.mxu0 0.0
    %732 = vmatpush1.msra.mxu0 0.0
    %733 = vmatprep.subr.mxu0 0.0
    %734 = vmatpush1.msra.mxu0 0.0
    %735 = vmatprep.subr.mxu0 0.0
    %736 = vmatpush1.msra.mxu0 0.0
    %737 = vmatprep.subr.mxu0 0.0
    %738 = vmatpush1.msra.mxu0 0.0
    %739 = vmatprep.subr.mxu0 0.0
    %740 = vmatpush1.msra.mxu0 0.0
    %741 = vmatprep.subr.mxu0 0.0
    %742 = vmatpush1.msra.mxu0 0.0
    %743 = vmatprep.subr.mxu0 0.0
    %744 = vmatpush1.msra.mxu0 0.0
    %745 = vmatprep.mubr.f32.mxu0 0.0
    %746 = vmatmul.mubr.f32.gmra.mrb[0].mxu0 %v679
    %v747 = vpop.f32.mrb[0].mxu0
    %v748 = vadd.f32 %v237, %v747
    %v749 = vpop.f32.mrb[0].mxu0
    %750 = vdwg.mxu0
    %v753 = vunpack.c.l.s4 1966171168
    %v754 = vunpack.c.0.s8 %v753
    %v755 = vlaneseq
    %v756 = vshrl.u32 %v755, 7
    %v757 = vsub.s32 %v754, %v756
    %v758 = vrot.slane %v748, %v757
    %v759 = vcombine.high %v758, %v758
    %v761 = vunpack.c.l.s4 1966171168
    %v762 = vunpack.c.0.s8 %v761
    %v763 = vlaneseq
    %v764 = vshrl.u32 %v763, 7
    %v765 = vsub.s32 %v762, %v764
    %v766 = vrot.slane %v758, %v765
    %v768 = vunpack.c.l.s4 1966171168
    %v769 = vunpack.c.0.s8 %v768
    %v770 = vlaneseq
    %v771 = vshrl.u32 %v770, 7
    %v772 = vsub.s32 %v769, %v771
    %v773 = vrot.slane %v759, %v772
    %v774 = vlaneseq
    %v775 = vshrl.u32 %v774, 7
    %v776 = vsub.s32 0, %v775
    %v777 = vrot.slane %v766, %v776
    %v778 = vlaneseq
    %v779 = vshrl.u32 %v778, 7
    %v780 = vsub.s32 0, %v779
    %v781 = vrot.slane %v773, %v780
    %v784 = vmul.f32 %v675, %v777
    %v785 = vmul.f32 %v676, %v781
    %v786 = vsel %vm358, %v784, 0.0
    %787 = vadd.xlane.f32.xlu0 %v786
    %v788 = vpop.xlane.xlu0 %787
    %v789 = vsel %vm358, %v785, 0.0
    %790 = vadd.xlane.f32.xlu0 %v789
    %v791 = vpop.xlane.xlu0 %790
    %v794 = vlaneseq
    %v795 = vshrl.u32 %v794, 7
    %v796 = vsub.s32 %v368, %v795
    %v797 = vrot.slane %v788, %v796
    %v798 = vlaneseq
    %v799 = vshrl.u32 %v798, 7
    %v800 = vsub.s32 %v368, %v799
    %v801 = vrot.slane %v791, %v800
    %v802 = vsel %vm377, %v801, %v797
    %v804 = vsel %vm380, %v802, -inf
    %805 = vmax.xlane.f32.xlu0 %v804
    %v806 = vpop.xlane.xlu0 %805
    %v808 = vlaneseq
    %v809 = vshrl.u32 %v808, 7
    %v810 = vsub.s32 0, %v809
    %v811 = vrot.slane %v806, %v810
    %v812 = vlaneseq
    %v813 = vshrl.u32 %v812, 7
    %v814 = vsub.s32 1, %v813
    %v815 = vrot.slane %v806, %v814
    %v818 = vsub.f32 %v788, %v811
    %v819 = vsub.f32 %v791, %v815
    %v820 = vmul.f32 %v818, 1.442695
    %v821 = vpow.pop %v820
    %v822 = vmul.f32 %v819, 1.442695
    %v823 = vpow.pop %v822
    %826 = vset.pattern.permute.xlu0 0
    %827 = vperm.xlu0 %826, %v821
    %v828 = vpop.permute.xlu0 %827
    %829 = vset.pattern.permute.xlu0 0
    %830 = vperm.xlu0 %829, %v823
    %v831 = vpop.permute.xlu0 %830
    %v832 = vlaneseq
    %v833 = vshrl.u32 %v832, 7
    %v834 = vsub.s32 %v368, %v833
    %v835 = vrot.slane %v828, %v834
    %v836 = vlaneseq
    %v837 = vshrl.u32 %v836, 7
    %v838 = vsub.s32 %v368, %v837
    %v839 = vrot.slane %v831, %v838
    %v840 = vsel %vm377, %v839, %v835
    %v842 = vsel %vm380, %v840, 0.0
    %843 = vadd.xlane.f32.xlu0 %v842
    %v844 = vpop.xlane.xlu0 %843
    %v846 = vlaneseq
    %v847 = vshrl.u32 %v846, 7
    %v848 = vsub.s32 0, %v847
    %v849 = vrot.slane %v844, %v848
    %v850 = vlaneseq
    %v851 = vshrl.u32 %v850, 7
    %v852 = vsub.s32 1, %v851
    %v853 = vrot.slane %v844, %v852
    %v856 = vrcp.pop %v849
    %v857 = vmul.f32 %v821, %v856
    %v858 = vrcp.pop %v853
    %v859 = vmul.f32 %v823, %v858
    %861 = vset.pattern.permute.xlu0 0
    %862 = vperm.xlu0 %861, %v857
    %v863 = vpop.permute.xlu0 %862
    %866 = vset.pattern.permute.xlu0 0
    %867 = vperm.xlu0 %866, %v859
    %v868 = vpop.permute.xlu0 %867
    %v870 = vmul.f32 %v863, %v675
    %v871 = vmul.f32 %v868, %v676
    %v872 = vsel %vm358, %v870, 0.0
    %v873 = vrot.slane %v872, 4
    %v874 = vadd.f32 %v872, %v873
    %v875 = vrot.slane %v874, 2
    %v876 = vadd.f32 %v874, %v875
    %v877 = vrot.slane %v876, 1
    %v878 = vadd.f32 %v876, %v877
    %v879 = vsel %vm358, %v871, 0.0
    %v880 = vrot.slane %v879, 4
    %v881 = vadd.f32 %v879, %v880
    %v882 = vrot.slane %v881, 2
    %v883 = vadd.f32 %v881, %v882
    %v884 = vrot.slane %v883, 1
    %v885 = vadd.f32 %v883, %v884
    %v888 = vsel %vm377, %v885, %v878
    %v889 = vsel %vm249, %v888, 0
    %891 = vmatprep.subr.mxu0 0.0
    %892 = vmatpush1.msra.mxu0 %v239
    %893 = vmatprep.subr.mxu0 0.0
    %894 = vmatpush1.msra.mxu0 %v240
    %895 = vmatprep.subr.mxu0 0.0
    %896 = vmatpush1.msra.mxu0 %v241
    %897 = vmatprep.subr.mxu0 0.0
    %898 = vmatpush1.msra.mxu0 %v242
    %899 = vmatprep.subr.mxu0 0.0
    %900 = vmatpush1.msra.mxu0 0.0
    %901 = vmatprep.subr.mxu0 0.0
    %902 = vmatpush1.msra.mxu0 0.0
    %903 = vmatprep.subr.mxu0 0.0
    %904 = vmatpush1.msra.mxu0 0.0
    %905 = vmatprep.subr.mxu0 0.0
    %906 = vmatpush1.msra.mxu0 0.0
    %907 = vmatprep.subr.mxu0 0.0
    %908 = vmatpush1.msra.mxu0 0.0
    %909 = vmatprep.subr.mxu0 0.0
    %910 = vmatpush1.msra.mxu0 0.0
    %911 = vmatprep.subr.mxu0 0.0
    %912 = vmatpush1.msra.mxu0 0.0
    %913 = vmatprep.subr.mxu0 0.0
    %914 = vmatpush1.msra.mxu0 0.0
    %915 = vmatprep.subr.mxu0 0.0
    %916 = vmatpush1.msra.mxu0 0.0
    %917 = vmatprep.subr.mxu0 0.0
    %918 = vmatpush1.msra.mxu0 0.0
    %919 = vmatprep.subr.mxu0 0.0
    %920 = vmatpush1.msra.mxu0 0.0
    %921 = vmatprep.subr.mxu0 0.0
    %922 = vmatpush1.msra.mxu0 0.0
    %923 = vmatprep.subr.mxu0 0.0
    %924 = vmatpush1.msra.mxu0 0.0
    %925 = vmatprep.subr.mxu0 0.0
    %926 = vmatpush1.msra.mxu0 0.0
    %927 = vmatprep.subr.mxu0 0.0
    %928 = vmatpush1.msra.mxu0 0.0
    %929 = vmatprep.subr.mxu0 0.0
    %930 = vmatpush1.msra.mxu0 0.0
    %931 = vmatprep.subr.mxu0 0.0
    %932 = vmatpush1.msra.mxu0 0.0
    %933 = vmatprep.subr.mxu0 0.0
    %934 = vmatpush1.msra.mxu0 0.0
    %935 = vmatprep.subr.mxu0 0.0
    %936 = vmatpush1.msra.mxu0 0.0
    %937 = vmatprep.subr.mxu0 0.0
    %938 = vmatpush1.msra.mxu0 0.0
    %939 = vmatprep.subr.mxu0 0.0
    %940 = vmatpush1.msra.mxu0 0.0
    %941 = vmatprep.subr.mxu0 0.0
    %942 = vmatpush1.msra.mxu0 0.0
    %943 = vmatprep.subr.mxu0 0.0
    %944 = vmatpush1.msra.mxu0 0.0
    %945 = vmatprep.subr.mxu0 0.0
    %946 = vmatpush1.msra.mxu0 0.0
    %947 = vmatprep.subr.mxu0 0.0
    %948 = vmatpush1.msra.mxu0 0.0
    %949 = vmatprep.subr.mxu0 0.0
    %950 = vmatpush1.msra.mxu0 0.0
    %951 = vmatprep.subr.mxu0 0.0
    %952 = vmatpush1.msra.mxu0 0.0
    %953 = vmatprep.subr.mxu0 0.0
    %954 = vmatpush1.msra.mxu0 0.0
    %955 = vmatprep.mubr.f32.mxu0 0.0
    %956 = vmatmul.mubr.f32.gmra.mrb[0].mxu0 %v889
    %v957 = vpop.f32.mrb[0].mxu0
    %v958 = vadd.f32 0.0, %v957
    %v959 = vpop.f32.mrb[0].mxu0
    %960 = vdwg.mxu0
    %v962 = vrot.slane %v958, 6
    %v964 = vadd.f32 %v220, %v962
    %965 = vmatprep.subr.mxu0 0.0
    %966 = vmatpush1.msra.mxu0 %v243
    %967 = vmatprep.subr.mxu0 0.0
    %968 = vmatpush1.msra.mxu0 %v244
    %969 = vmatprep.subr.mxu0 0.0
    %970 = vmatpush1.msra.mxu0 %v245
    %971 = vmatprep.subr.mxu0 0.0
    %972 = vmatpush1.msra.mxu0 %v246
    %973 = vmatprep.subr.mxu0 0.0
    %974 = vmatpush1.msra.mxu0 0.0
    %975 = vmatprep.subr.mxu0 0.0
    %976 = vmatpush1.msra.mxu0 0.0
    %977 = vmatprep.subr.mxu0 0.0
    %978 = vmatpush1.msra.mxu0 0.0
    %979 = vmatprep.subr.mxu0 0.0
    %980 = vmatpush1.msra.mxu0 0.0
    %981 = vmatprep.subr.mxu0 0.0
    %982 = vmatpush1.msra.mxu0 0.0
    %983 = vmatprep.subr.mxu0 0.0
    %984 = vmatpush1.msra.mxu0 0.0
    %985 = vmatprep.subr.mxu0 0.0
    %986 = vmatpush1.msra.mxu0 0.0
    %987 = vmatprep.subr.mxu0 0.0
    %988 = vmatpush1.msra.mxu0 0.0
    %989 = vmatprep.subr.mxu0 0.0
    %990 = vmatpush1.msra.mxu0 0.0
    %991 = vmatprep.subr.mxu0 0.0
    %992 = vmatpush1.msra.mxu0 0.0
    %993 = vmatprep.subr.mxu0 0.0
    %994 = vmatpush1.msra.mxu0 0.0
    %995 = vmatprep.subr.mxu0 0.0
    %996 = vmatpush1.msra.mxu0 0.0
    %997 = vmatprep.subr.mxu0 0.0
    %998 = vmatpush1.msra.mxu0 0.0
    %999 = vmatprep.subr.mxu0 0.0
    %1000 = vmatpush1.msra.mxu0 0.0
    %1001 = vmatprep.subr.mxu0 0.0
    %1002 = vmatpush1.msra.mxu0 0.0
    %1003 = vmatprep.subr.mxu0 0.0
    %1004 = vmatpush1.msra.mxu0 0.0
    %1005 = vmatprep.subr.mxu0 0.0
    %1006 = vmatpush1.msra.mxu0 0.0
    %1007 = vmatprep.subr.mxu0 0.0
    %1008 = vmatpush1.msra.mxu0 0.0
    %1009 = vmatprep.subr.mxu0 0.0
    %1010 = vmatpush1.msra.mxu0 0.0
    %1011 = vmatprep.subr.mxu0 0.0
    %1012 = vmatpush1.msra.mxu0 0.0
    %1013 = vmatprep.subr.mxu0 0.0
    %1014 = vmatpush1.msra.mxu0 0.0
    %1015 = vmatprep.subr.mxu0 0.0
    %1016 = vmatpush1.msra.mxu0 0.0
    %1017 = vmatprep.subr.mxu0 0.0
    %1018 = vmatpush1.msra.mxu0 0.0
    %1019 = vmatprep.subr.mxu0 0.0
    %1020 = vmatpush1.msra.mxu0 0.0
    %1021 = vmatprep.subr.mxu0 0.0
    %1022 = vmatpush1.msra.mxu0 0.0
    %1023 = vmatprep.subr.mxu0 0.0
    %1024 = vmatpush1.msra.mxu0 0.0
    %1025 = vmatprep.subr.mxu0 0.0
    %1026 = vmatpush1.msra.mxu0 0.0
    %1027 = vmatprep.subr.mxu0 0.0
    %1028 = vmatpush1.msra.mxu0 0.0
    %1029 = vmatprep.mubr.f32.mxu0 0.0
    %1030 = vmatmul.mubr.f32.gmra.mrb[0].mxu0 %v679
    %v1031 = vpop.f32.mrb[0].mxu0
    %v1032 = vadd.f32 0.0, %v1031
    %v1033 = vpop.f32.mrb[0].mxu0
    %1034 = vdwg.mxu0
    %v1036 = vrot.slane %v1032, 6
    %v1038 = vadd.f32 %v964, %v1036
    %v1039 = vxor.u32 %v1038, 2147483648
    %v1040 = vmul.f32 %v1039, 1.442695
    %v1041 = vpow.pop %v1040
    %v1042 = vadd.f32 %v1041, 1.0
    %v1043 = vrcp.pop %v1042
    %v1044 = vmul.f32 1.0, %v1043
    %v1045 = vtanh.pop %v1038
    %v1047 = vrot.slane %v627, 6
    %v1049 = vmul.f32 %v1044, %v1047
    %1051 = vrot.lane.b32.xlu0 %v1045, 64
    %v1052 = vpop.permute.xlu0 %1051
    %v1054 = vmul.f32 %v1044, %v1052
    %1056 = vrot.lane.b32.xlu0 %v1054, 32
    %v1057 = vpop.permute.xlu0 %1056
    %v1059 = vadd.f32 %v1049, %v1057
    %v1060 = vtanh.pop %v1059
    %1062 = vrot.lane.b32.xlu0 %v1060, 64
    %v1063 = vpop.permute.xlu0 %1062
    %v1065 = vmul.f32 %v1044, %v1063
    %v1068 = vunpack.c.l.s4 1966171168
    %v1069 = vunpack.c.0.s8 %v1068
    %v1070 = vlaneseq
    %v1071 = vshrl.u32 %v1070, 7
    %v1072 = vsub.s32 %v1069, %v1071
    %v1073 = vrot.slane %v1065, %v1072
    %v1074 = vcombine.high %v1073, %v1073
    %v1076 = vunpack.c.l.s4 1966171168
    %v1077 = vunpack.c.0.s8 %v1076
    %v1078 = vlaneseq
    %v1079 = vshrl.u32 %v1078, 7
    %v1080 = vsub.s32 %v1077, %v1079
    %v1081 = vrot.slane %v1073, %v1080
    %v1083 = vunpack.c.l.s4 1966171168
    %v1084 = vunpack.c.0.s8 %v1083
    %v1085 = vlaneseq
    %v1086 = vshrl.u32 %v1085, 7
    %v1087 = vsub.s32 %v1084, %v1086
    %v1088 = vrot.slane %v1074, %v1087
    %v1089 = vcombine.high %v1081, %v1081
    %v1090 = vcombine.high %v1088, %v1088
    %v1091 = vlaneseq
    %v1092 = vshrl.u32 %v1091, 7
    %v1093 = vsub.s32 0, %v1092
    %v1094 = vrot.slane %v1089, %v1093
    %v1095 = vlaneseq
    %v1096 = vshrl.u32 %v1095, 7
    %v1097 = vsub.s32 0, %v1096
    %v1098 = vrot.slane %v1090, %v1097
    %1099 = vrot.lane.b32.xlu0 %v1094, 32
    %v1100 = vpop.permute.xlu0 %1099
    %1101 = vrot.lane.b32.xlu0 %v1098, 32
    %v1102 = vpop.permute.xlu0 %1101
    %1105 = vst.msk [vmem:[#allocation14 + $0x1] sm:$0x1] %vm671, %v1100
    %1106 = vst.msk [vmem:[#allocation14 + $0x9] sm:$0x1] %vm671, %v1102
    %s1107 = scalar_lea.vmem [#allocation5], 16
    %v1108 = vld [vmem:[%s1107] sm:$0xf]
    %v1109 = vld [vmem:[%s1107 + $0x4] sm:$0xf]
    %v1110 = vrot.slane %v1065, 2
    %1111 = vrot.lane.b32.xlu0 %v1110, 32
    %v1112 = vpop.permute.xlu0 %1111
    %v1113 = vsel %vm249, %v1112, 0
    %1115 = vmatprep.subr.mxu0 0.0
    %1116 = vmatpush1.msra.mxu0 %v228
    %1117 = vmatprep.subr.mxu0 0.0
    %1118 = vmatpush1.msra.mxu0 %v229
    %1119 = vmatprep.subr.mxu0 0.0
    %1120 = vmatpush1.msra.mxu0 %v230
    %1121 = vmatprep.subr.mxu0 0.0
    %1122 = vmatpush1.msra.mxu0 %v231
    %1123 = vmatprep.subr.mxu0 0.0
    %1124 = vmatpush1.msra.mxu0 0.0
    %1125 = vmatprep.subr.mxu0 0.0
    %1126 = vmatpush1.msra.mxu0 0.0
    %1127 = vmatprep.subr.mxu0 0.0
    %1128 = vmatpush1.msra.mxu0 0.0
    %1129 = vmatprep.subr.mxu0 0.0
    %1130 = vmatpush1.msra.mxu0 0.0
    %1131 = vmatprep.subr.mxu0 0.0
    %1132 = vmatpush1.msra.mxu0 0.0
    %1133 = vmatprep.subr.mxu0 0.0
    %1134 = vmatpush1.msra.mxu0 0.0
    %1135 = vmatprep.subr.mxu0 0.0
    %1136 = vmatpush1.msra.mxu0 0.0
    %1137 = vmatprep.subr.mxu0 0.0
    %1138 = vmatpush1.msra.mxu0 0.0
    %1139 = vmatprep.subr.mxu0 0.0
    %1140 = vmatpush1.msra.mxu0 0.0
    %1141 = vmatprep.subr.mxu0 0.0
    %1142 = vmatpush1.msra.mxu0 0.0
    %1143 = vmatprep.subr.mxu0 0.0
    %1144 = vmatpush1.msra.mxu0 0.0
    %1145 = vmatprep.subr.mxu0 0.0
    %1146 = vmatpush1.msra.mxu0 0.0
    %1147 = vmatprep.subr.mxu0 0.0
    %1148 = vmatpush1.msra.mxu0 0.0
    %1149 = vmatprep.subr.mxu0 0.0
    %1150 = vmatpush1.msra.mxu0 0.0
    %1151 = vmatprep.subr.mxu0 0.0
    %1152 = vmatpush1.msra.mxu0 0.0
    %1153 = vmatprep.subr.mxu0 0.0
    %1154 = vmatpush1.msra.mxu0 0.0
    %1155 = vmatprep.subr.mxu0 0.0
    %1156 = vmatpush1.msra.mxu0 0.0
    %1157 = vmatprep.subr.mxu0 0.0
    %1158 = vmatpush1.msra.mxu0 0.0
    %1159 = vmatprep.subr.mxu0 0.0
    %1160 = vmatpush1.msra.mxu0 0.0
    %1161 = vmatprep.subr.mxu0 0.0
    %1162 = vmatpush1.msra.mxu0 0.0
    %1163 = vmatprep.subr.mxu0 0.0
    %1164 = vmatpush1.msra.mxu0 0.0
    %1165 = vmatprep.subr.mxu0 0.0
    %1166 = vmatpush1.msra.mxu0 0.0
    %1167 = vmatprep.subr.mxu0 0.0
    %1168 = vmatpush1.msra.mxu0 0.0
    %1169 = vmatprep.subr.mxu0 0.0
    %1170 = vmatpush1.msra.mxu0 0.0
    %1171 = vmatprep.subr.mxu0 0.0
    %1172 = vmatpush1.msra.mxu0 0.0
    %1173 = vmatprep.subr.mxu0 0.0
    %1174 = vmatpush1.msra.mxu0 0.0
    %1175 = vmatprep.subr.mxu0 0.0
    %1176 = vmatpush1.msra.mxu0 0.0
    %1177 = vmatprep.subr.mxu0 0.0
    %1178 = vmatpush1.msra.mxu0 0.0
    %1179 = vmatprep.mubr.f32.mxu0 0.0
    %1180 = vmatmul.mubr.f32.gmra.mrb[0].mxu0 %v1113
    %v1181 = vpop.f32.mrb[0].mxu0
    %v1182 = vadd.f32 %v237, %v1181
    %v1183 = vpop.f32.mrb[0].mxu0
    %1184 = vdwg.mxu0
    %v1187 = vunpack.c.l.s4 1966171168
    %v1188 = vunpack.c.0.s8 %v1187
    %v1189 = vlaneseq
    %v1190 = vshrl.u32 %v1189, 7
    %v1191 = vsub.s32 %v1188, %v1190
    %v1192 = vrot.slane %v1182, %v1191
    %v1193 = vcombine.high %v1192, %v1192
    %v1195 = vunpack.c.l.s4 1966171168
    %v1196 = vunpack.c.0.s8 %v1195
    %v1197 = vlaneseq
    %v1198 = vshrl.u32 %v1197, 7
    %v1199 = vsub.s32 %v1196, %v1198
    %v1200 = vrot.slane %v1192, %v1199
    %v1202 = vunpack.c.l.s4 1966171168
    %v1203 = vunpack.c.0.s8 %v1202
    %v1204 = vlaneseq
    %v1205 = vshrl.u32 %v1204, 7
    %v1206 = vsub.s32 %v1203, %v1205
    %v1207 = vrot.slane %v1193, %v1206
    %v1208 = vlaneseq
    %v1209 = vshrl.u32 %v1208, 7
    %v1210 = vsub.s32 0, %v1209
    %v1211 = vrot.slane %v1200, %v1210
    %v1212 = vlaneseq
    %v1213 = vshrl.u32 %v1212, 7
    %v1214 = vsub.s32 0, %v1213
    %v1215 = vrot.slane %v1207, %v1214
    %v1218 = vmul.f32 %v1108, %v1211
    %v1219 = vmul.f32 %v1109, %v1215
    %v1220 = vsel %vm358, %v1218, 0.0
    %1221 = vadd.xlane.f32.xlu0 %v1220
    %v1222 = vpop.xlane.xlu0 %1221
    %v1223 = vsel %vm358, %v1219, 0.0
    %1224 = vadd.xlane.f32.xlu0 %v1223
    %v1225 = vpop.xlane.xlu0 %1224
    %v1228 = vlaneseq
    %v1229 = vshrl.u32 %v1228, 7
    %v1230 = vsub.s32 %v368, %v1229
    %v1231 = vrot.slane %v1222, %v1230
    %v1232 = vlaneseq
    %v1233 = vshrl.u32 %v1232, 7
    %v1234 = vsub.s32 %v368, %v1233
    %v1235 = vrot.slane %v1225, %v1234
    %v1236 = vsel %vm377, %v1235, %v1231
    %v1238 = vsel %vm380, %v1236, -inf
    %1239 = vmax.xlane.f32.xlu0 %v1238
    %v1240 = vpop.xlane.xlu0 %1239
    %v1242 = vlaneseq
    %v1243 = vshrl.u32 %v1242, 7
    %v1244 = vsub.s32 0, %v1243
    %v1245 = vrot.slane %v1240, %v1244
    %v1246 = vlaneseq
    %v1247 = vshrl.u32 %v1246, 7
    %v1248 = vsub.s32 1, %v1247
    %v1249 = vrot.slane %v1240, %v1248
    %v1252 = vsub.f32 %v1222, %v1245
    %v1253 = vsub.f32 %v1225, %v1249
    %v1254 = vmul.f32 %v1252, 1.442695
    %v1255 = vpow.pop %v1254
    %v1256 = vmul.f32 %v1253, 1.442695
    %v1257 = vpow.pop %v1256
    %1260 = vset.pattern.permute.xlu0 0
    %1261 = vperm.xlu0 %1260, %v1255
    %v1262 = vpop.permute.xlu0 %1261
    %1263 = vset.pattern.permute.xlu0 0
    %1264 = vperm.xlu0 %1263, %v1257
    %v1265 = vpop.permute.xlu0 %1264
    %v1266 = vlaneseq
    %v1267 = vshrl.u32 %v1266, 7
    %v1268 = vsub.s32 %v368, %v1267
    %v1269 = vrot.slane %v1262, %v1268
    %v1270 = vlaneseq
    %v1271 = vshrl.u32 %v1270, 7
    %v1272 = vsub.s32 %v368, %v1271
    %v1273 = vrot.slane %v1265, %v1272
    %v1274 = vsel %vm377, %v1273, %v1269
    %v1276 = vsel %vm380, %v1274, 0.0
    %1277 = vadd.xlane.f32.xlu0 %v1276
    %v1278 = vpop.xlane.xlu0 %1277
    %v1280 = vlaneseq
    %v1281 = vshrl.u32 %v1280, 7
    %v1282 = vsub.s32 0, %v1281
    %v1283 = vrot.slane %v1278, %v1282
    %v1284 = vlaneseq
    %v1285 = vshrl.u32 %v1284, 7
    %v1286 = vsub.s32 1, %v1285
    %v1287 = vrot.slane %v1278, %v1286
    %v1290 = vrcp.pop %v1283
    %v1291 = vmul.f32 %v1255, %v1290
    %v1292 = vrcp.pop %v1287
    %v1293 = vmul.f32 %v1257, %v1292
    %1295 = vset.pattern.permute.xlu0 0
    %1296 = vperm.xlu0 %1295, %v1291
    %v1297 = vpop.permute.xlu0 %1296
    %1300 = vset.pattern.permute.xlu0 0
    %1301 = vperm.xlu0 %1300, %v1293
    %v1302 = vpop.permute.xlu0 %1301
    %v1304 = vmul.f32 %v1297, %v1108
    %v1305 = vmul.f32 %v1302, %v1109
    %v1306 = vsel %vm358, %v1304, 0.0
    %v1307 = vrot.slane %v1306, 4
    %v1308 = vadd.f32 %v1306, %v1307
    %v1309 = vrot.slane %v1308, 2
    %v1310 = vadd.f32 %v1308, %v1309
    %v1311 = vrot.slane %v1310, 1
    %v1312 = vadd.f32 %v1310, %v1311
    %v1313 = vsel %vm358, %v1305, 0.0
    %v1314 = vrot.slane %v1313, 4
    %v1315 = vadd.f32 %v1313, %v1314
    %v1316 = vrot.slane %v1315, 2
    %v1317 = vadd.f32 %v1315, %v1316
    %v1318 = vrot.slane %v1317, 1
    %v1319 = vadd.f32 %v1317, %v1318
    %v1322 = vsel %vm377, %v1319, %v1312
    %v1323 = vsel %vm249, %v1322, 0
    %1325 = vmatprep.subr.mxu0 0.0
    %1326 = vmatpush1.msra.mxu0 %v239
    %1327 = vmatprep.subr.mxu0 0.0
    %1328 = vmatpush1.msra.mxu0 %v240
    %1329 = vmatprep.subr.mxu0 0.0
    %1330 = vmatpush1.msra.mxu0 %v241
    %1331 = vmatprep.subr.mxu0 0.0
    %1332 = vmatpush1.msra.mxu0 %v242
    %1333 = vmatprep.subr.mxu0 0.0
    %1334 = vmatpush1.msra.mxu0 0.0
    %1335 = vmatprep.subr.mxu0 0.0
    %1336 = vmatpush1.msra.mxu0 0.0
    %1337 = vmatprep.subr.mxu0 0.0
    %1338 = vmatpush1.msra.mxu0 0.0
    %1339 = vmatprep.subr.mxu0 0.0
    %1340 = vmatpush1.msra.mxu0 0.0
    %1341 = vmatprep.subr.mxu0 0.0
    %1342 = vmatpush1.msra.mxu0 0.0
    %1343 = vmatprep.subr.mxu0 0.0
    %1344 = vmatpush1.msra.mxu0 0.0
    %1345 = vmatprep.subr.mxu0 0.0
    %1346 = vmatpush1.msra.mxu0 0.0
    %1347 = vmatprep.subr.mxu0 0.0
    %1348 = vmatpush1.msra.mxu0 0.0
    %1349 = vmatprep.subr.mxu0 0.0
    %1350 = vmatpush1.msra.mxu0 0.0
    %1351 = vmatprep.subr.mxu0 0.0
    %1352 = vmatpush1.msra.mxu0 0.0
    %1353 = vmatprep.subr.mxu0 0.0
    %1354 = vmatpush1.msra.mxu0 0.0
    %1355 = vmatprep.subr.mxu0 0.0
    %1356 = vmatpush1.msra.mxu0 0.0
    %1357 = vmatprep.subr.mxu0 0.0
    %1358 = vmatpush1.msra.mxu0 0.0
    %1359 = vmatprep.subr.mxu0 0.0
    %1360 = vmatpush1.msra.mxu0 0.0
    %1361 = vmatprep.subr.mxu0 0.0
    %1362 = vmatpush1.msra.mxu0 0.0
    %1363 = vmatprep.subr.mxu0 0.0
    %1364 = vmatpush1.msra.mxu0 0.0
    %1365 = vmatprep.subr.mxu0 0.0
    %1366 = vmatpush1.msra.mxu0 0.0
    %1367 = vmatprep.subr.mxu0 0.0
    %1368 = vmatpush1.msra.mxu0 0.0
    %1369 = vmatprep.subr.mxu0 0.0
    %1370 = vmatpush1.msra.mxu0 0.0
    %1371 = vmatprep.subr.mxu0 0.0
    %1372 = vmatpush1.msra.mxu0 0.0
    %1373 = vmatprep.subr.mxu0 0.0
    %1374 = vmatpush1.msra.mxu0 0.0
    %1375 = vmatprep.subr.mxu0 0.0
    %1376 = vmatpush1.msra.mxu0 0.0
    %1377 = vmatprep.subr.mxu0 0.0
    %1378 = vmatpush1.msra.mxu0 0.0
    %1379 = vmatprep.subr.mxu0 0.0
    %1380 = vmatpush1.msra.mxu0 0.0
    %1381 = vmatprep.subr.mxu0 0.0
    %1382 = vmatpush1.msra.mxu0 0.0
    %1383 = vmatprep.subr.mxu0 0.0
    %1384 = vmatpush1.msra.mxu0 0.0
    %1385 = vmatprep.subr.mxu0 0.0
    %1386 = vmatpush1.msra.mxu0 0.0
    %1387 = vmatprep.subr.mxu0 0.0
    %1388 = vmatpush1.msra.mxu0 0.0
    %1389 = vmatprep.mubr.f32.mxu0 0.0
    %1390 = vmatmul.mubr.f32.gmra.mrb[0].mxu0 %v1323
    %v1391 = vpop.f32.mrb[0].mxu0
    %v1392 = vadd.f32 0.0, %v1391
    %v1393 = vpop.f32.mrb[0].mxu0
    %1394 = vdwg.mxu0
    %v1396 = vrot.slane %v1392, 4
    %v1398 = vadd.f32 %v220, %v1396
    %1399 = vmatprep.subr.mxu0 0.0
    %1400 = vmatpush1.msra.mxu0 %v243
    %1401 = vmatprep.subr.mxu0 0.0
    %1402 = vmatpush1.msra.mxu0 %v244
    %1403 = vmatprep.subr.mxu0 0.0
    %1404 = vmatpush1.msra.mxu0 %v245
    %1405 = vmatprep.subr.mxu0 0.0
    %1406 = vmatpush1.msra.mxu0 %v246
    %1407 = vmatprep.subr.mxu0 0.0
    %1408 = vmatpush1.msra.mxu0 0.0
    %1409 = vmatprep.subr.mxu0 0.0
    %1410 = vmatpush1.msra.mxu0 0.0
    %1411 = vmatprep.subr.mxu0 0.0
    %1412 = vmatpush1.msra.mxu0 0.0
    %1413 = vmatprep.subr.mxu0 0.0
    %1414 = vmatpush1.msra.mxu0 0.0
    %1415 = vmatprep.subr.mxu0 0.0
    %1416 = vmatpush1.msra.mxu0 0.0
    %1417 = vmatprep.subr.mxu0 0.0
    %1418 = vmatpush1.msra.mxu0 0.0
    %1419 = vmatprep.subr.mxu0 0.0
    %1420 = vmatpush1.msra.mxu0 0.0
    %1421 = vmatprep.subr.mxu0 0.0
    %1422 = vmatpush1.msra.mxu0 0.0
    %1423 = vmatprep.subr.mxu0 0.0
    %1424 = vmatpush1.msra.mxu0 0.0
    %1425 = vmatprep.subr.mxu0 0.0
    %1426 = vmatpush1.msra.mxu0 0.0
    %1427 = vmatprep.subr.mxu0 0.0
    %1428 = vmatpush1.msra.mxu0 0.0
    %1429 = vmatprep.subr.mxu0 0.0
    %1430 = vmatpush1.msra.mxu0 0.0
    %1431 = vmatprep.subr.mxu0 0.0
    %1432 = vmatpush1.msra.mxu0 0.0
    %1433 = vmatprep.subr.mxu0 0.0
    %1434 = vmatpush1.msra.mxu0 0.0
    %1435 = vmatprep.subr.mxu0 0.0
    %1436 = vmatpush1.msra.mxu0 0.0
    %1437 = vmatprep.subr.mxu0 0.0
    %1438 = vmatpush1.msra.mxu0 0.0
    %1439 = vmatprep.subr.mxu0 0.0
    %1440 = vmatpush1.msra.mxu0 0.0
    %1441 = vmatprep.subr.mxu0 0.0
    %1442 = vmatpush1.msra.mxu0 0.0
    %1443 = vmatprep.subr.mxu0 0.0
    %1444 = vmatpush1.msra.mxu0 0.0
    %1445 = vmatprep.subr.mxu0 0.0
    %1446 = vmatpush1.msra.mxu0 0.0
    %1447 = vmatprep.subr.mxu0 0.0
    %1448 = vmatpush1.msra.mxu0 0.0
    %1449 = vmatprep.subr.mxu0 0.0
    %1450 = vmatpush1.msra.mxu0 0.0
    %1451 = vmatprep.subr.mxu0 0.0
    %1452 = vmatpush1.msra.mxu0 0.0
    %1453 = vmatprep.subr.mxu0 0.0
    %1454 = vmatpush1.msra.mxu0 0.0
    %1455 = vmatprep.subr.mxu0 0.0
    %1456 = vmatpush1.msra.mxu0 0.0
    %1457 = vmatprep.subr.mxu0 0.0
    %1458 = vmatpush1.msra.mxu0 0.0
    %1459 = vmatprep.subr.mxu0 0.0
    %1460 = vmatpush1.msra.mxu0 0.0
    %1461 = vmatprep.subr.mxu0 0.0
    %1462 = vmatpush1.msra.mxu0 0.0
    %1463 = vmatprep.mubr.f32.mxu0 0.0
    %1464 = vmatmul.mubr.f32.gmra.mrb[0].mxu0 %v1113
    %v1465 = vpop.f32.mrb[0].mxu0
    %v1466 = vadd.f32 0.0, %v1465
    %v1467 = vpop.f32.mrb[0].mxu0
    %1468 = vdwg.mxu0
    %v1470 = vrot.slane %v1466, 4
    %v1472 = vadd.f32 %v1398, %v1470
    %v1473 = vxor.u32 %v1472, 2147483648
    %v1474 = vmul.f32 %v1473, 1.442695
    %v1475 = vpow.pop %v1474
    %v1476 = vadd.f32 %v1475, 1.0
    %v1477 = vrcp.pop %v1476
    %v1478 = vmul.f32 1.0, %v1477
    %v1479 = vtanh.pop %v1472
    %v1481 = vrot.slane %v1059, 6
    %v1483 = vmul.f32 %v1478, %v1481
    %1485 = vrot.lane.b32.xlu0 %v1479, 64
    %v1486 = vpop.permute.xlu0 %1485
    %v1488 = vmul.f32 %v1478, %v1486
    %1490 = vrot.lane.b32.xlu0 %v1488, 32
    %v1491 = vpop.permute.xlu0 %1490
    %v1493 = vadd.f32 %v1483, %v1491
    %v1494 = vtanh.pop %v1493
    %1496 = vrot.lane.b32.xlu0 %v1494, 64
    %v1497 = vpop.permute.xlu0 %1496
    %v1499 = vmul.f32 %v1478, %v1497
    %v1501 = vcombine.high %v1499, %v1499
    %v1503 = vunpack.c.l.s4 1966171168
    %v1504 = vunpack.c.0.s8 %v1503
    %v1505 = vlaneseq
    %v1506 = vshrl.u32 %v1505, 7
    %v1507 = vsub.s32 %v1504, %v1506
    %v1508 = vrot.slane %v1501, %v1507
    %v1509 = vcombine.high %v1508, %v1508
    %v1511 = vunpack.c.l.s4 1966171168
    %v1512 = vunpack.c.0.s8 %v1511
    %v1513 = vlaneseq
    %v1514 = vshrl.u32 %v1513, 7
    %v1515 = vsub.s32 %v1512, %v1514
    %v1516 = vrot.slane %v1508, %v1515
    %v1518 = vunpack.c.l.s4 1966171168
    %v1519 = vunpack.c.0.s8 %v1518
    %v1520 = vlaneseq
    %v1521 = vshrl.u32 %v1520, 7
    %v1522 = vsub.s32 %v1519, %v1521
    %v1523 = vrot.slane %v1509, %v1522
    %v1524 = vlaneseq
    %v1525 = vshrl.u32 %v1524, 7
    %v1526 = vsub.s32 0, %v1525
    %v1527 = vrot.slane %v1516, %v1526
    %v1528 = vlaneseq
    %v1529 = vshrl.u32 %v1528, 7
    %v1530 = vsub.s32 0, %v1529
    %v1531 = vrot.slane %v1523, %v1530
    %1532 = vrot.lane.b32.xlu0 %v1527, 32
    %v1533 = vpop.permute.xlu0 %1532
    %1534 = vrot.lane.b32.xlu0 %v1531, 32
    %v1535 = vpop.permute.xlu0 %1534
    %1538 = vst.msk [vmem:[#allocation14 + $0x2] sm:$0x1] %vm671, %v1533
    %1539 = vst.msk [vmem:[#allocation14 + $0xa] sm:$0x1] %vm671, %v1535
    %s1540 = scalar_lea.vmem [#allocation5], 24
    %v1541 = vld [vmem:[%s1540] sm:$0xf]
    %v1542 = vld [vmem:[%s1540 + $0x4] sm:$0xf]
    %v1543 = vrot.slane %v1499, 4
    %1544 = vrot.lane.b32.xlu0 %v1543, 32
    %v1545 = vpop.permute.xlu0 %1544
    %v1546 = vsel %vm249, %v1545, 0
    %1548 = vmatprep.subr.mxu0 0.0
    %1549 = vmatpush1.msra.mxu0 %v228
    %1550 = vmatprep.subr.mxu0 0.0
    %1551 = vmatpush1.msra.mxu0 %v229
    %1552 = vmatprep.subr.mxu0 0.0
    %1553 = vmatpush1.msra.mxu0 %v230
    %1554 = vmatprep.subr.mxu0 0.0
    %1555 = vmatpush1.msra.mxu0 %v231
    %1556 = vmatprep.subr.mxu0 0.0
    %1557 = vmatpush1.msra.mxu0 0.0
    %1558 = vmatprep.subr.mxu0 0.0
    %1559 = vmatpush1.msra.mxu0 0.0
    %1560 = vmatprep.subr.mxu0 0.0
    %1561 = vmatpush1.msra.mxu0 0.0
    %1562 = vmatprep.subr.mxu0 0.0
    %1563 = vmatpush1.msra.mxu0 0.0
    %1564 = vmatprep.subr.mxu0 0.0
    %1565 = vmatpush1.msra.mxu0 0.0
    %1566 = vmatprep.subr.mxu0 0.0
    %1567 = vmatpush1.msra.mxu0 0.0
    %1568 = vmatprep.subr.mxu0 0.0
    %1569 = vmatpush1.msra.mxu0 0.0
    %1570 = vmatprep.subr.mxu0 0.0
    %1571 = vmatpush1.msra.mxu0 0.0
    %1572 = vmatprep.subr.mxu0 0.0
    %1573 = vmatpush1.msra.mxu0 0.0
    %1574 = vmatprep.subr.mxu0 0.0
    %1575 = vmatpush1.msra.mxu0 0.0
    %1576 = vmatprep.subr.mxu0 0.0
    %1577 = vmatpush1.msra.mxu0 0.0
    %1578 = vmatprep.subr.mxu0 0.0
    %1579 = vmatpush1.msra.mxu0 0.0
    %1580 = vmatprep.subr.mxu0 0.0
    %1581 = vmatpush1.msra.mxu0 0.0
    %1582 = vmatprep.subr.mxu0 0.0
    %1583 = vmatpush1.msra.mxu0 0.0
    %1584 = vmatprep.subr.mxu0 0.0
    %1585 = vmatpush1.msra.mxu0 0.0
    %1586 = vmatprep.subr.mxu0 0.0
    %1587 = vmatpush1.msra.mxu0 0.0
    %1588 = vmatprep.subr.mxu0 0.0
    %1589 = vmatpush1.msra.mxu0 0.0
    %1590 = vmatprep.subr.mxu0 0.0
    %1591 = vmatpush1.msra.mxu0 0.0
    %1592 = vmatprep.subr.mxu0 0.0
    %1593 = vmatpush1.msra.mxu0 0.0
    %1594 = vmatprep.subr.mxu0 0.0
    %1595 = vmatpush1.msra.mxu0 0.0
    %1596 = vmatprep.subr.mxu0 0.0
    %1597 = vmatpush1.msra.mxu0 0.0
    %1598 = vmatprep.subr.mxu0 0.0
    %1599 = vmatpush1.msra.mxu0 0.0
    %1600 = vmatprep.subr.mxu0 0.0
    %1601 = vmatpush1.msra.mxu0 0.0
    %1602 = vmatprep.subr.mxu0 0.0
    %1603 = vmatpush1.msra.mxu0 0.0
    %1604 = vmatprep.subr.mxu0 0.0
    %1605 = vmatpush1.msra.mxu0 0.0
    %1606 = vmatprep.subr.mxu0 0.0
    %1607 = vmatpush1.msra.mxu0 0.0
    %1608 = vmatprep.subr.mxu0 0.0
    %1609 = vmatpush1.msra.mxu0 0.0
    %1610 = vmatprep.subr.mxu0 0.0
    %1611 = vmatpush1.msra.mxu0 0.0
    %1612 = vmatprep.mubr.f32.mxu0 0.0
    %1613 = vmatmul.mubr.f32.gmra.mrb[0].mxu0 %v1546
    %v1614 = vpop.f32.mrb[0].mxu0
    %v1615 = vadd.f32 %v237, %v1614
    %v1616 = vpop.f32.mrb[0].mxu0
    %1617 = vdwg.mxu0
    %v1620 = vunpack.c.l.s4 1966171168
    %v1621 = vunpack.c.0.s8 %v1620
    %v1622 = vlaneseq
    %v1623 = vshrl.u32 %v1622, 7
    %v1624 = vsub.s32 %v1621, %v1623
    %v1625 = vrot.slane %v1615, %v1624
    %v1626 = vcombine.high %v1625, %v1625
    %v1628 = vunpack.c.l.s4 1966171168
    %v1629 = vunpack.c.0.s8 %v1628
    %v1630 = vlaneseq
    %v1631 = vshrl.u32 %v1630, 7
    %v1632 = vsub.s32 %v1629, %v1631
    %v1633 = vrot.slane %v1625, %v1632
    %v1635 = vunpack.c.l.s4 1966171168
    %v1636 = vunpack.c.0.s8 %v1635
    %v1637 = vlaneseq
    %v1638 = vshrl.u32 %v1637, 7
    %v1639 = vsub.s32 %v1636, %v1638
    %v1640 = vrot.slane %v1626, %v1639
    %v1641 = vlaneseq
    %v1642 = vshrl.u32 %v1641, 7
    %v1643 = vsub.s32 0, %v1642
    %v1644 = vrot.slane %v1633, %v1643
    %v1645 = vlaneseq
    %v1646 = vshrl.u32 %v1645, 7
    %v1647 = vsub.s32 0, %v1646
    %v1648 = vrot.slane %v1640, %v1647
    %v1651 = vmul.f32 %v1541, %v1644
    %v1652 = vmul.f32 %v1542, %v1648
    %v1653 = vsel %vm358, %v1651, 0.0
    %1654 = vadd.xlane.f32.xlu0 %v1653
    %v1655 = vpop.xlane.xlu0 %1654
    %v1656 = vsel %vm358, %v1652, 0.0
    %1657 = vadd.xlane.f32.xlu0 %v1656
    %v1658 = vpop.xlane.xlu0 %1657
    %v1661 = vlaneseq
    %v1662 = vshrl.u32 %v1661, 7
    %v1663 = vsub.s32 %v368, %v1662
    %v1664 = vrot.slane %v1655, %v1663
    %v1665 = vlaneseq
    %v1666 = vshrl.u32 %v1665, 7
    %v1667 = vsub.s32 %v368, %v1666
    %v1668 = vrot.slane %v1658, %v1667
    %v1669 = vsel %vm377, %v1668, %v1664
    %v1671 = vsel %vm380, %v1669, -inf
    %1672 = vmax.xlane.f32.xlu0 %v1671
    %v1673 = vpop.xlane.xlu0 %1672
    %v1675 = vlaneseq
    %v1676 = vshrl.u32 %v1675, 7
    %v1677 = vsub.s32 0, %v1676
    %v1678 = vrot.slane %v1673, %v1677
    %v1679 = vlaneseq
    %v1680 = vshrl.u32 %v1679, 7
    %v1681 = vsub.s32 1, %v1680
    %v1682 = vrot.slane %v1673, %v1681
    %v1685 = vsub.f32 %v1655, %v1678
    %v1686 = vsub.f32 %v1658, %v1682
    %v1687 = vmul.f32 %v1685, 1.442695
    %v1688 = vpow.pop %v1687
    %v1689 = vmul.f32 %v1686, 1.442695
    %v1690 = vpow.pop %v1689
    %1693 = vset.pattern.permute.xlu0 0
    %1694 = vperm.xlu0 %1693, %v1688
    %v1695 = vpop.permute.xlu0 %1694
    %1696 = vset.pattern.permute.xlu0 0
    %1697 = vperm.xlu0 %1696, %v1690
    %v1698 = vpop.permute.xlu0 %1697
    %v1699 = vlaneseq
    %v1700 = vshrl.u32 %v1699, 7
    %v1701 = vsub.s32 %v368, %v1700
    %v1702 = vrot.slane %v1695, %v1701
    %v1703 = vlaneseq
    %v1704 = vshrl.u32 %v1703, 7
    %v1705 = vsub.s32 %v368, %v1704
    %v1706 = vrot.slane %v1698, %v1705
    %v1707 = vsel %vm377, %v1706, %v1702
    %v1709 = vsel %vm380, %v1707, 0.0
    %1710 = vadd.xlane.f32.xlu0 %v1709
    %v1711 = vpop.xlane.xlu0 %1710
    %v1713 = vlaneseq
    %v1714 = vshrl.u32 %v1713, 7
    %v1715 = vsub.s32 0, %v1714
    %v1716 = vrot.slane %v1711, %v1715
    %v1717 = vlaneseq
    %v1718 = vshrl.u32 %v1717, 7
    %v1719 = vsub.s32 1, %v1718
    %v1720 = vrot.slane %v1711, %v1719
    %v1723 = vrcp.pop %v1716
    %v1724 = vmul.f32 %v1688, %v1723
    %v1725 = vrcp.pop %v1720
    %v1726 = vmul.f32 %v1690, %v1725
    %1728 = vset.pattern.permute.xlu0 0
    %1729 = vperm.xlu0 %1728, %v1724
    %v1730 = vpop.permute.xlu0 %1729
    %1733 = vset.pattern.permute.xlu0 0
    %1734 = vperm.xlu0 %1733, %v1726
    %v1735 = vpop.permute.xlu0 %1734
    %v1737 = vmul.f32 %v1730, %v1541
    %v1738 = vmul.f32 %v1735, %v1542
    %v1739 = vsel %vm358, %v1737, 0.0
    %v1740 = vrot.slane %v1739, 4
    %v1741 = vadd.f32 %v1739, %v1740
    %v1742 = vrot.slane %v1741, 2
    %v1743 = vadd.f32 %v1741, %v1742
    %v1744 = vrot.slane %v1743, 1
    %v1745 = vadd.f32 %v1743, %v1744
    %v1746 = vsel %vm358, %v1738, 0.0
    %v1747 = vrot.slane %v1746, 4
    %v1748 = vadd.f32 %v1746, %v1747
    %v1749 = vrot.slane %v1748, 2
    %v1750 = vadd.f32 %v1748, %v1749
    %v1751 = vrot.slane %v1750, 1
    %v1752 = vadd.f32 %v1750, %v1751
    %v1755 = vsel %vm377, %v1752, %v1745
    %v1756 = vsel %vm249, %v1755, 0
    %1758 = vmatprep.subr.mxu0 0.0
    %1759 = vmatpush1.msra.mxu0 %v239
    %1760 = vmatprep.subr.mxu0 0.0
    %1761 = vmatpush1.msra.mxu0 %v240
    %1762 = vmatprep.subr.mxu0 0.0
    %1763 = vmatpush1.msra.mxu0 %v241
    %1764 = vmatprep.subr.mxu0 0.0
    %1765 = vmatpush1.msra.mxu0 %v242
    %1766 = vmatprep.subr.mxu0 0.0
    %1767 = vmatpush1.msra.mxu0 0.0
    %1768 = vmatprep.subr.mxu0 0.0
    %1769 = vmatpush1.msra.mxu0 0.0
    %1770 = vmatprep.subr.mxu0 0.0
    %1771 = vmatpush1.msra.mxu0 0.0
    %1772 = vmatprep.subr.mxu0 0.0
    %1773 = vmatpush1.msra.mxu0 0.0
    %1774 = vmatprep.subr.mxu0 0.0
    %1775 = vmatpush1.msra.mxu0 0.0
    %1776 = vmatprep.subr.mxu0 0.0
    %1777 = vmatpush1.msra.mxu0 0.0
    %1778 = vmatprep.subr.mxu0 0.0
    %1779 = vmatpush1.msra.mxu0 0.0
    %1780 = vmatprep.subr.mxu0 0.0
    %1781 = vmatpush1.msra.mxu0 0.0
    %1782 = vmatprep.subr.mxu0 0.0
    %1783 = vmatpush1.msra.mxu0 0.0
    %1784 = vmatprep.subr.mxu0 0.0
    %1785 = vmatpush1.msra.mxu0 0.0
    %1786 = vmatprep.subr.mxu0 0.0
    %1787 = vmatpush1.msra.mxu0 0.0
    %1788 = vmatprep.subr.mxu0 0.0
    %1789 = vmatpush1.msra.mxu0 0.0
    %1790 = vmatprep.subr.mxu0 0.0
    %1791 = vmatpush1.msra.mxu0 0.0
    %1792 = vmatprep.subr.mxu0 0.0
    %1793 = vmatpush1.msra.mxu0 0.0
    %1794 = vmatprep.subr.mxu0 0.0
    %1795 = vmatpush1.msra.mxu0 0.0
    %1796 = vmatprep.subr.mxu0 0.0
    %1797 = vmatpush1.msra.mxu0 0.0
    %1798 = vmatprep.subr.mxu0 0.0
    %1799 = vmatpush1.msra.mxu0 0.0
    %1800 = vmatprep.subr.mxu0 0.0
    %1801 = vmatpush1.msra.mxu0 0.0
    %1802 = vmatprep.subr.mxu0 0.0
    %1803 = vmatpush1.msra.mxu0 0.0
    %1804 = vmatprep.subr.mxu0 0.0
    %1805 = vmatpush1.msra.mxu0 0.0
    %1806 = vmatprep.subr.mxu0 0.0
    %1807 = vmatpush1.msra.mxu0 0.0
    %1808 = vmatprep.subr.mxu0 0.0
    %1809 = vmatpush1.msra.mxu0 0.0
    %1810 = vmatprep.subr.mxu0 0.0
    %1811 = vmatpush1.msra.mxu0 0.0
    %1812 = vmatprep.subr.mxu0 0.0
    %1813 = vmatpush1.msra.mxu0 0.0
    %1814 = vmatprep.subr.mxu0 0.0
    %1815 = vmatpush1.msra.mxu0 0.0
    %1816 = vmatprep.subr.mxu0 0.0
    %1817 = vmatpush1.msra.mxu0 0.0
    %1818 = vmatprep.subr.mxu0 0.0
    %1819 = vmatpush1.msra.mxu0 0.0
    %1820 = vmatprep.subr.mxu0 0.0
    %1821 = vmatpush1.msra.mxu0 0.0
    %1822 = vmatprep.mubr.f32.mxu0 0.0
    %1823 = vmatmul.mubr.f32.gmra.mrb[0].mxu0 %v1756
    %v1824 = vpop.f32.mrb[0].mxu0
    %v1825 = vadd.f32 0.0, %v1824
    %v1826 = vpop.f32.mrb[0].mxu0
    %1827 = vdwg.mxu0
    %v1829 = vrot.slane %v1825, 2
    %v1831 = vadd.f32 %v220, %v1829
    %1832 = vmatprep.subr.mxu0 0.0
    %1833 = vmatpush1.msra.mxu0 %v243
    %1834 = vmatprep.subr.mxu0 0.0
    %1835 = vmatpush1.msra.mxu0 %v244
    %1836 = vmatprep.subr.mxu0 0.0
    %1837 = vmatpush1.msra.mxu0 %v245
    %1838 = vmatprep.subr.mxu0 0.0
    %1839 = vmatpush1.msra.mxu0 %v246
    %1840 = vmatprep.subr.mxu0 0.0
    %1841 = vmatpush1.msra.mxu0 0.0
    %1842 = vmatprep.subr.mxu0 0.0
    %1843 = vmatpush1.msra.mxu0 0.0
    %1844 = vmatprep.subr.mxu0 0.0
    %1845 = vmatpush1.msra.mxu0 0.0
    %1846 = vmatprep.subr.mxu0 0.0
    %1847 = vmatpush1.msra.mxu0 0.0
    %1848 = vmatprep.subr.mxu0 0.0
    %1849 = vmatpush1.msra.mxu0 0.0
    %1850 = vmatprep.subr.mxu0 0.0
    %1851 = vmatpush1.msra.mxu0 0.0
    %1852 = vmatprep.subr.mxu0 0.0
    %1853 = vmatpush1.msra.mxu0 0.0
    %1854 = vmatprep.subr.mxu0 0.0
    %1855 = vmatpush1.msra.mxu0 0.0
    %1856 = vmatprep.subr.mxu0 0.0
    %1857 = vmatpush1.msra.mxu0 0.0
    %1858 = vmatprep.subr.mxu0 0.0
    %1859 = vmatpush1.msra.mxu0 0.0
    %1860 = vmatprep.subr.mxu0 0.0
    %1861 = vmatpush1.msra.mxu0 0.0
    %1862 = vmatprep.subr.mxu0 0.0
    %1863 = vmatpush1.msra.mxu0 0.0
    %1864 = vmatprep.subr.mxu0 0.0
    %1865 = vmatpush1.msra.mxu0 0.0
    %1866 = vmatprep.subr.mxu0 0.0
    %1867 = vmatpush1.msra.mxu0 0.0
    %1868 = vmatprep.subr.mxu0 0.0
    %1869 = vmatpush1.msra.mxu0 0.0
    %1870 = vmatprep.subr.mxu0 0.0
    %1871 = vmatpush1.msra.mxu0 0.0
    %1872 = vmatprep.subr.mxu0 0.0
    %1873 = vmatpush1.msra.mxu0 0.0
    %1874 = vmatprep.subr.mxu0 0.0
    %1875 = vmatpush1.msra.mxu0 0.0
    %1876 = vmatprep.subr.mxu0 0.0
    %1877 = vmatpush1.msra.mxu0 0.0
    %1878 = vmatprep.subr.mxu0 0.0
    %1879 = vmatpush1.msra.mxu0 0.0
    %1880 = vmatprep.subr.mxu0 0.0
    %1881 = vmatpush1.msra.mxu0 0.0
    %1882 = vmatprep.subr.mxu0 0.0
    %1883 = vmatpush1.msra.mxu0 0.0
    %1884 = vmatprep.subr.mxu0 0.0
    %1885 = vmatpush1.msra.mxu0 0.0
    %1886 = vmatprep.subr.mxu0 0.0
    %1887 = vmatpush1.msra.mxu0 0.0
    %1888 = vmatprep.subr.mxu0 0.0
    %1889 = vmatpush1.msra.mxu0 0.0
    %1890 = vmatprep.subr.mxu0 0.0
    %1891 = vmatpush1.msra.mxu0 0.0
    %1892 = vmatprep.subr.mxu0 0.0
    %1893 = vmatpush1.msra.mxu0 0.0
    %1894 = vmatprep.subr.mxu0 0.0
    %1895 = vmatpush1.msra.mxu0 0.0
    %1896 = vmatprep.mubr.f32.mxu0 0.0
    %1897 = vmatmul.mubr.f32.gmra.mrb[0].mxu0 %v1546
    %v1898 = vpop.f32.mrb[0].mxu0
    %v1899 = vadd.f32 0.0, %v1898
    %v1900 = vpop.f32.mrb[0].mxu0
    %1901 = vdwg.mxu0
    %v1903 = vrot.slane %v1899, 2
    %v1905 = vadd.f32 %v1831, %v1903
    %v1906 = vxor.u32 %v1905, 2147483648
    %v1907 = vmul.f32 %v1906, 1.442695
    %v1908 = vpow.pop %v1907
    %v1909 = vadd.f32 %v1908, 1.0
    %v1910 = vrcp.pop %v1909
    %v1911 = vmul.f32 1.0, %v1910
    %v1912 = vtanh.pop %v1905
    %v1914 = vrot.slane %v1493, 6
    %v1916 = vmul.f32 %v1911, %v1914
    %1918 = vrot.lane.b32.xlu0 %v1912, 64
    %v1919 = vpop.permute.xlu0 %1918
    %v1921 = vmul.f32 %v1911, %v1919
    %1923 = vrot.lane.b32.xlu0 %v1921, 32
    %v1924 = vpop.permute.xlu0 %1923
    %v1926 = vadd.f32 %v1916, %v1924
    %v1927 = vtanh.pop %v1926
    %1929 = vrot.lane.b32.xlu0 %v1927, 64
    %v1930 = vpop.permute.xlu0 %1929
    %v1932 = vmul.f32 %v1911, %v1930
    %v1934 = vcombine.high %v1932, %v1932
    %v1936 = vunpack.c.l.s4 1966171168
    %v1937 = vunpack.c.0.s8 %v1936
    %v1938 = vlaneseq
    %v1939 = vshrl.u32 %v1938, 7
    %v1940 = vsub.s32 %v1937, %v1939
    %v1941 = vrot.slane %v1934, %v1940
    %v1942 = vcombine.high %v1941, %v1941
    %v1944 = vunpack.c.l.s4 1966171168
    %v1945 = vunpack.c.0.s8 %v1944
    %v1946 = vlaneseq
    %v1947 = vshrl.u32 %v1946, 7
    %v1948 = vsub.s32 %v1945, %v1947
    %v1949 = vrot.slane %v1941, %v1948
    %v1951 = vunpack.c.l.s4 1966171168
    %v1952 = vunpack.c.0.s8 %v1951
    %v1953 = vlaneseq
    %v1954 = vshrl.u32 %v1953, 7
    %v1955 = vsub.s32 %v1952, %v1954
    %v1956 = vrot.slane %v1942, %v1955
    %v1957 = vcombine.high %v1949, %v1949
    %v1958 = vcombine.high %v1956, %v1956
    %v1959 = vlaneseq
    %v1960 = vshrl.u32 %v1959, 7
    %v1961 = vsub.s32 0, %v1960
    %v1962 = vrot.slane %v1957, %v1961
    %v1963 = vlaneseq
    %v1964 = vshrl.u32 %v1963, 7
    %v1965 = vsub.s32 0, %v1964
    %v1966 = vrot.slane %v1958, %v1965
    %1967 = vrot.lane.b32.xlu0 %v1962, 32
    %v1968 = vpop.permute.xlu0 %1967
    %1969 = vrot.lane.b32.xlu0 %v1966, 32
    %v1970 = vpop.permute.xlu0 %1969
    %1973 = vst.msk [vmem:[#allocation14 + $0x3] sm:$0x1] %vm671, %v1968
    %1974 = vst.msk [vmem:[#allocation14 + $0xb] sm:$0x1] %vm671, %v1970
    %s1975 = scalar_lea.vmem [#allocation5], 32
    %v1976 = vld [vmem:[%s1975] sm:$0xf]
    %v1977 = vld [vmem:[%s1975 + $0x4] sm:$0xf]
    %v1978 = vrot.slane %v1932, 6
    %1979 = vrot.lane.b32.xlu0 %v1978, 32
    %v1980 = vpop.permute.xlu0 %1979
    %v1981 = vsel %vm249, %v1980, 0
    %1983 = vmatprep.subr.mxu0 0.0
    %1984 = vmatpush1.msra.mxu0 %v228
    %1985 = vmatprep.subr.mxu0 0.0
    %1986 = vmatpush1.msra.mxu0 %v229
    %1987 = vmatprep.subr.mxu0 0.0
    %1988 = vmatpush1.msra.mxu0 %v230
    %1989 = vmatprep.subr.mxu0 0.0
    %1990 = vmatpush1.msra.mxu0 %v231
    %1991 = vmatprep.subr.mxu0 0.0
    %1992 = vmatpush1.msra.mxu0 0.0
    %1993 = vmatprep.subr.mxu0 0.0
    %1994 = vmatpush1.msra.mxu0 0.0
    %1995 = vmatprep.subr.mxu0 0.0
    %1996 = vmatpush1.msra.mxu0 0.0
    %1997 = vmatprep.subr.mxu0 0.0
    %1998 = vmatpush1.msra.mxu0 0.0
    %1999 = vmatprep.subr.mxu0 0.0
    %2000 = vmatpush1.msra.mxu0 0.0
    %2001 = vmatprep.subr.mxu0 0.0
    %2002 = vmatpush1.msra.mxu0 0.0
    %2003 = vmatprep.subr.mxu0 0.0
    %2004 = vmatpush1.msra.mxu0 0.0
    %2005 = vmatprep.subr.mxu0 0.0
    %2006 = vmatpush1.msra.mxu0 0.0
    %2007 = vmatprep.subr.mxu0 0.0
    %2008 = vmatpush1.msra.mxu0 0.0
    %2009 = vmatprep.subr.mxu0 0.0
    %2010 = vmatpush1.msra.mxu0 0.0
    %2011 = vmatprep.subr.mxu0 0.0
    %2012 = vmatpush1.msra.mxu0 0.0
    %2013 = vmatprep.subr.mxu0 0.0
    %2014 = vmatpush1.msra.mxu0 0.0
    %2015 = vmatprep.subr.mxu0 0.0
    %2016 = vmatpush1.msra.mxu0 0.0
    %2017 = vmatprep.subr.mxu0 0.0
    %2018 = vmatpush1.msra.mxu0 0.0
    %2019 = vmatprep.subr.mxu0 0.0
    %2020 = vmatpush1.msra.mxu0 0.0
    %2021 = vmatprep.subr.mxu0 0.0
    %2022 = vmatpush1.msra.mxu0 0.0
    %2023 = vmatprep.subr.mxu0 0.0
    %2024 = vmatpush1.msra.mxu0 0.0
    %2025 = vmatprep.subr.mxu0 0.0
    %2026 = vmatpush1.msra.mxu0 0.0
    %2027 = vmatprep.subr.mxu0 0.0
    %2028 = vmatpush1.msra.mxu0 0.0
    %2029 = vmatprep.subr.mxu0 0.0
    %2030 = vmatpush1.msra.mxu0 0.0
    %2031 = vmatprep.subr.mxu0 0.0
    %2032 = vmatpush1.msra.mxu0 0.0
    %2033 = vmatprep.subr.mxu0 0.0
    %2034 = vmatpush1.msra.mxu0 0.0
    %2035 = vmatprep.subr.mxu0 0.0
    %2036 = vmatpush1.msra.mxu0 0.0
    %2037 = vmatprep.subr.mxu0 0.0
    %2038 = vmatpush1.msra.mxu0 0.0
    %2039 = vmatprep.subr.mxu0 0.0
    %2040 = vmatpush1.msra.mxu0 0.0
    %2041 = vmatprep.subr.mxu0 0.0
    %2042 = vmatpush1.msra.mxu0 0.0
    %2043 = vmatprep.subr.mxu0 0.0
    %2044 = vmatpush1.msra.mxu0 0.0
    %2045 = vmatprep.subr.mxu0 0.0
    %2046 = vmatpush1.msra.mxu0 0.0
    %2047 = vmatprep.mubr.f32.mxu0 0.0
    %2048 = vmatmul.mubr.f32.gmra.mrb[0].mxu0 %v1981
    %v2049 = vpop.f32.mrb[0].mxu0
    %v2050 = vadd.f32 %v237, %v2049
    %v2051 = vpop.f32.mrb[0].mxu0
    %2052 = vdwg.mxu0
    %v2055 = vunpack.c.l.s4 1966171168
    %v2056 = vunpack.c.0.s8 %v2055
    %v2057 = vlaneseq
    %v2058 = vshrl.u32 %v2057, 7
    %v2059 = vsub.s32 %v2056, %v2058
    %v2060 = vrot.slane %v2050, %v2059
    %v2061 = vcombine.high %v2060, %v2060
    %v2063 = vunpack.c.l.s4 1966171168
    %v2064 = vunpack.c.0.s8 %v2063
    %v2065 = vlaneseq
    %v2066 = vshrl.u32 %v2065, 7
    %v2067 = vsub.s32 %v2064, %v2066
    %v2068 = vrot.slane %v2060, %v2067
    %v2070 = vunpack.c.l.s4 1966171168
    %v2071 = vunpack.c.0.s8 %v2070
    %v2072 = vlaneseq
    %v2073 = vshrl.u32 %v2072, 7
    %v2074 = vsub.s32 %v2071, %v2073
    %v2075 = vrot.slane %v2061, %v2074
    %v2076 = vlaneseq
    %v2077 = vshrl.u32 %v2076, 7
    %v2078 = vsub.s32 0, %v2077
    %v2079 = vrot.slane %v2068, %v2078
    %v2080 = vlaneseq
    %v2081 = vshrl.u32 %v2080, 7
    %v2082 = vsub.s32 0, %v2081
    %v2083 = vrot.slane %v2075, %v2082
    %v2086 = vmul.f32 %v1976, %v2079
    %v2087 = vmul.f32 %v1977, %v2083
    %v2088 = vsel %vm358, %v2086, 0.0
    %2089 = vadd.xlane.f32.xlu0 %v2088
    %v2090 = vpop.xlane.xlu0 %2089
    %v2091 = vsel %vm358, %v2087, 0.0
    %2092 = vadd.xlane.f32.xlu0 %v2091
    %v2093 = vpop.xlane.xlu0 %2092
    %v2096 = vlaneseq
    %v2097 = vshrl.u32 %v2096, 7
    %v2098 = vsub.s32 %v368, %v2097
    %v2099 = vrot.slane %v2090, %v2098
    %v2100 = vlaneseq
    %v2101 = vshrl.u32 %v2100, 7
    %v2102 = vsub.s32 %v368, %v2101
    %v2103 = vrot.slane %v2093, %v2102
    %v2104 = vsel %vm377, %v2103, %v2099
    %v2106 = vsel %vm380, %v2104, -inf
    %2107 = vmax.xlane.f32.xlu0 %v2106
    %v2108 = vpop.xlane.xlu0 %2107
    %v2110 = vlaneseq
    %v2111 = vshrl.u32 %v2110, 7
    %v2112 = vsub.s32 0, %v2111
    %v2113 = vrot.slane %v2108, %v2112
    %v2114 = vlaneseq
    %v2115 = vshrl.u32 %v2114, 7
    %v2116 = vsub.s32 1, %v2115
    %v2117 = vrot.slane %v2108, %v2116
    %v2120 = vsub.f32 %v2090, %v2113
    %v2121 = vsub.f32 %v2093, %v2117
    %v2122 = vmul.f32 %v2120, 1.442695
    %v2123 = vpow.pop %v2122
    %v2124 = vmul.f32 %v2121, 1.442695
    %v2125 = vpow.pop %v2124
    %2128 = vset.pattern.permute.xlu0 0
    %2129 = vperm.xlu0 %2128, %v2123
    %v2130 = vpop.permute.xlu0 %2129
    %2131 = vset.pattern.permute.xlu0 0
    %2132 = vperm.xlu0 %2131, %v2125
    %v2133 = vpop.permute.xlu0 %2132
    %v2134 = vlaneseq
    %v2135 = vshrl.u32 %v2134, 7
    %v2136 = vsub.s32 %v368, %v2135
    %v2137 = vrot.slane %v2130, %v2136
    %v2138 = vlaneseq
    %v2139 = vshrl.u32 %v2138, 7
    %v2140 = vsub.s32 %v368, %v2139
    %v2141 = vrot.slane %v2133, %v2140
    %v2142 = vsel %vm377, %v2141, %v2137
    %v2144 = vsel %vm380, %v2142, 0.0
    %2145 = vadd.xlane.f32.xlu0 %v2144
    %v2146 = vpop.xlane.xlu0 %2145
    %v2148 = vlaneseq
    %v2149 = vshrl.u32 %v2148, 7
    %v2150 = vsub.s32 0, %v2149
    %v2151 = vrot.slane %v2146, %v2150
    %v2152 = vlaneseq
    %v2153 = vshrl.u32 %v2152, 7
    %v2154 = vsub.s32 1, %v2153
    %v2155 = vrot.slane %v2146, %v2154
    %v2158 = vrcp.pop %v2151
    %v2159 = vmul.f32 %v2123, %v2158
    %v2160 = vrcp.pop %v2155
    %v2161 = vmul.f32 %v2125, %v2160
    %2163 = vset.pattern.permute.xlu0 0
    %2164 = vperm.xlu0 %2163, %v2159
    %v2165 = vpop.permute.xlu0 %2164
    %2168 = vset.pattern.permute.xlu0 0
    %2169 = vperm.xlu0 %2168, %v2161
    %v2170 = vpop.permute.xlu0 %2169
    %v2172 = vmul.f32 %v2165, %v1976
    %v2173 = vmul.f32 %v2170, %v1977
    %v2174 = vsel %vm358, %v2172, 0.0
    %v2175 = vrot.slane %v2174, 4
    %v2176 = vadd.f32 %v2174, %v2175
    %v2177 = vrot.slane %v2176, 2
    %v2178 = vadd.f32 %v2176, %v2177
    %v2179 = vrot.slane %v2178, 1
    %v2180 = vadd.f32 %v2178, %v2179
    %v2181 = vsel %vm358, %v2173, 0.0
    %v2182 = vrot.slane %v2181, 4
    %v2183 = vadd.f32 %v2181, %v2182
    %v2184 = vrot.slane %v2183, 2
    %v2185 = vadd.f32 %v2183, %v2184
    %v2186 = vrot.slane %v2185, 1
    %v2187 = vadd.f32 %v2185, %v2186
    %v2190 = vsel %vm377, %v2187, %v2180
    %v2191 = vsel %vm249, %v2190, 0
    %2193 = vmatprep.subr.mxu0 0.0
    %2194 = vmatpush1.msra.mxu0 %v239
    %2195 = vmatprep.subr.mxu0 0.0
    %2196 = vmatpush1.msra.mxu0 %v240
    %2197 = vmatprep.subr.mxu0 0.0
    %2198 = vmatpush1.msra.mxu0 %v241
    %2199 = vmatprep.subr.mxu0 0.0
    %2200 = vmatpush1.msra.mxu0 %v242
    %2201 = vmatprep.subr.mxu0 0.0
    %2202 = vmatpush1.msra.mxu0 0.0
    %2203 = vmatprep.subr.mxu0 0.0
    %2204 = vmatpush1.msra.mxu0 0.0
    %2205 = vmatprep.subr.mxu0 0.0
    %2206 = vmatpush1.msra.mxu0 0.0
    %2207 = vmatprep.subr.mxu0 0.0
    %2208 = vmatpush1.msra.mxu0 0.0
    %2209 = vmatprep.subr.mxu0 0.0
    %2210 = vmatpush1.msra.mxu0 0.0
    %2211 = vmatprep.subr.mxu0 0.0
    %2212 = vmatpush1.msra.mxu0 0.0
    %2213 = vmatprep.subr.mxu0 0.0
    %2214 = vmatpush1.msra.mxu0 0.0
    %2215 = vmatprep.subr.mxu0 0.0
    %2216 = vmatpush1.msra.mxu0 0.0
    %2217 = vmatprep.subr.mxu0 0.0
    %2218 = vmatpush1.msra.mxu0 0.0
    %2219 = vmatprep.subr.mxu0 0.0
    %2220 = vmatpush1.msra.mxu0 0.0
    %2221 = vmatprep.subr.mxu0 0.0
    %2222 = vmatpush1.msra.mxu0 0.0
    %2223 = vmatprep.subr.mxu0 0.0
    %2224 = vmatpush1.msra.mxu0 0.0
    %2225 = vmatprep.subr.mxu0 0.0
    %2226 = vmatpush1.msra.mxu0 0.0
    %2227 = vmatprep.subr.mxu0 0.0
    %2228 = vmatpush1.msra.mxu0 0.0
    %2229 = vmatprep.subr.mxu0 0.0
    %2230 = vmatpush1.msra.mxu0 0.0
    %2231 = vmatprep.subr.mxu0 0.0
    %2232 = vmatpush1.msra.mxu0 0.0
    %2233 = vmatprep.subr.mxu0 0.0
    %2234 = vmatpush1.msra.mxu0 0.0
    %2235 = vmatprep.subr.mxu0 0.0
    %2236 = vmatpush1.msra.mxu0 0.0
    %2237 = vmatprep.subr.mxu0 0.0
    %2238 = vmatpush1.msra.mxu0 0.0
    %2239 = vmatprep.subr.mxu0 0.0
    %2240 = vmatpush1.msra.mxu0 0.0
    %2241 = vmatprep.subr.mxu0 0.0
    %2242 = vmatpush1.msra.mxu0 0.0
    %2243 = vmatprep.subr.mxu0 0.0
    %2244 = vmatpush1.msra.mxu0 0.0
    %2245 = vmatprep.subr.mxu0 0.0
    %2246 = vmatpush1.msra.mxu0 0.0
    %2247 = vmatprep.subr.mxu0 0.0
    %2248 = vmatpush1.msra.mxu0 0.0
    %2249 = vmatprep.subr.mxu0 0.0
    %2250 = vmatpush1.msra.mxu0 0.0
    %2251 = vmatprep.subr.mxu0 0.0
    %2252 = vmatpush1.msra.mxu0 0.0
    %2253 = vmatprep.subr.mxu0 0.0
    %2254 = vmatpush1.msra.mxu0 0.0
    %2255 = vmatprep.subr.mxu0 0.0
    %2256 = vmatpush1.msra.mxu0 0.0
    %2257 = vmatprep.mubr.f32.mxu0 0.0
    %2258 = vmatmul.mubr.f32.gmra.mrb[0].mxu0 %v2191
    %v2259 = vpop.f32.mrb[0].mxu0
    %v2260 = vadd.f32 0.0, %v2259
    %v2261 = vpop.f32.mrb[0].mxu0
    %2262 = vdwg.mxu0
    %v2263 = vadd.f32 %v225, %v2260
    %2264 = vmatprep.subr.mxu0 0.0
    %2265 = vmatpush1.msra.mxu0 %v243
    %2266 = vmatprep.subr.mxu0 0.0
    %2267 = vmatpush1.msra.mxu0 %v244
    %2268 = vmatprep.subr.mxu0 0.0
    %2269 = vmatpush1.msra.mxu0 %v245
    %2270 = vmatprep.subr.mxu0 0.0
    %2271 = vmatpush1.msra.mxu0 %v246
    %2272 = vmatprep.subr.mxu0 0.0
    %2273 = vmatpush1.msra.mxu0 0.0
    %2274 = vmatprep.subr.mxu0 0.0
    %2275 = vmatpush1.msra.mxu0 0.0
    %2276 = vmatprep.subr.mxu0 0.0
    %2277 = vmatpush1.msra.mxu0 0.0
    %2278 = vmatprep.subr.mxu0 0.0
    %2279 = vmatpush1.msra.mxu0 0.0
    %2280 = vmatprep.subr.mxu0 0.0
    %2281 = vmatpush1.msra.mxu0 0.0
    %2282 = vmatprep.subr.mxu0 0.0
    %2283 = vmatpush1.msra.mxu0 0.0
    %2284 = vmatprep.subr.mxu0 0.0
    %2285 = vmatpush1.msra.mxu0 0.0
    %2286 = vmatprep.subr.mxu0 0.0
    %2287 = vmatpush1.msra.mxu0 0.0
    %2288 = vmatprep.subr.mxu0 0.0
    %2289 = vmatpush1.msra.mxu0 0.0
    %2290 = vmatprep.subr.mxu0 0.0
    %2291 = vmatpush1.msra.mxu0 0.0
    %2292 = vmatprep.subr.mxu0 0.0
    %2293 = vmatpush1.msra.mxu0 0.0
    %2294 = vmatprep.subr.mxu0 0.0
    %2295 = vmatpush1.msra.mxu0 0.0
    %2296 = vmatprep.subr.mxu0 0.0
    %2297 = vmatpush1.msra.mxu0 0.0
    %2298 = vmatprep.subr.mxu0 0.0
    %2299 = vmatpush1.msra.mxu0 0.0
    %2300 = vmatprep.subr.mxu0 0.0
    %2301 = vmatpush1.msra.mxu0 0.0
    %2302 = vmatprep.subr.mxu0 0.0
    %2303 = vmatpush1.msra.mxu0 0.0
    %2304 = vmatprep.subr.mxu0 0.0
    %2305 = vmatpush1.msra.mxu0 0.0
    %2306 = vmatprep.subr.mxu0 0.0
    %2307 = vmatpush1.msra.mxu0 0.0
    %2308 = vmatprep.subr.mxu0 0.0
    %2309 = vmatpush1.msra.mxu0 0.0
    %2310 = vmatprep.subr.mxu0 0.0
    %2311 = vmatpush1.msra.mxu0 0.0
    %2312 = vmatprep.subr.mxu0 0.0
    %2313 = vmatpush1.msra.mxu0 0.0
    %2314 = vmatprep.subr.mxu0 0.0
    %2315 = vmatpush1.msra.mxu0 0.0
    %2316 = vmatprep.subr.mxu0 0.0
    %2317 = vmatpush1.msra.mxu0 0.0
    %2318 = vmatprep.subr.mxu0 0.0
    %2319 = vmatpush1.msra.mxu0 0.0
    %2320 = vmatprep.subr.mxu0 0.0
    %2321 = vmatpush1.msra.mxu0 0.0
    %2322 = vmatprep.subr.mxu0 0.0
    %2323 = vmatpush1.msra.mxu0 0.0
    %2324 = vmatprep.subr.mxu0 0.0
    %2325 = vmatpush1.msra.mxu0 0.0
    %2326 = vmatprep.subr.mxu0 0.0
    %2327 = vmatpush1.msra.mxu0 0.0
    %2328 = vmatprep.mubr.f32.mxu0 0.0
    %2329 = vmatmul.mubr.f32.gmra.mrb[0].mxu0 %v1981
    %v2330 = vpop.f32.mrb[0].mxu0
    %v2331 = vadd.f32 0.0, %v2330
    %v2332 = vpop.f32.mrb[0].mxu0
    %2333 = vdwg.mxu0
    %v2334 = vadd.f32 %v2263, %v2331
    %v2335 = vxor.u32 %v2334, 2147483648
    %v2336 = vmul.f32 %v2335, 1.442695
    %v2337 = vpow.pop %v2336
    %v2338 = vadd.f32 %v2337, 1.0
    %v2339 = vrcp.pop %v2338
    %v2340 = vmul.f32 1.0, %v2339
    %v2341 = vtanh.pop %v2334
    %v2343 = vrot.slane %v1926, 6
    %v2345 = vmul.f32 %v2340, %v2343
    %2347 = vrot.lane.b32.xlu0 %v2341, 64
    %v2348 = vpop.permute.xlu0 %2347
    %v2350 = vmul.f32 %v2340, %v2348
    %2352 = vrot.lane.b32.xlu0 %v2350, 32
    %v2353 = vpop.permute.xlu0 %2352
    %v2355 = vadd.f32 %v2345, %v2353
    %v2356 = vtanh.pop %v2355
    %2358 = vrot.lane.b32.xlu0 %v2356, 64
    %v2359 = vpop.permute.xlu0 %2358
    %v2361 = vmul.f32 %v2340, %v2359
    %v2364 = vunpack.c.l.s4 1966171168
    %v2365 = vunpack.c.0.s8 %v2364
    %v2366 = vlaneseq
    %v2367 = vshrl.u32 %v2366, 7
    %v2368 = vsub.s32 %v2365, %v2367
    %v2369 = vrot.slane %v2361, %v2368
    %v2370 = vcombine.high %v2369, %v2369
    %v2372 = vunpack.c.l.s4 1966171168
    %v2373 = vunpack.c.0.s8 %v2372
    %v2374 = vlaneseq
    %v2375 = vshrl.u32 %v2374, 7
    %v2376 = vsub.s32 %v2373, %v2375
    %v2377 = vrot.slane %v2369, %v2376
    %v2379 = vunpack.c.l.s4 1966171168
    %v2380 = vunpack.c.0.s8 %v2379
    %v2381 = vlaneseq
    %v2382 = vshrl.u32 %v2381, 7
    %v2383 = vsub.s32 %v2380, %v2382
    %v2384 = vrot.slane %v2370, %v2383
    %v2385 = vlaneseq
    %v2386 = vshrl.u32 %v2385, 7
    %v2387 = vsub.s32 0, %v2386
    %v2388 = vrot.slane %v2377, %v2387
    %v2389 = vlaneseq
    %v2390 = vshrl.u32 %v2389, 7
    %v2391 = vsub.s32 0, %v2390
    %v2392 = vrot.slane %v2384, %v2391
    %2393 = vrot.lane.b32.xlu0 %v2388, 32
    %v2394 = vpop.permute.xlu0 %2393
    %2395 = vrot.lane.b32.xlu0 %v2392, 32
    %v2396 = vpop.permute.xlu0 %2395
    %2399 = vst.msk [vmem:[#allocation14 + $0x4] sm:$0x1] %vm671, %v2394
    %2400 = vst.msk [vmem:[#allocation14 + $0xc] sm:$0x1] %vm671, %v2396
    %s2401 = scalar_lea.vmem [#allocation5], 40
    %v2402 = vld [vmem:[%s2401] sm:$0xf]
    %v2403 = vld [vmem:[%s2401 + $0x4] sm:$0xf]
    %2404 = vrot.lane.b32.xlu0 %v2361, 32
    %v2405 = vpop.permute.xlu0 %2404
    %v2406 = vsel %vm249, %v2405, 0
    %2408 = vmatprep.subr.mxu0 0.0
    %2409 = vmatpush1.msra.mxu0 %v228
    %2410 = vmatprep.subr.mxu0 0.0
    %2411 = vmatpush1.msra.mxu0 %v229
    %2412 = vmatprep.subr.mxu0 0.0
    %2413 = vmatpush1.msra.mxu0 %v230
    %2414 = vmatprep.subr.mxu0 0.0
    %2415 = vmatpush1.msra.mxu0 %v231
    %2416 = vmatprep.subr.mxu0 0.0
    %2417 = vmatpush1.msra.mxu0 0.0
    %2418 = vmatprep.subr.mxu0 0.0
    %2419 = vmatpush1.msra.mxu0 0.0
    %2420 = vmatprep.subr.mxu0 0.0
    %2421 = vmatpush1.msra.mxu0 0.0
    %2422 = vmatprep.subr.mxu0 0.0
    %2423 = vmatpush1.msra.mxu0 0.0
    %2424 = vmatprep.subr.mxu0 0.0
    %2425 = vmatpush1.msra.mxu0 0.0
    %2426 = vmatprep.subr.mxu0 0.0
    %2427 = vmatpush1.msra.mxu0 0.0
    %2428 = vmatprep.subr.mxu0 0.0
    %2429 = vmatpush1.msra.mxu0 0.0
    %2430 = vmatprep.subr.mxu0 0.0
    %2431 = vmatpush1.msra.mxu0 0.0
    %2432 = vmatprep.subr.mxu0 0.0
    %2433 = vmatpush1.msra.mxu0 0.0
    %2434 = vmatprep.subr.mxu0 0.0
    %2435 = vmatpush1.msra.mxu0 0.0
    %2436 = vmatprep.subr.mxu0 0.0
    %2437 = vmatpush1.msra.mxu0 0.0
    %2438 = vmatprep.subr.mxu0 0.0
    %2439 = vmatpush1.msra.mxu0 0.0
    %2440 = vmatprep.subr.mxu0 0.0
    %2441 = vmatpush1.msra.mxu0 0.0
    %2442 = vmatprep.subr.mxu0 0.0
    %2443 = vmatpush1.msra.mxu0 0.0
    %2444 = vmatprep.subr.mxu0 0.0
    %2445 = vmatpush1.msra.mxu0 0.0
    %2446 = vmatprep.subr.mxu0 0.0
    %2447 = vmatpush1.msra.mxu0 0.0
    %2448 = vmatprep.subr.mxu0 0.0
    %2449 = vmatpush1.msra.mxu0 0.0
    %2450 = vmatprep.subr.mxu0 0.0
    %2451 = vmatpush1.msra.mxu0 0.0
    %2452 = vmatprep.subr.mxu0 0.0
    %2453 = vmatpush1.msra.mxu0 0.0
    %2454 = vmatprep.subr.mxu0 0.0
    %2455 = vmatpush1.msra.mxu0 0.0
    %2456 = vmatprep.subr.mxu0 0.0
    %2457 = vmatpush1.msra.mxu0 0.0
    %2458 = vmatprep.subr.mxu0 0.0
    %2459 = vmatpush1.msra.mxu0 0.0
    %2460 = vmatprep.subr.mxu0 0.0
    %2461 = vmatpush1.msra.mxu0 0.0
    %2462 = vmatprep.subr.mxu0 0.0
    %2463 = vmatpush1.msra.mxu0 0.0
    %2464 = vmatprep.subr.mxu0 0.0
    %2465 = vmatpush1.msra.mxu0 0.0
    %2466 = vmatprep.subr.mxu0 0.0
    %2467 = vmatpush1.msra.mxu0 0.0
    %2468 = vmatprep.subr.mxu0 0.0
    %2469 = vmatpush1.msra.mxu0 0.0
    %2470 = vmatprep.subr.mxu0 0.0
    %2471 = vmatpush1.msra.mxu0 0.0
    %2472 = vmatprep.mubr.f32.mxu0 0.0
    %2473 = vmatmul.mubr.f32.gmra.mrb[0].mxu0 %v2406
    %v2474 = vpop.f32.mrb[0].mxu0
    %v2475 = vadd.f32 %v237, %v2474
    %v2476 = vpop.f32.mrb[0].mxu0
    %2477 = vdwg.mxu0
    %v2480 = vunpack.c.l.s4 1966171168
    %v2481 = vunpack.c.0.s8 %v2480
    %v2482 = vlaneseq
    %v2483 = vshrl.u32 %v2482, 7
    %v2484 = vsub.s32 %v2481, %v2483
    %v2485 = vrot.slane %v2475, %v2484
    %v2486 = vcombine.high %v2485, %v2485
    %v2488 = vunpack.c.l.s4 1966171168
    %v2489 = vunpack.c.0.s8 %v2488
    %v2490 = vlaneseq
    %v2491 = vshrl.u32 %v2490, 7
    %v2492 = vsub.s32 %v2489, %v2491
    %v2493 = vrot.slane %v2485, %v2492
    %v2495 = vunpack.c.l.s4 1966171168
    %v2496 = vunpack.c.0.s8 %v2495
    %v2497 = vlaneseq
    %v2498 = vshrl.u32 %v2497, 7
    %v2499 = vsub.s32 %v2496, %v2498
    %v2500 = vrot.slane %v2486, %v2499
    %v2501 = vlaneseq
    %v2502 = vshrl.u32 %v2501, 7
    %v2503 = vsub.s32 0, %v2502
    %v2504 = vrot.slane %v2493, %v2503
    %v2505 = vlaneseq
    %v2506 = vshrl.u32 %v2505, 7
    %v2507 = vsub.s32 0, %v2506
    %v2508 = vrot.slane %v2500, %v2507
    %v2511 = vmul.f32 %v2402, %v2504
    %v2512 = vmul.f32 %v2403, %v2508
    %v2513 = vsel %vm358, %v2511, 0.0
    %2514 = vadd.xlane.f32.xlu0 %v2513
    %v2515 = vpop.xlane.xlu0 %2514
    %v2516 = vsel %vm358, %v2512, 0.0
    %2517 = vadd.xlane.f32.xlu0 %v2516
    %v2518 = vpop.xlane.xlu0 %2517
    %v2521 = vlaneseq
    %v2522 = vshrl.u32 %v2521, 7
    %v2523 = vsub.s32 %v368, %v2522
    %v2524 = vrot.slane %v2515, %v2523
    %v2525 = vlaneseq
    %v2526 = vshrl.u32 %v2525, 7
    %v2527 = vsub.s32 %v368, %v2526
    %v2528 = vrot.slane %v2518, %v2527
    %v2529 = vsel %vm377, %v2528, %v2524
    %v2531 = vsel %vm380, %v2529, -inf
    %2532 = vmax.xlane.f32.xlu0 %v2531
    %v2533 = vpop.xlane.xlu0 %2532
    %v2535 = vlaneseq
    %v2536 = vshrl.u32 %v2535, 7
    %v2537 = vsub.s32 0, %v2536
    %v2538 = vrot.slane %v2533, %v2537
    %v2539 = vlaneseq
    %v2540 = vshrl.u32 %v2539, 7
    %v2541 = vsub.s32 1, %v2540
    %v2542 = vrot.slane %v2533, %v2541
    %v2545 = vsub.f32 %v2515, %v2538
    %v2546 = vsub.f32 %v2518, %v2542
    %v2547 = vmul.f32 %v2545, 1.442695
    %v2548 = vpow.pop %v2547
    %v2549 = vmul.f32 %v2546, 1.442695
    %v2550 = vpow.pop %v2549
    %2553 = vset.pattern.permute.xlu0 0
    %2554 = vperm.xlu0 %2553, %v2548
    %v2555 = vpop.permute.xlu0 %2554
    %2556 = vset.pattern.permute.xlu0 0
    %2557 = vperm.xlu0 %2556, %v2550
    %v2558 = vpop.permute.xlu0 %2557
    %v2559 = vlaneseq
    %v2560 = vshrl.u32 %v2559, 7
    %v2561 = vsub.s32 %v368, %v2560
    %v2562 = vrot.slane %v2555, %v2561
    %v2563 = vlaneseq
    %v2564 = vshrl.u32 %v2563, 7
    %v2565 = vsub.s32 %v368, %v2564
    %v2566 = vrot.slane %v2558, %v2565
    %v2567 = vsel %vm377, %v2566, %v2562
    %v2569 = vsel %vm380, %v2567, 0.0
    %2570 = vadd.xlane.f32.xlu0 %v2569
    %v2571 = vpop.xlane.xlu0 %2570
    %v2573 = vlaneseq
    %v2574 = vshrl.u32 %v2573, 7
    %v2575 = vsub.s32 0, %v2574
    %v2576 = vrot.slane %v2571, %v2575
    %v2577 = vlaneseq
    %v2578 = vshrl.u32 %v2577, 7
    %v2579 = vsub.s32 1, %v2578
    %v2580 = vrot.slane %v2571, %v2579
    %v2583 = vrcp.pop %v2576
    %v2584 = vmul.f32 %v2548, %v2583
    %v2585 = vrcp.pop %v2580
    %v2586 = vmul.f32 %v2550, %v2585
    %2588 = vset.pattern.permute.xlu0 0
    %2589 = vperm.xlu0 %2588, %v2584
    %v2590 = vpop.permute.xlu0 %2589
    %2593 = vset.pattern.permute.xlu0 0
    %2594 = vperm.xlu0 %2593, %v2586
    %v2595 = vpop.permute.xlu0 %2594
    %v2597 = vmul.f32 %v2590, %v2402
    %v2598 = vmul.f32 %v2595, %v2403
    %v2599 = vsel %vm358, %v2597, 0.0
    %v2600 = vrot.slane %v2599, 4
    %v2601 = vadd.f32 %v2599, %v2600
    %v2602 = vrot.slane %v2601, 2
    %v2603 = vadd.f32 %v2601, %v2602
    %v2604 = vrot.slane %v2603, 1
    %v2605 = vadd.f32 %v2603, %v2604
    %v2606 = vsel %vm358, %v2598, 0.0
    %v2607 = vrot.slane %v2606, 4
    %v2608 = vadd.f32 %v2606, %v2607
    %v2609 = vrot.slane %v2608, 2
    %v2610 = vadd.f32 %v2608, %v2609
    %v2611 = vrot.slane %v2610, 1
    %v2612 = vadd.f32 %v2610, %v2611
    %v2615 = vsel %vm377, %v2612, %v2605
    %v2616 = vsel %vm249, %v2615, 0
    %2618 = vmatprep.subr.mxu0 0.0
    %2619 = vmatpush1.msra.mxu0 %v239
    %2620 = vmatprep.subr.mxu0 0.0
    %2621 = vmatpush1.msra.mxu0 %v240
    %2622 = vmatprep.subr.mxu0 0.0
    %2623 = vmatpush1.msra.mxu0 %v241
    %2624 = vmatprep.subr.mxu0 0.0
    %2625 = vmatpush1.msra.mxu0 %v242
    %2626 = vmatprep.subr.mxu0 0.0
    %2627 = vmatpush1.msra.mxu0 0.0
    %2628 = vmatprep.subr.mxu0 0.0
    %2629 = vmatpush1.msra.mxu0 0.0
    %2630 = vmatprep.subr.mxu0 0.0
    %2631 = vmatpush1.msra.mxu0 0.0
    %2632 = vmatprep.subr.mxu0 0.0
    %2633 = vmatpush1.msra.mxu0 0.0
    %2634 = vmatprep.subr.mxu0 0.0
    %2635 = vmatpush1.msra.mxu0 0.0
    %2636 = vmatprep.subr.mxu0 0.0
    %2637 = vmatpush1.msra.mxu0 0.0
    %2638 = vmatprep.subr.mxu0 0.0
    %2639 = vmatpush1.msra.mxu0 0.0
    %2640 = vmatprep.subr.mxu0 0.0
    %2641 = vmatpush1.msra.mxu0 0.0
    %2642 = vmatprep.subr.mxu0 0.0
    %2643 = vmatpush1.msra.mxu0 0.0
    %2644 = vmatprep.subr.mxu0 0.0
    %2645 = vmatpush1.msra.mxu0 0.0
    %2646 = vmatprep.subr.mxu0 0.0
    %2647 = vmatpush1.msra.mxu0 0.0
    %2648 = vmatprep.subr.mxu0 0.0
    %2649 = vmatpush1.msra.mxu0 0.0
    %2650 = vmatprep.subr.mxu0 0.0
    %2651 = vmatpush1.msra.mxu0 0.0
    %2652 = vmatprep.subr.mxu0 0.0
    %2653 = vmatpush1.msra.mxu0 0.0
    %2654 = vmatprep.subr.mxu0 0.0
    %2655 = vmatpush1.msra.mxu0 0.0
    %2656 = vmatprep.subr.mxu0 0.0
    %2657 = vmatpush1.msra.mxu0 0.0
    %2658 = vmatprep.subr.mxu0 0.0
    %2659 = vmatpush1.msra.mxu0 0.0
    %2660 = vmatprep.subr.mxu0 0.0
    %2661 = vmatpush1.msra.mxu0 0.0
    %2662 = vmatprep.subr.mxu0 0.0
    %2663 = vmatpush1.msra.mxu0 0.0
    %2664 = vmatprep.subr.mxu0 0.0
    %2665 = vmatpush1.msra.mxu0 0.0
    %2666 = vmatprep.subr.mxu0 0.0
    %2667 = vmatpush1.msra.mxu0 0.0
    %2668 = vmatprep.subr.mxu0 0.0
    %2669 = vmatpush1.msra.mxu0 0.0
    %2670 = vmatprep.subr.mxu0 0.0
    %2671 = vmatpush1.msra.mxu0 0.0
    %2672 = vmatprep.subr.mxu0 0.0
    %2673 = vmatpush1.msra.mxu0 0.0
    %2674 = vmatprep.subr.mxu0 0.0
    %2675 = vmatpush1.msra.mxu0 0.0
    %2676 = vmatprep.subr.mxu0 0.0
    %2677 = vmatpush1.msra.mxu0 0.0
    %2678 = vmatprep.subr.mxu0 0.0
    %2679 = vmatpush1.msra.mxu0 0.0
    %2680 = vmatprep.subr.mxu0 0.0
    %2681 = vmatpush1.msra.mxu0 0.0
    %2682 = vmatprep.mubr.f32.mxu0 0.0
    %2683 = vmatmul.mubr.f32.gmra.mrb[0].mxu0 %v2616
    %v2684 = vpop.f32.mrb[0].mxu0
    %v2685 = vadd.f32 0.0, %v2684
    %v2686 = vpop.f32.mrb[0].mxu0
    %2687 = vdwg.mxu0
    %v2689 = vrot.slane %v2685, 6
    %v2691 = vadd.f32 %v225, %v2689
    %2692 = vmatprep.subr.mxu0 0.0
    %2693 = vmatpush1.msra.mxu0 %v243
    %2694 = vmatprep.subr.mxu0 0.0
    %2695 = vmatpush1.msra.mxu0 %v244
    %2696 = vmatprep.subr.mxu0 0.0
    %2697 = vmatpush1.msra.mxu0 %v245
    %2698 = vmatprep.subr.mxu0 0.0
    %2699 = vmatpush1.msra.mxu0 %v246
    %2700 = vmatprep.subr.mxu0 0.0
    %2701 = vmatpush1.msra.mxu0 0.0
    %2702 = vmatprep.subr.mxu0 0.0
    %2703 = vmatpush1.msra.mxu0 0.0
    %2704 = vmatprep.subr.mxu0 0.0
    %2705 = vmatpush1.msra.mxu0 0.0
    %2706 = vmatprep.subr.mxu0 0.0
    %2707 = vmatpush1.msra.mxu0 0.0
    %2708 = vmatprep.subr.mxu0 0.0
    %2709 = vmatpush1.msra.mxu0 0.0
    %2710 = vmatprep.subr.mxu0 0.0
    %2711 = vmatpush1.msra.mxu0 0.0
    %2712 = vmatprep.subr.mxu0 0.0
    %2713 = vmatpush1.msra.mxu0 0.0
    %2714 = vmatprep.subr.mxu0 0.0
    %2715 = vmatpush1.msra.mxu0 0.0
    %2716 = vmatprep.subr.mxu0 0.0
    %2717 = vmatpush1.msra.mxu0 0.0
    %2718 = vmatprep.subr.mxu0 0.0
    %2719 = vmatpush1.msra.mxu0 0.0
    %2720 = vmatprep.subr.mxu0 0.0
    %2721 = vmatpush1.msra.mxu0 0.0
    %2722 = vmatprep.subr.mxu0 0.0
    %2723 = vmatpush1.msra.mxu0 0.0
    %2724 = vmatprep.subr.mxu0 0.0
    %2725 = vmatpush1.msra.mxu0 0.0
    %2726 = vmatprep.subr.mxu0 0.0
    %2727 = vmatpush1.msra.mxu0 0.0
    %2728 = vmatprep.subr.mxu0 0.0
    %2729 = vmatpush1.msra.mxu0 0.0
    %2730 = vmatprep.subr.mxu0 0.0
    %2731 = vmatpush1.msra.mxu0 0.0
    %2732 = vmatprep.subr.mxu0 0.0
    %2733 = vmatpush1.msra.mxu0 0.0
    %2734 = vmatprep.subr.mxu0 0.0
    %2735 = vmatpush1.msra.mxu0 0.0
    %2736 = vmatprep.subr.mxu0 0.0
    %2737 = vmatpush1.msra.mxu0 0.0
    %2738 = vmatprep.subr.mxu0 0.0
    %2739 = vmatpush1.msra.mxu0 0.0
    %2740 = vmatprep.subr.mxu0 0.0
    %2741 = vmatpush1.msra.mxu0 0.0
    %2742 = vmatprep.subr.mxu0 0.0
    %2743 = vmatpush1.msra.mxu0 0.0
    %2744 = vmatprep.subr.mxu0 0.0
    %2745 = vmatpush1.msra.mxu0 0.0
    %2746 = vmatprep.subr.mxu0 0.0
    %2747 = vmatpush1.msra.mxu0 0.0
    %2748 = vmatprep.subr.mxu0 0.0
    %2749 = vmatpush1.msra.mxu0 0.0
    %2750 = vmatprep.subr.mxu0 0.0
    %2751 = vmatpush1.msra.mxu0 0.0
    %2752 = vmatprep.subr.mxu0 0.0
    %2753 = vmatpush1.msra.mxu0 0.0
    %2754 = vmatprep.subr.mxu0 0.0
    %2755 = vmatpush1.msra.mxu0 0.0
    %2756 = vmatprep.mubr.f32.mxu0 0.0
    %2757 = vmatmul.mubr.f32.gmra.mrb[0].mxu0 %v2406
    %v2758 = vpop.f32.mrb[0].mxu0
    %v2759 = vadd.f32 0.0, %v2758
    %v2760 = vpop.f32.mrb[0].mxu0
    %2761 = vdwg.mxu0
    %v2763 = vrot.slane %v2759, 6
    %v2765 = vadd.f32 %v2691, %v2763
    %v2766 = vxor.u32 %v2765, 2147483648
    %v2767 = vmul.f32 %v2766, 1.442695
    %v2768 = vpow.pop %v2767
    %v2769 = vadd.f32 %v2768, 1.0
    %v2770 = vrcp.pop %v2769
    %v2771 = vmul.f32 1.0, %v2770
    %v2772 = vtanh.pop %v2765
    %v2774 = vrot.slane %v2355, 6
    %v2776 = vmul.f32 %v2771, %v2774
    %2778 = vrot.lane.b32.xlu0 %v2772, 64
    %v2779 = vpop.permute.xlu0 %2778
    %v2781 = vmul.f32 %v2771, %v2779
    %2783 = vrot.lane.b32.xlu0 %v2781, 32
    %v2784 = vpop.permute.xlu0 %2783
    %v2786 = vadd.f32 %v2776, %v2784
    %v2787 = vtanh.pop %v2786
    %2789 = vrot.lane.b32.xlu0 %v2787, 64
    %v2790 = vpop.permute.xlu0 %2789
    %v2792 = vmul.f32 %v2771, %v2790
    %v2795 = vunpack.c.l.s4 1966171168
    %v2796 = vunpack.c.0.s8 %v2795
    %v2797 = vlaneseq
    %v2798 = vshrl.u32 %v2797, 7
    %v2799 = vsub.s32 %v2796, %v2798
    %v2800 = vrot.slane %v2792, %v2799
    %v2801 = vcombine.high %v2800, %v2800
    %v2803 = vunpack.c.l.s4 1966171168
    %v2804 = vunpack.c.0.s8 %v2803
    %v2805 = vlaneseq
    %v2806 = vshrl.u32 %v2805, 7
    %v2807 = vsub.s32 %v2804, %v2806
    %v2808 = vrot.slane %v2800, %v2807
    %v2810 = vunpack.c.l.s4 1966171168
    %v2811 = vunpack.c.0.s8 %v2810
    %v2812 = vlaneseq
    %v2813 = vshrl.u32 %v2812, 7
    %v2814 = vsub.s32 %v2811, %v2813
    %v2815 = vrot.slane %v2801, %v2814
    %v2816 = vcombine.high %v2808, %v2808
    %v2817 = vcombine.high %v2815, %v2815
    %v2818 = vlaneseq
    %v2819 = vshrl.u32 %v2818, 7
    %v2820 = vsub.s32 0, %v2819
    %v2821 = vrot.slane %v2816, %v2820
    %v2822 = vlaneseq
    %v2823 = vshrl.u32 %v2822, 7
    %v2824 = vsub.s32 0, %v2823
    %v2825 = vrot.slane %v2817, %v2824
    %2826 = vrot.lane.b32.xlu0 %v2821, 32
    %v2827 = vpop.permute.xlu0 %2826
    %2828 = vrot.lane.b32.xlu0 %v2825, 32
    %v2829 = vpop.permute.xlu0 %2828
    %2832 = vst.msk [vmem:[#allocation14 + $0x5] sm:$0x1] %vm671, %v2827
    %2833 = vst.msk [vmem:[#allocation14 + $0xd] sm:$0x1] %vm671, %v2829
    %s2834 = scalar_lea.vmem [#allocation5], 48
    %v2835 = vld [vmem:[%s2834] sm:$0xf]
    %v2836 = vld [vmem:[%s2834 + $0x4] sm:$0xf]
    %v2837 = vrot.slane %v2792, 2
    %2838 = vrot.lane.b32.xlu0 %v2837, 32
    %v2839 = vpop.permute.xlu0 %2838
    %v2840 = vsel %vm249, %v2839, 0
    %2842 = vmatprep.subr.mxu0 0.0
    %2843 = vmatpush1.msra.mxu0 %v228
    %2844 = vmatprep.subr.mxu0 0.0
    %2845 = vmatpush1.msra.mxu0 %v229
    %2846 = vmatprep.subr.mxu0 0.0
    %2847 = vmatpush1.msra.mxu0 %v230
    %2848 = vmatprep.subr.mxu0 0.0
    %2849 = vmatpush1.msra.mxu0 %v231
    %2850 = vmatprep.subr.mxu0 0.0
    %2851 = vmatpush1.msra.mxu0 0.0
    %2852 = vmatprep.subr.mxu0 0.0
    %2853 = vmatpush1.msra.mxu0 0.0
    %2854 = vmatprep.subr.mxu0 0.0
    %2855 = vmatpush1.msra.mxu0 0.0
    %2856 = vmatprep.subr.mxu0 0.0
    %2857 = vmatpush1.msra.mxu0 0.0
    %2858 = vmatprep.subr.mxu0 0.0
    %2859 = vmatpush1.msra.mxu0 0.0
    %2860 = vmatprep.subr.mxu0 0.0
    %2861 = vmatpush1.msra.mxu0 0.0
    %2862 = vmatprep.subr.mxu0 0.0
    %2863 = vmatpush1.msra.mxu0 0.0
    %2864 = vmatprep.subr.mxu0 0.0
    %2865 = vmatpush1.msra.mxu0 0.0
    %2866 = vmatprep.subr.mxu0 0.0
    %2867 = vmatpush1.msra.mxu0 0.0
    %2868 = vmatprep.subr.mxu0 0.0
    %2869 = vmatpush1.msra.mxu0 0.0
    %2870 = vmatprep.subr.mxu0 0.0
    %2871 = vmatpush1.msra.mxu0 0.0
    %2872 = vmatprep.subr.mxu0 0.0
    %2873 = vmatpush1.msra.mxu0 0.0
    %2874 = vmatprep.subr.mxu0 0.0
    %2875 = vmatpush1.msra.mxu0 0.0
    %2876 = vmatprep.subr.mxu0 0.0
    %2877 = vmatpush1.msra.mxu0 0.0
    %2878 = vmatprep.subr.mxu0 0.0
    %2879 = vmatpush1.msra.mxu0 0.0
    %2880 = vmatprep.subr.mxu0 0.0
    %2881 = vmatpush1.msra.mxu0 0.0
    %2882 = vmatprep.subr.mxu0 0.0
    %2883 = vmatpush1.msra.mxu0 0.0
    %2884 = vmatprep.subr.mxu0 0.0
    %2885 = vmatpush1.msra.mxu0 0.0
    %2886 = vmatprep.subr.mxu0 0.0
    %2887 = vmatpush1.msra.mxu0 0.0
    %2888 = vmatprep.subr.mxu0 0.0
    %2889 = vmatpush1.msra.mxu0 0.0
    %2890 = vmatprep.subr.mxu0 0.0
    %2891 = vmatpush1.msra.mxu0 0.0
    %2892 = vmatprep.subr.mxu0 0.0
    %2893 = vmatpush1.msra.mxu0 0.0
    %2894 = vmatprep.subr.mxu0 0.0
    %2895 = vmatpush1.msra.mxu0 0.0
    %2896 = vmatprep.subr.mxu0 0.0
    %2897 = vmatpush1.msra.mxu0 0.0
    %2898 = vmatprep.subr.mxu0 0.0
    %2899 = vmatpush1.msra.mxu0 0.0
    %2900 = vmatprep.subr.mxu0 0.0
    %2901 = vmatpush1.msra.mxu0 0.0
    %2902 = vmatprep.subr.mxu0 0.0
    %2903 = vmatpush1.msra.mxu0 0.0
    %2904 = vmatprep.subr.mxu0 0.0
    %2905 = vmatpush1.msra.mxu0 0.0
    %2906 = vmatprep.mubr.f32.mxu0 0.0
    %2907 = vmatmul.mubr.f32.gmra.mrb[0].mxu0 %v2840
    %v2908 = vpop.f32.mrb[0].mxu0
    %v2909 = vadd.f32 %v237, %v2908
    %v2910 = vpop.f32.mrb[0].mxu0
    %2911 = vdwg.mxu0
    %v2914 = vunpack.c.l.s4 1966171168
    %v2915 = vunpack.c.0.s8 %v2914
    %v2916 = vlaneseq
    %v2917 = vshrl.u32 %v2916, 7
    %v2918 = vsub.s32 %v2915, %v2917
    %v2919 = vrot.slane %v2909, %v2918
    %v2920 = vcombine.high %v2919, %v2919
    %v2922 = vunpack.c.l.s4 1966171168
    %v2923 = vunpack.c.0.s8 %v2922
    %v2924 = vlaneseq
    %v2925 = vshrl.u32 %v2924, 7
    %v2926 = vsub.s32 %v2923, %v2925
    %v2927 = vrot.slane %v2919, %v2926
    %v2929 = vunpack.c.l.s4 1966171168
    %v2930 = vunpack.c.0.s8 %v2929
    %v2931 = vlaneseq
    %v2932 = vshrl.u32 %v2931, 7
    %v2933 = vsub.s32 %v2930, %v2932
    %v2934 = vrot.slane %v2920, %v2933
    %v2935 = vlaneseq
    %v2936 = vshrl.u32 %v2935, 7
    %v2937 = vsub.s32 0, %v2936
    %v2938 = vrot.slane %v2927, %v2937
    %v2939 = vlaneseq
    %v2940 = vshrl.u32 %v2939, 7
    %v2941 = vsub.s32 0, %v2940
    %v2942 = vrot.slane %v2934, %v2941
    %v2945 = vmul.f32 %v2835, %v2938
    %v2946 = vmul.f32 %v2836, %v2942
    %v2947 = vsel %vm358, %v2945, 0.0
    %2948 = vadd.xlane.f32.xlu0 %v2947
    %v2949 = vpop.xlane.xlu0 %2948
    %v2950 = vsel %vm358, %v2946, 0.0
    %2951 = vadd.xlane.f32.xlu0 %v2950
    %v2952 = vpop.xlane.xlu0 %2951
    %v2955 = vlaneseq
    %v2956 = vshrl.u32 %v2955, 7
    %v2957 = vsub.s32 %v368, %v2956
    %v2958 = vrot.slane %v2949, %v2957
    %v2959 = vlaneseq
    %v2960 = vshrl.u32 %v2959, 7
    %v2961 = vsub.s32 %v368, %v2960
    %v2962 = vrot.slane %v2952, %v2961
    %v2963 = vsel %vm377, %v2962, %v2958
    %v2965 = vsel %vm380, %v2963, -inf
    %2966 = vmax.xlane.f32.xlu0 %v2965
    %v2967 = vpop.xlane.xlu0 %2966
    %v2969 = vlaneseq
    %v2970 = vshrl.u32 %v2969, 7
    %v2971 = vsub.s32 0, %v2970
    %v2972 = vrot.slane %v2967, %v2971
    %v2973 = vlaneseq
    %v2974 = vshrl.u32 %v2973, 7
    %v2975 = vsub.s32 1, %v2974
    %v2976 = vrot.slane %v2967, %v2975
    %v2979 = vsub.f32 %v2949, %v2972
    %v2980 = vsub.f32 %v2952, %v2976
    %v2981 = vmul.f32 %v2979, 1.442695
    %v2982 = vpow.pop %v2981
    %v2983 = vmul.f32 %v2980, 1.442695
    %v2984 = vpow.pop %v2983
    %2987 = vset.pattern.permute.xlu0 0
    %2988 = vperm.xlu0 %2987, %v2982
    %v2989 = vpop.permute.xlu0 %2988
    %2990 = vset.pattern.permute.xlu0 0
    %2991 = vperm.xlu0 %2990, %v2984
    %v2992 = vpop.permute.xlu0 %2991
    %v2993 = vlaneseq
    %v2994 = vshrl.u32 %v2993, 7
    %v2995 = vsub.s32 %v368, %v2994
    %v2996 = vrot.slane %v2989, %v2995
    %v2997 = vlaneseq
    %v2998 = vshrl.u32 %v2997, 7
    %v2999 = vsub.s32 %v368, %v2998
    %v3000 = vrot.slane %v2992, %v2999
    %v3001 = vsel %vm377, %v3000, %v2996
    %v3003 = vsel %vm380, %v3001, 0.0
    %3004 = vadd.xlane.f32.xlu0 %v3003
    %v3005 = vpop.xlane.xlu0 %3004
    %v3007 = vlaneseq
    %v3008 = vshrl.u32 %v3007, 7
    %v3009 = vsub.s32 0, %v3008
    %v3010 = vrot.slane %v3005, %v3009
    %v3011 = vlaneseq
    %v3012 = vshrl.u32 %v3011, 7
    %v3013 = vsub.s32 1, %v3012
    %v3014 = vrot.slane %v3005, %v3013
    %v3017 = vrcp.pop %v3010
    %v3018 = vmul.f32 %v2982, %v3017
    %v3019 = vrcp.pop %v3014
    %v3020 = vmul.f32 %v2984, %v3019
    %3022 = vset.pattern.permute.xlu0 0
    %3023 = vperm.xlu0 %3022, %v3018
    %v3024 = vpop.permute.xlu0 %3023
    %3027 = vset.pattern.permute.xlu0 0
    %3028 = vperm.xlu0 %3027, %v3020
    %v3029 = vpop.permute.xlu0 %3028
    %v3031 = vmul.f32 %v3024, %v2835
    %v3032 = vmul.f32 %v3029, %v2836
    %v3033 = vsel %vm358, %v3031, 0.0
    %v3034 = vrot.slane %v3033, 4
    %v3035 = vadd.f32 %v3033, %v3034
    %v3036 = vrot.slane %v3035, 2
    %v3037 = vadd.f32 %v3035, %v3036
    %v3038 = vrot.slane %v3037, 1
    %v3039 = vadd.f32 %v3037, %v3038
    %v3040 = vsel %vm358, %v3032, 0.0
    %v3041 = vrot.slane %v3040, 4
    %v3042 = vadd.f32 %v3040, %v3041
    %v3043 = vrot.slane %v3042, 2
    %v3044 = vadd.f32 %v3042, %v3043
    %v3045 = vrot.slane %v3044, 1
    %v3046 = vadd.f32 %v3044, %v3045
    %v3049 = vsel %vm377, %v3046, %v3039
    %v3050 = vsel %vm249, %v3049, 0
    %3052 = vmatprep.subr.mxu0 0.0
    %3053 = vmatpush1.msra.mxu0 %v239
    %3054 = vmatprep.subr.mxu0 0.0
    %3055 = vmatpush1.msra.mxu0 %v240
    %3056 = vmatprep.subr.mxu0 0.0
    %3057 = vmatpush1.msra.mxu0 %v241
    %3058 = vmatprep.subr.mxu0 0.0
    %3059 = vmatpush1.msra.mxu0 %v242
    %3060 = vmatprep.subr.mxu0 0.0
    %3061 = vmatpush1.msra.mxu0 0.0
    %3062 = vmatprep.subr.mxu0 0.0
    %3063 = vmatpush1.msra.mxu0 0.0
    %3064 = vmatprep.subr.mxu0 0.0
    %3065 = vmatpush1.msra.mxu0 0.0
    %3066 = vmatprep.subr.mxu0 0.0
    %3067 = vmatpush1.msra.mxu0 0.0
    %3068 = vmatprep.subr.mxu0 0.0
    %3069 = vmatpush1.msra.mxu0 0.0
    %3070 = vmatprep.subr.mxu0 0.0
    %3071 = vmatpush1.msra.mxu0 0.0
    %3072 = vmatprep.subr.mxu0 0.0
    %3073 = vmatpush1.msra.mxu0 0.0
    %3074 = vmatprep.subr.mxu0 0.0
    %3075 = vmatpush1.msra.mxu0 0.0
    %3076 = vmatprep.subr.mxu0 0.0
    %3077 = vmatpush1.msra.mxu0 0.0
    %3078 = vmatprep.subr.mxu0 0.0
    %3079 = vmatpush1.msra.mxu0 0.0
    %3080 = vmatprep.subr.mxu0 0.0
    %3081 = vmatpush1.msra.mxu0 0.0
    %3082 = vmatprep.subr.mxu0 0.0
    %3083 = vmatpush1.msra.mxu0 0.0
    %3084 = vmatprep.subr.mxu0 0.0
    %3085 = vmatpush1.msra.mxu0 0.0
    %3086 = vmatprep.subr.mxu0 0.0
    %3087 = vmatpush1.msra.mxu0 0.0
    %3088 = vmatprep.subr.mxu0 0.0
    %3089 = vmatpush1.msra.mxu0 0.0
    %3090 = vmatprep.subr.mxu0 0.0
    %3091 = vmatpush1.msra.mxu0 0.0
    %3092 = vmatprep.subr.mxu0 0.0
    %3093 = vmatpush1.msra.mxu0 0.0
    %3094 = vmatprep.subr.mxu0 0.0
    %3095 = vmatpush1.msra.mxu0 0.0
    %3096 = vmatprep.subr.mxu0 0.0
    %3097 = vmatpush1.msra.mxu0 0.0
    %3098 = vmatprep.subr.mxu0 0.0
    %3099 = vmatpush1.msra.mxu0 0.0
    %3100 = vmatprep.subr.mxu0 0.0
    %3101 = vmatpush1.msra.mxu0 0.0
    %3102 = vmatprep.subr.mxu0 0.0
    %3103 = vmatpush1.msra.mxu0 0.0
    %3104 = vmatprep.subr.mxu0 0.0
    %3105 = vmatpush1.msra.mxu0 0.0
    %3106 = vmatprep.subr.mxu0 0.0
    %3107 = vmatpush1.msra.mxu0 0.0
    %3108 = vmatprep.subr.mxu0 0.0
    %3109 = vmatpush1.msra.mxu0 0.0
    %3110 = vmatprep.subr.mxu0 0.0
    %3111 = vmatpush1.msra.mxu0 0.0
    %3112 = vmatprep.subr.mxu0 0.0
    %3113 = vmatpush1.msra.mxu0 0.0
    %3114 = vmatprep.subr.mxu0 0.0
    %3115 = vmatpush1.msra.mxu0 0.0
    %3116 = vmatprep.mubr.f32.mxu0 0.0
    %3117 = vmatmul.mubr.f32.gmra.mrb[0].mxu0 %v3050
    %v3118 = vpop.f32.mrb[0].mxu0
    %v3119 = vadd.f32 0.0, %v3118
    %v3120 = vpop.f32.mrb[0].mxu0
    %3121 = vdwg.mxu0
    %v3123 = vrot.slane %v3119, 4
    %v3125 = vadd.f32 %v225, %v3123
    %3126 = vmatprep.subr.mxu0 0.0
    %3127 = vmatpush1.msra.mxu0 %v243
    %3128 = vmatprep.subr.mxu0 0.0
    %3129 = vmatpush1.msra.mxu0 %v244
    %3130 = vmatprep.subr.mxu0 0.0
    %3131 = vmatpush1.msra.mxu0 %v245
    %3132 = vmatprep.subr.mxu0 0.0
    %3133 = vmatpush1.msra.mxu0 %v246
    %3134 = vmatprep.subr.mxu0 0.0
    %3135 = vmatpush1.msra.mxu0 0.0
    %3136 = vmatprep.subr.mxu0 0.0
    %3137 = vmatpush1.msra.mxu0 0.0
    %3138 = vmatprep.subr.mxu0 0.0
    %3139 = vmatpush1.msra.mxu0 0.0
    %3140 = vmatprep.subr.mxu0 0.0
    %3141 = vmatpush1.msra.mxu0 0.0
    %3142 = vmatprep.subr.mxu0 0.0
    %3143 = vmatpush1.msra.mxu0 0.0
    %3144 = vmatprep.subr.mxu0 0.0
    %3145 = vmatpush1.msra.mxu0 0.0
    %3146 = vmatprep.subr.mxu0 0.0
    %3147 = vmatpush1.msra.mxu0 0.0
    %3148 = vmatprep.subr.mxu0 0.0
    %3149 = vmatpush1.msra.mxu0 0.0
    %3150 = vmatprep.subr.mxu0 0.0
    %3151 = vmatpush1.msra.mxu0 0.0
    %3152 = vmatprep.subr.mxu0 0.0
    %3153 = vmatpush1.msra.mxu0 0.0
    %3154 = vmatprep.subr.mxu0 0.0
    %3155 = vmatpush1.msra.mxu0 0.0
    %3156 = vmatprep.subr.mxu0 0.0
    %3157 = vmatpush1.msra.mxu0 0.0
    %3158 = vmatprep.subr.mxu0 0.0
    %3159 = vmatpush1.msra.mxu0 0.0
    %3160 = vmatprep.subr.mxu0 0.0
    %3161 = vmatpush1.msra.mxu0 0.0
    %3162 = vmatprep.subr.mxu0 0.0
    %3163 = vmatpush1.msra.mxu0 0.0
    %3164 = vmatprep.subr.mxu0 0.0
    %3165 = vmatpush1.msra.mxu0 0.0
    %3166 = vmatprep.subr.mxu0 0.0
    %3167 = vmatpush1.msra.mxu0 0.0
    %3168 = vmatprep.subr.mxu0 0.0
    %3169 = vmatpush1.msra.mxu0 0.0
    %3170 = vmatprep.subr.mxu0 0.0
    %3171 = vmatpush1.msra.mxu0 0.0
    %3172 = vmatprep.subr.mxu0 0.0
    %3173 = vmatpush1.msra.mxu0 0.0
    %3174 = vmatprep.subr.mxu0 0.0
    %3175 = vmatpush1.msra.mxu0 0.0
    %3176 = vmatprep.subr.mxu0 0.0
    %3177 = vmatpush1.msra.mxu0 0.0
    %3178 = vmatprep.subr.mxu0 0.0
    %3179 = vmatpush1.msra.mxu0 0.0
    %3180 = vmatprep.subr.mxu0 0.0
    %3181 = vmatpush1.msra.mxu0 0.0
    %3182 = vmatprep.subr.mxu0 0.0
    %3183 = vmatpush1.msra.mxu0 0.0
    %3184 = vmatprep.subr.mxu0 0.0
    %3185 = vmatpush1.msra.mxu0 0.0
    %3186 = vmatprep.subr.mxu0 0.0
    %3187 = vmatpush1.msra.mxu0 0.0
    %3188 = vmatprep.subr.mxu0 0.0
    %3189 = vmatpush1.msra.mxu0 0.0
    %3190 = vmatprep.mubr.f32.mxu0 0.0
    %3191 = vmatmul.mubr.f32.gmra.mrb[0].mxu0 %v2840
    %v3192 = vpop.f32.mrb[0].mxu0
    %v3193 = vadd.f32 0.0, %v3192
    %v3194 = vpop.f32.mrb[0].mxu0
    %3195 = vdwg.mxu0
    %v3197 = vrot.slane %v3193, 4
    %v3199 = vadd.f32 %v3125, %v3197
    %v3200 = vxor.u32 %v3199, 2147483648
    %v3201 = vmul.f32 %v3200, 1.442695
    %v3202 = vpow.pop %v3201
    %v3203 = vadd.f32 %v3202, 1.0
    %v3204 = vrcp.pop %v3203
    %v3205 = vmul.f32 1.0, %v3204
    %v3206 = vtanh.pop %v3199
    %v3208 = vrot.slane %v2786, 6
    %v3210 = vmul.f32 %v3205, %v3208
    %3212 = vrot.lane.b32.xlu0 %v3206, 64
    %v3213 = vpop.permute.xlu0 %3212
    %v3215 = vmul.f32 %v3205, %v3213
    %3217 = vrot.lane.b32.xlu0 %v3215, 32
    %v3218 = vpop.permute.xlu0 %3217
    %v3220 = vadd.f32 %v3210, %v3218
    %v3221 = vtanh.pop %v3220
    %3223 = vrot.lane.b32.xlu0 %v3221, 64
    %v3224 = vpop.permute.xlu0 %3223
    %v3226 = vmul.f32 %v3205, %v3224
    %v3228 = vcombine.high %v3226, %v3226
    %v3230 = vunpack.c.l.s4 1966171168
    %v3231 = vunpack.c.0.s8 %v3230
    %v3232 = vlaneseq
    %v3233 = vshrl.u32 %v3232, 7
    %v3234 = vsub.s32 %v3231, %v3233
    %v3235 = vrot.slane %v3228, %v3234
    %v3236 = vcombine.high %v3235, %v3235
    %v3238 = vunpack.c.l.s4 1966171168
    %v3239 = vunpack.c.0.s8 %v3238
    %v3240 = vlaneseq
    %v3241 = vshrl.u32 %v3240, 7
    %v3242 = vsub.s32 %v3239, %v3241
    %v3243 = vrot.slane %v3235, %v3242
    %v3245 = vunpack.c.l.s4 1966171168
    %v3246 = vunpack.c.0.s8 %v3245
    %v3247 = vlaneseq
    %v3248 = vshrl.u32 %v3247, 7
    %v3249 = vsub.s32 %v3246, %v3248
    %v3250 = vrot.slane %v3236, %v3249
    %v3251 = vlaneseq
    %v3252 = vshrl.u32 %v3251, 7
    %v3253 = vsub.s32 0, %v3252
    %v3254 = vrot.slane %v3243, %v3253
    %v3255 = vlaneseq
    %v3256 = vshrl.u32 %v3255, 7
    %v3257 = vsub.s32 0, %v3256
    %v3258 = vrot.slane %v3250, %v3257
    %3259 = vrot.lane.b32.xlu0 %v3254, 32
    %v3260 = vpop.permute.xlu0 %3259
    %3261 = vrot.lane.b32.xlu0 %v3258, 32
    %v3262 = vpop.permute.xlu0 %3261
    %3265 = vst.msk [vmem:[#allocation14 + $0x6] sm:$0x1] %vm671, %v3260
    %3266 = vst.msk [vmem:[#allocation14 + $0xe] sm:$0x1] %vm671, %v3262
    %s3267 = scalar_lea.vmem [#allocation5], 56
    %v3268 = vld [vmem:[%s3267] sm:$0xf]
    %v3269 = vld [vmem:[%s3267 + $0x4] sm:$0xf]
    %v3270 = vrot.slane %v3226, 4
    %3271 = vrot.lane.b32.xlu0 %v3270, 32
    %v3272 = vpop.permute.xlu0 %3271
    %v3273 = vsel %vm249, %v3272, 0
    %3275 = vmatprep.subr.mxu0 0.0
    %3276 = vmatpush1.msra.mxu0 %v228
    %3277 = vmatprep.subr.mxu0 0.0
    %3278 = vmatpush1.msra.mxu0 %v229
    %3279 = vmatprep.subr.mxu0 0.0
    %3280 = vmatpush1.msra.mxu0 %v230
    %3281 = vmatprep.subr.mxu0 0.0
    %3282 = vmatpush1.msra.mxu0 %v231
    %3283 = vmatprep.subr.mxu0 0.0
    %3284 = vmatpush1.msra.mxu0 0.0
    %3285 = vmatprep.subr.mxu0 0.0
    %3286 = vmatpush1.msra.mxu0 0.0
    %3287 = vmatprep.subr.mxu0 0.0
    %3288 = vmatpush1.msra.mxu0 0.0
    %3289 = vmatprep.subr.mxu0 0.0
    %3290 = vmatpush1.msra.mxu0 0.0
    %3291 = vmatprep.subr.mxu0 0.0
    %3292 = vmatpush1.msra.mxu0 0.0
    %3293 = vmatprep.subr.mxu0 0.0
    %3294 = vmatpush1.msra.mxu0 0.0
    %3295 = vmatprep.subr.mxu0 0.0
    %3296 = vmatpush1.msra.mxu0 0.0
    %3297 = vmatprep.subr.mxu0 0.0
    %3298 = vmatpush1.msra.mxu0 0.0
    %3299 = vmatprep.subr.mxu0 0.0
    %3300 = vmatpush1.msra.mxu0 0.0
    %3301 = vmatprep.subr.mxu0 0.0
    %3302 = vmatpush1.msra.mxu0 0.0
    %3303 = vmatprep.subr.mxu0 0.0
    %3304 = vmatpush1.msra.mxu0 0.0
    %3305 = vmatprep.subr.mxu0 0.0
    %3306 = vmatpush1.msra.mxu0 0.0
    %3307 = vmatprep.subr.mxu0 0.0
    %3308 = vmatpush1.msra.mxu0 0.0
    %3309 = vmatprep.subr.mxu0 0.0
    %3310 = vmatpush1.msra.mxu0 0.0
    %3311 = vmatprep.subr.mxu0 0.0
    %3312 = vmatpush1.msra.mxu0 0.0
    %3313 = vmatprep.subr.mxu0 0.0
    %3314 = vmatpush1.msra.mxu0 0.0
    %3315 = vmatprep.subr.mxu0 0.0
    %3316 = vmatpush1.msra.mxu0 0.0
    %3317 = vmatprep.subr.mxu0 0.0
    %3318 = vmatpush1.msra.mxu0 0.0
    %3319 = vmatprep.subr.mxu0 0.0
    %3320 = vmatpush1.msra.mxu0 0.0
    %3321 = vmatprep.subr.mxu0 0.0
    %3322 = vmatpush1.msra.mxu0 0.0
    %3323 = vmatprep.subr.mxu0 0.0
    %3324 = vmatpush1.msra.mxu0 0.0
    %3325 = vmatprep.subr.mxu0 0.0
    %3326 = vmatpush1.msra.mxu0 0.0
    %3327 = vmatprep.subr.mxu0 0.0
    %3328 = vmatpush1.msra.mxu0 0.0
    %3329 = vmatprep.subr.mxu0 0.0
    %3330 = vmatpush1.msra.mxu0 0.0
    %3331 = vmatprep.subr.mxu0 0.0
    %3332 = vmatpush1.msra.mxu0 0.0
    %3333 = vmatprep.subr.mxu0 0.0
    %3334 = vmatpush1.msra.mxu0 0.0
    %3335 = vmatprep.subr.mxu0 0.0
    %3336 = vmatpush1.msra.mxu0 0.0
    %3337 = vmatprep.subr.mxu0 0.0
    %3338 = vmatpush1.msra.mxu0 0.0
    %3339 = vmatprep.mubr.f32.mxu0 0.0
    %3340 = vmatmul.mubr.f32.gmra.mrb[0].mxu0 %v3273
    %v3341 = vpop.f32.mrb[0].mxu0
    %v3342 = vadd.f32 %v237, %v3341
    %v3343 = vpop.f32.mrb[0].mxu0
    %3344 = vdwg.mxu0
    %v3347 = vunpack.c.l.s4 1966171168
    %v3348 = vunpack.c.0.s8 %v3347
    %v3349 = vlaneseq
    %v3350 = vshrl.u32 %v3349, 7
    %v3351 = vsub.s32 %v3348, %v3350
    %v3352 = vrot.slane %v3342, %v3351
    %v3353 = vcombine.high %v3352, %v3352
    %v3355 = vunpack.c.l.s4 1966171168
    %v3356 = vunpack.c.0.s8 %v3355
    %v3357 = vlaneseq
    %v3358 = vshrl.u32 %v3357, 7
    %v3359 = vsub.s32 %v3356, %v3358
    %v3360 = vrot.slane %v3352, %v3359
    %v3362 = vunpack.c.l.s4 1966171168
    %v3363 = vunpack.c.0.s8 %v3362
    %v3364 = vlaneseq
    %v3365 = vshrl.u32 %v3364, 7
    %v3366 = vsub.s32 %v3363, %v3365
    %v3367 = vrot.slane %v3353, %v3366
    %v3368 = vlaneseq
    %v3369 = vshrl.u32 %v3368, 7
    %v3370 = vsub.s32 0, %v3369
    %v3371 = vrot.slane %v3360, %v3370
    %v3372 = vlaneseq
    %v3373 = vshrl.u32 %v3372, 7
    %v3374 = vsub.s32 0, %v3373
    %v3375 = vrot.slane %v3367, %v3374
    %v3378 = vmul.f32 %v3268, %v3371
    %v3379 = vmul.f32 %v3269, %v3375
    %v3380 = vsel %vm358, %v3378, 0.0
    %3381 = vadd.xlane.f32.xlu0 %v3380
    %v3382 = vpop.xlane.xlu0 %3381
    %v3383 = vsel %vm358, %v3379, 0.0
    %3384 = vadd.xlane.f32.xlu0 %v3383
    %v3385 = vpop.xlane.xlu0 %3384
    %v3388 = vlaneseq
    %v3389 = vshrl.u32 %v3388, 7
    %v3390 = vsub.s32 %v368, %v3389
    %v3391 = vrot.slane %v3382, %v3390
    %v3392 = vlaneseq
    %v3393 = vshrl.u32 %v3392, 7
    %v3394 = vsub.s32 %v368, %v3393
    %v3395 = vrot.slane %v3385, %v3394
    %v3396 = vsel %vm377, %v3395, %v3391
    %v3398 = vsel %vm380, %v3396, -inf
    %3399 = vmax.xlane.f32.xlu0 %v3398
    %v3400 = vpop.xlane.xlu0 %3399
    %v3402 = vlaneseq
    %v3403 = vshrl.u32 %v3402, 7
    %v3404 = vsub.s32 0, %v3403
    %v3405 = vrot.slane %v3400, %v3404
    %v3406 = vlaneseq
    %v3407 = vshrl.u32 %v3406, 7
    %v3408 = vsub.s32 1, %v3407
    %v3409 = vrot.slane %v3400, %v3408
    %v3412 = vsub.f32 %v3382, %v3405
    %v3413 = vsub.f32 %v3385, %v3409
    %v3414 = vmul.f32 %v3412, 1.442695
    %v3415 = vpow.pop %v3414
    %v3416 = vmul.f32 %v3413, 1.442695
    %v3417 = vpow.pop %v3416
    %3420 = vset.pattern.permute.xlu0 0
    %3421 = vperm.xlu0 %3420, %v3415
    %v3422 = vpop.permute.xlu0 %3421
    %3423 = vset.pattern.permute.xlu0 0
    %3424 = vperm.xlu0 %3423, %v3417
    %v3425 = vpop.permute.xlu0 %3424
    %v3426 = vlaneseq
    %v3427 = vshrl.u32 %v3426, 7
    %v3428 = vsub.s32 %v368, %v3427
    %v3429 = vrot.slane %v3422, %v3428
    %v3430 = vlaneseq
    %v3431 = vshrl.u32 %v3430, 7
    %v3432 = vsub.s32 %v368, %v3431
    %v3433 = vrot.slane %v3425, %v3432
    %v3434 = vsel %vm377, %v3433, %v3429
    %v3436 = vsel %vm380, %v3434, 0.0
    %3437 = vadd.xlane.f32.xlu0 %v3436
    %v3438 = vpop.xlane.xlu0 %3437
    %v3440 = vlaneseq
    %v3441 = vshrl.u32 %v3440, 7
    %v3442 = vsub.s32 0, %v3441
    %v3443 = vrot.slane %v3438, %v3442
    %v3444 = vlaneseq
    %v3445 = vshrl.u32 %v3444, 7
    %v3446 = vsub.s32 1, %v3445
    %v3447 = vrot.slane %v3438, %v3446
    %v3450 = vrcp.pop %v3443
    %v3451 = vmul.f32 %v3415, %v3450
    %v3452 = vrcp.pop %v3447
    %v3453 = vmul.f32 %v3417, %v3452
    %3455 = vset.pattern.permute.xlu0 0
    %3456 = vperm.xlu0 %3455, %v3451
    %v3457 = vpop.permute.xlu0 %3456
    %3460 = vset.pattern.permute.xlu0 0
    %3461 = vperm.xlu0 %3460, %v3453
    %v3462 = vpop.permute.xlu0 %3461
    %v3464 = vmul.f32 %v3457, %v3268
    %v3465 = vmul.f32 %v3462, %v3269
    %v3466 = vsel %vm358, %v3464, 0.0
    %v3467 = vrot.slane %v3466, 4
    %v3468 = vadd.f32 %v3466, %v3467
    %v3469 = vrot.slane %v3468, 2
    %v3470 = vadd.f32 %v3468, %v3469
    %v3471 = vrot.slane %v3470, 1
    %v3472 = vadd.f32 %v3470, %v3471
    %v3473 = vsel %vm358, %v3465, 0.0
    %v3474 = vrot.slane %v3473, 4
    %v3475 = vadd.f32 %v3473, %v3474
    %v3476 = vrot.slane %v3475, 2
    %v3477 = vadd.f32 %v3475, %v3476
    %v3478 = vrot.slane %v3477, 1
    %v3479 = vadd.f32 %v3477, %v3478
    %v3482 = vsel %vm377, %v3479, %v3472
    %v3483 = vsel %vm249, %v3482, 0
    %3485 = vmatprep.subr.mxu0 0.0
    %3486 = vmatpush1.msra.mxu0 %v239
    %3487 = vmatprep.subr.mxu0 0.0
    %3488 = vmatpush1.msra.mxu0 %v240
    %3489 = vmatprep.subr.mxu0 0.0
    %3490 = vmatpush1.msra.mxu0 %v241
    %3491 = vmatprep.subr.mxu0 0.0
    %3492 = vmatpush1.msra.mxu0 %v242
    %3493 = vmatprep.subr.mxu0 0.0
    %3494 = vmatpush1.msra.mxu0 0.0
    %3495 = vmatprep.subr.mxu0 0.0
    %3496 = vmatpush1.msra.mxu0 0.0
    %3497 = vmatprep.subr.mxu0 0.0
    %3498 = vmatpush1.msra.mxu0 0.0
    %3499 = vmatprep.subr.mxu0 0.0
    %3500 = vmatpush1.msra.mxu0 0.0
    %3501 = vmatprep.subr.mxu0 0.0
    %3502 = vmatpush1.msra.mxu0 0.0
    %3503 = vmatprep.subr.mxu0 0.0
    %3504 = vmatpush1.msra.mxu0 0.0
    %3505 = vmatprep.subr.mxu0 0.0
    %3506 = vmatpush1.msra.mxu0 0.0
    %3507 = vmatprep.subr.mxu0 0.0
    %3508 = vmatpush1.msra.mxu0 0.0
    %3509 = vmatprep.subr.mxu0 0.0
    %3510 = vmatpush1.msra.mxu0 0.0
    %3511 = vmatprep.subr.mxu0 0.0
    %3512 = vmatpush1.msra.mxu0 0.0
    %3513 = vmatprep.subr.mxu0 0.0
    %3514 = vmatpush1.msra.mxu0 0.0
    %3515 = vmatprep.subr.mxu0 0.0
    %3516 = vmatpush1.msra.mxu0 0.0
    %3517 = vmatprep.subr.mxu0 0.0
    %3518 = vmatpush1.msra.mxu0 0.0
    %3519 = vmatprep.subr.mxu0 0.0
    %3520 = vmatpush1.msra.mxu0 0.0
    %3521 = vmatprep.subr.mxu0 0.0
    %3522 = vmatpush1.msra.mxu0 0.0
    %3523 = vmatprep.subr.mxu0 0.0
    %3524 = vmatpush1.msra.mxu0 0.0
    %3525 = vmatprep.subr.mxu0 0.0
    %3526 = vmatpush1.msra.mxu0 0.0
    %3527 = vmatprep.subr.mxu0 0.0
    %3528 = vmatpush1.msra.mxu0 0.0
    %3529 = vmatprep.subr.mxu0 0.0
    %3530 = vmatpush1.msra.mxu0 0.0
    %3531 = vmatprep.subr.mxu0 0.0
    %3532 = vmatpush1.msra.mxu0 0.0
    %3533 = vmatprep.subr.mxu0 0.0
    %3534 = vmatpush1.msra.mxu0 0.0
    %3535 = vmatprep.subr.mxu0 0.0
    %3536 = vmatpush1.msra.mxu0 0.0
    %3537 = vmatprep.subr.mxu0 0.0
    %3538 = vmatpush1.msra.mxu0 0.0
    %3539 = vmatprep.subr.mxu0 0.0
    %3540 = vmatpush1.msra.mxu0 0.0
    %3541 = vmatprep.subr.mxu0 0.0
    %3542 = vmatpush1.msra.mxu0 0.0
    %3543 = vmatprep.subr.mxu0 0.0
    %3544 = vmatpush1.msra.mxu0 0.0
    %3545 = vmatprep.subr.mxu0 0.0
    %3546 = vmatpush1.msra.mxu0 0.0
    %3547 = vmatprep.subr.mxu0 0.0
    %3548 = vmatpush1.msra.mxu0 0.0
    %3549 = vmatprep.mubr.f32.mxu0 0.0
    %3550 = vmatmul.mubr.f32.gmra.mrb[0].mxu0 %v3483
    %v3551 = vpop.f32.mrb[0].mxu0
    %v3552 = vadd.f32 0.0, %v3551
    %v3553 = vpop.f32.mrb[0].mxu0
    %3554 = vdwg.mxu0
    %v3556 = vrot.slane %v3552, 2
    %v3558 = vadd.f32 %v225, %v3556
    %3559 = vmatprep.subr.mxu0 0.0
    %3560 = vmatpush1.msra.mxu0 %v243
    %3561 = vmatprep.subr.mxu0 0.0
    %3562 = vmatpush1.msra.mxu0 %v244
    %3563 = vmatprep.subr.mxu0 0.0
    %3564 = vmatpush1.msra.mxu0 %v245
    %3565 = vmatprep.subr.mxu0 0.0
    %3566 = vmatpush1.msra.mxu0 %v246
    %3567 = vmatprep.subr.mxu0 0.0
    %3568 = vmatpush1.msra.mxu0 0.0
    %3569 = vmatprep.subr.mxu0 0.0
    %3570 = vmatpush1.msra.mxu0 0.0
    %3571 = vmatprep.subr.mxu0 0.0
    %3572 = vmatpush1.msra.mxu0 0.0
    %3573 = vmatprep.subr.mxu0 0.0
    %3574 = vmatpush1.msra.mxu0 0.0
    %3575 = vmatprep.subr.mxu0 0.0
    %3576 = vmatpush1.msra.mxu0 0.0
    %3577 = vmatprep.subr.mxu0 0.0
    %3578 = vmatpush1.msra.mxu0 0.0
    %3579 = vmatprep.subr.mxu0 0.0
    %3580 = vmatpush1.msra.mxu0 0.0
    %3581 = vmatprep.subr.mxu0 0.0
    %3582 = vmatpush1.msra.mxu0 0.0
    %3583 = vmatprep.subr.mxu0 0.0
    %3584 = vmatpush1.msra.mxu0 0.0
    %3585 = vmatprep.subr.mxu0 0.0
    %3586 = vmatpush1.msra.mxu0 0.0
    %3587 = vmatprep.subr.mxu0 0.0
    %3588 = vmatpush1.msra.mxu0 0.0
    %3589 = vmatprep.subr.mxu0 0.0
    %3590 = vmatpush1.msra.mxu0 0.0
    %3591 = vmatprep.subr.mxu0 0.0
    %3592 = vmatpush1.msra.mxu0 0.0
    %3593 = vmatprep.subr.mxu0 0.0
    %3594 = vmatpush1.msra.mxu0 0.0
    %3595 = vmatprep.subr.mxu0 0.0
    %3596 = vmatpush1.msra.mxu0 0.0
    %3597 = vmatprep.subr.mxu0 0.0
    %3598 = vmatpush1.msra.mxu0 0.0
    %3599 = vmatprep.subr.mxu0 0.0
    %3600 = vmatpush1.msra.mxu0 0.0
    %3601 = vmatprep.subr.mxu0 0.0
    %3602 = vmatpush1.msra.mxu0 0.0
    %3603 = vmatprep.subr.mxu0 0.0
    %3604 = vmatpush1.msra.mxu0 0.0
    %3605 = vmatprep.subr.mxu0 0.0
    %3606 = vmatpush1.msra.mxu0 0.0
    %3607 = vmatprep.subr.mxu0 0.0
    %3608 = vmatpush1.msra.mxu0 0.0
    %3609 = vmatprep.subr.mxu0 0.0
    %3610 = vmatpush1.msra.mxu0 0.0
    %3611 = vmatprep.subr.mxu0 0.0
    %3612 = vmatpush1.msra.mxu0 0.0
    %3613 = vmatprep.subr.mxu0 0.0
    %3614 = vmatpush1.msra.mxu0 0.0
    %3615 = vmatprep.subr.mxu0 0.0
    %3616 = vmatpush1.msra.mxu0 0.0
    %3617 = vmatprep.subr.mxu0 0.0
    %3618 = vmatpush1.msra.mxu0 0.0
    %3619 = vmatprep.subr.mxu0 0.0
    %3620 = vmatpush1.msra.mxu0 0.0
    %3621 = vmatprep.subr.mxu0 0.0
    %3622 = vmatpush1.msra.mxu0 0.0
    %3623 = vmatprep.mubr.f32.mxu0 0.0
    %3624 = vmatmul.mubr.f32.gmra.mrb[0].mxu0 %v3273
    %v3625 = vpop.f32.mrb[0].mxu0
    %v3626 = vadd.f32 0.0, %v3625
    %v3627 = vpop.f32.mrb[0].mxu0
    %3628 = vdwg.mxu0
    %v3630 = vrot.slane %v3626, 2
    %v3632 = vadd.f32 %v3558, %v3630
    %v3633 = vxor.u32 %v3632, 2147483648
    %v3634 = vmul.f32 %v3633, 1.442695
    %v3635 = vpow.pop %v3634
    %v3636 = vadd.f32 %v3635, 1.0
    %v3637 = vrcp.pop %v3636
    %v3638 = vmul.f32 1.0, %v3637
    %v3639 = vtanh.pop %v3632
    %v3641 = vrot.slane %v3220, 6
    %v3643 = vmul.f32 %v3638, %v3641
    %3645 = vrot.lane.b32.xlu0 %v3639, 64
    %v3646 = vpop.permute.xlu0 %3645
    %v3648 = vmul.f32 %v3638, %v3646
    %3650 = vrot.lane.b32.xlu0 %v3648, 32
    %v3651 = vpop.permute.xlu0 %3650
    %v3653 = vadd.f32 %v3643, %v3651
    %v3654 = vtanh.pop %v3653
    %3656 = vrot.lane.b32.xlu0 %v3654, 64
    %v3657 = vpop.permute.xlu0 %3656
    %v3659 = vmul.f32 %v3638, %v3657
    %v3661 = vcombine.high %v3659, %v3659
    %v3663 = vunpack.c.l.s4 1966171168
    %v3664 = vunpack.c.0.s8 %v3663
    %v3665 = vlaneseq
    %v3666 = vshrl.u32 %v3665, 7
    %v3667 = vsub.s32 %v3664, %v3666
    %v3668 = vrot.slane %v3661, %v3667
    %v3669 = vcombine.high %v3668, %v3668
    %v3671 = vunpack.c.l.s4 1966171168
    %v3672 = vunpack.c.0.s8 %v3671
    %v3673 = vlaneseq
    %v3674 = vshrl.u32 %v3673, 7
    %v3675 = vsub.s32 %v3672, %v3674
    %v3676 = vrot.slane %v3668, %v3675
    %v3678 = vunpack.c.l.s4 1966171168
    %v3679 = vunpack.c.0.s8 %v3678
    %v3680 = vlaneseq
    %v3681 = vshrl.u32 %v3680, 7
    %v3682 = vsub.s32 %v3679, %v3681
    %v3683 = vrot.slane %v3669, %v3682
    %v3684 = vcombine.high %v3676, %v3676
    %v3685 = vcombine.high %v3683, %v3683
    %v3686 = vlaneseq
    %v3687 = vshrl.u32 %v3686, 7
    %v3688 = vsub.s32 0, %v3687
    %v3689 = vrot.slane %v3684, %v3688
    %v3690 = vlaneseq
    %v3691 = vshrl.u32 %v3690, 7
    %v3692 = vsub.s32 0, %v3691
    %v3693 = vrot.slane %v3685, %v3692
    %3694 = vrot.lane.b32.xlu0 %v3689, 32
    %v3695 = vpop.permute.xlu0 %3694
    %3696 = vrot.lane.b32.xlu0 %v3693, 32
    %v3697 = vpop.permute.xlu0 %3696
    %3700 = vst.msk [vmem:[#allocation14 + $0x7] sm:$0x1] %vm671, %v3695
    %3701 = vst.msk [vmem:[#allocation14 + $0xf] sm:$0x1] %vm671, %v3697
    %3703 = vrot.lane.b32.xlu0 %v3653, 96
    %v3704 = vpop.permute.xlu0 %3703
    %vm3706 = vcmask 261126
    %3707 = vst.msk [vmem:[#allocation17 - $0x6] sm:$0xc0] %vm3706, %v3704
    %v3708 = vld [vmem:[#allocation13] sm:$0xff]
    %v3709 = vld [vmem:[#allocation13 + $0x8] sm:$0xff]
    %v3710 = vld [vmem:[#allocation13 + $0x10] sm:$0xff]
    %v3711 = vld [vmem:[#allocation13 + $0x18] sm:$0xff]
    %v3712 = vld [vmem:[%s9] sm:$0x1]
    %v3714 = vlaneseq
    %v3715 = vshrl.u32 %v3714, 7
    %v3716 = vsub.s32 0, %v3715
    %v3717 = vrot.slane %v3712, %v3716
    %v3719 = vrot.slane %v3659, 6
    %3720 = vrot.lane.b32.xlu0 %v3719, 32
    %v3721 = vpop.permute.xlu0 %3720
    %v3722 = vsel %vm249, %v3721, 0
    %3724 = vmatprep.subr.mxu0 0.0
    %3725 = vmatpush1.msra.mxu0 %v3708
    %3726 = vmatprep.subr.mxu0 0.0
    %3727 = vmatpush1.msra.mxu0 %v3709
    %3728 = vmatprep.subr.mxu0 0.0
    %3729 = vmatpush1.msra.mxu0 %v3710
    %3730 = vmatprep.subr.mxu0 0.0
    %3731 = vmatpush1.msra.mxu0 %v3711
    %3732 = vmatprep.subr.mxu0 0.0
    %3733 = vmatpush1.msra.mxu0 0.0
    %3734 = vmatprep.subr.mxu0 0.0
    %3735 = vmatpush1.msra.mxu0 0.0
    %3736 = vmatprep.subr.mxu0 0.0
    %3737 = vmatpush1.msra.mxu0 0.0
    %3738 = vmatprep.subr.mxu0 0.0
    %3739 = vmatpush1.msra.mxu0 0.0
    %3740 = vmatprep.subr.mxu0 0.0
    %3741 = vmatpush1.msra.mxu0 0.0
    %3742 = vmatprep.subr.mxu0 0.0
    %3743 = vmatpush1.msra.mxu0 0.0
    %3744 = vmatprep.subr.mxu0 0.0
    %3745 = vmatpush1.msra.mxu0 0.0
    %3746 = vmatprep.subr.mxu0 0.0
    %3747 = vmatpush1.msra.mxu0 0.0
    %3748 = vmatprep.subr.mxu0 0.0
    %3749 = vmatpush1.msra.mxu0 0.0
    %3750 = vmatprep.subr.mxu0 0.0
    %3751 = vmatpush1.msra.mxu0 0.0
    %3752 = vmatprep.subr.mxu0 0.0
    %3753 = vmatpush1.msra.mxu0 0.0
    %3754 = vmatprep.subr.mxu0 0.0
    %3755 = vmatpush1.msra.mxu0 0.0
    %3756 = vmatprep.subr.mxu0 0.0
    %3757 = vmatpush1.msra.mxu0 0.0
    %3758 = vmatprep.subr.mxu0 0.0
    %3759 = vmatpush1.msra.mxu0 0.0
    %3760 = vmatprep.subr.mxu0 0.0
    %3761 = vmatpush1.msra.mxu0 0.0
    %3762 = vmatprep.subr.mxu0 0.0
    %3763 = vmatpush1.msra.mxu0 0.0
    %3764 = vmatprep.subr.mxu0 0.0
    %3765 = vmatpush1.msra.mxu0 0.0
    %3766 = vmatprep.subr.mxu0 0.0
    %3767 = vmatpush1.msra.mxu0 0.0
    %3768 = vmatprep.subr.mxu0 0.0
    %3769 = vmatpush1.msra.mxu0 0.0
    %3770 = vmatprep.subr.mxu0 0.0
    %3771 = vmatpush1.msra.mxu0 0.0
    %3772 = vmatprep.subr.mxu0 0.0
    %3773 = vmatpush1.msra.mxu0 0.0
    %3774 = vmatprep.subr.mxu0 0.0
    %3775 = vmatpush1.msra.mxu0 0.0
    %3776 = vmatprep.subr.mxu0 0.0
    %3777 = vmatpush1.msra.mxu0 0.0
    %3778 = vmatprep.subr.mxu0 0.0
    %3779 = vmatpush1.msra.mxu0 0.0
    %3780 = vmatprep.subr.mxu0 0.0
    %3781 = vmatpush1.msra.mxu0 0.0
    %3782 = vmatprep.subr.mxu0 0.0
    %3783 = vmatpush1.msra.mxu0 0.0
    %3784 = vmatprep.subr.mxu0 0.0
    %3785 = vmatpush1.msra.mxu0 0.0
    %3786 = vmatprep.subr.mxu0 0.0
    %3787 = vmatpush1.msra.mxu0 0.0
    %3788 = vmatprep.mubr.f32.mxu0 0.0
    %3789 = vmatmul.mubr.f32.gmra.mrb[0].mxu0 %v3722
    %v3790 = vpop.f32.mrb[0].mxu0
    %v3791 = vadd.f32 %v3717, %v3790
    %v3792 = vpop.f32.mrb[0].mxu0
    %3793 = vdwg.mxu0
    %v3794 = vtanh.pop %v3791
    %vm3795 = vcmask 254976
    %3796 = vst.msk [vmem:[#allocation15] sm:$0x3] %vm3795, %v3794
    // Predicated region
    $region70: #{tpu_custom_call.1} parent=1 // pred_check
      _
    $region71: #{tpu_custom_call.1} parent=1 // pred_check_branch
      %3798 = sbr.rel (0) target = $region73
    $region72: #{tpu_custom_call.1} parent=1 // pred_region
      %s3800 = ssub.s32 256, 256
      %3801 = vsyncadd [#allocation4], %s3800
      %s3802 = sshll.u32 [#allocation14], 4
      %s3803 = int_to_ptr.vmem [resolvable:$true] %s3802
      %3808 = dma.vmem_to_hbm [thread:$0]  %s3803, 256, %s10, [#allocation4], 128, 128, 8
    $region73: #{tpu_custom_call.1} parent=1 // pred_fallthru
      _
    // Predicated region
    $region74: #{tpu_custom_call.1} parent=1 // pred_check
      _
    $region75: #{tpu_custom_call.1} parent=1 // pred_check_branch
      %3810 = sbr.rel (0) target = $region77
    $region76: #{tpu_custom_call.1} parent=1 // pred_region
      %s3812 = ssub.s32 32, 32
      %3813 = vsyncadd [#allocation16], %s3812
      %s3815 = sshll.u32 [#allocation15], 4
      %s3816 = int_to_ptr.vmem [resolvable:$true] %s3815
      %3818 = dma.vmem_to_hbm [thread:$0]  %s3816, 32, %s11, [#allocation16]
    $region77: #{tpu_custom_call.1} parent=1 // pred_fallthru
      _
    // Predicated region
    $region78: #{tpu_custom_call.1} parent=1 // pred_check
      _
    $region79: #{tpu_custom_call.1} parent=1 // pred_check_branch
      %3820 = sbr.rel (0) target = $region81
    $region80: #{tpu_custom_call.1} parent=1 // pred_region
      %s3822 = ssub.s32 32, 32
      %3823 = vsyncadd [#allocation16], %s3822
      %s3825 = sshll.u32 [#allocation17], 4
      %s3826 = int_to_ptr.vmem [resolvable:$true] %s3825
      %3828 = dma.vmem_to_hbm [thread:$0]  %s3826, 32, %s12, [#allocation16]
    $region81: #{tpu_custom_call.1} parent=1 // pred_fallthru
      _
    // Predicated region
    $region82: #{tpu_custom_call.1} parent=1 // pred_check
      _
    $region83: #{tpu_custom_call.1} parent=1 // pred_check_branch
      %3830 = sbr.rel (0) target = $region85
    $region84: #{tpu_custom_call.1} parent=1 // pred_region
      %3831 = dma.done [#allocation4], 256
    $region85: #{tpu_custom_call.1} parent=1 // pred_fallthru
      _
    // Predicated region
    $region86: #{tpu_custom_call.1} parent=1 // pred_check
      _
    $region87: #{tpu_custom_call.1} parent=1 // pred_check_branch
      %3833 = sbr.rel (0) target = $region89
    $region88: #{tpu_custom_call.1} parent=1 // pred_region
      %3834 = dma.done [#allocation16], 32
    $region89: #{tpu_custom_call.1} parent=1 // pred_fallthru
      _
    // Predicated region
    $region90: #{tpu_custom_call.1} parent=1 // pred_check
      _
    $region91: #{tpu_custom_call.1} parent=1 // pred_check_branch
      %3836 = sbr.rel (0) target = $region93
    $region92: #{tpu_custom_call.1} parent=1 // pred_region
      %3837 = dma.done [#allocation16], 32
    $region93: #{tpu_custom_call.1} parent=1 // pred_fallthru
      _
    %3838 = vsyncpa [#allocation3], 1
    %3839 = vsyncpa [#allocation6], 1
    %3840 = vsyncpa [#allocation9], 1
    %3841 = vsyncpa [#allocation12], 1
    %3842 = vsyncpa [#allocation4], 1
    %3843 = vsyncpa [#allocation16], 1

</llo_original>
